<compile_context>
chip_gen: v6e
topology: v6e:2x2x1
jax: 0.10.0
libtpu: 0.0.40
codegen_flags: <defaults>
</compile_context>

<pallas_src>
import functools

import jax
import jax.numpy as jnp
from jax.experimental import pallas as pl
from jax.experimental.pallas import tpu as pltpu

LANE = 128
VMEM_LIMIT = 32 * 1024 * 1024  # conservative: leaves headroom on v7x (64 MiB physical)


def _round_up(n, m):
    return ((n + m - 1) // m) * m


def _fit_tile(dim, pref, align):
    """Largest multiple of `align` <= `pref` that evenly divides `dim`, else the full dim."""
    t = min(pref, dim)
    t -= t % align
    while t >= align:
        if dim % t == 0:
            return t
        t -= align
    return dim


# ----------------------------- Pallas kernels -------------------------------

def _conv_relu_pool_kernel(p_ref, w_ref, b_ref, o_ref):
    """Fused conv(3x3 via im2col matmul) + bias + ReLU + 2x2 max-pool.

    p_ref: (4, tm, 9*Cin) -- the four pool-window operands for tm pooled outputs
    w_ref: (9*Cin, Np)    -- conv weight, Cout zero-padded to Np (multiple of 128)
    b_ref: (1, Np)        -- f32 bias (zero-padded)
    o_ref: (tm, Np)       -- pooled, post-ReLU activations (lane-dense)
    """
    four, tm, k = p_ref.shape
    np_ = w_ref.shape[1]
    # Fold the 4 pool quadrants into the row dim (free reshape) -> one MXU stream.
    p2d = p_ref[...].reshape(four * tm, k)
    m = jnp.dot(p2d, w_ref[...], preferred_element_type=jnp.float32)
    m4 = m.reshape(four, tm, np_)
    pooled = jnp.maximum(jnp.maximum(m4[0], m4[1]), jnp.maximum(m4[2], m4[3]))
    # max(a,b)+bias == max(a+bias,b+bias) and relu(max(.)) == max(relu(.)),
    # so pooling before bias/ReLU is exact.
    o_ref[...] = jnp.maximum(pooled + b_ref[...], 0.0).astype(o_ref.dtype)


def _fused_fc_kernel(x_ref, w1_ref, b1_ref, w2_ref, b2_ref, o_ref, h_ref):
    """logits = relu(x @ w1 + b1) @ w2 + b2; h lives only in VMEM scratch."""
    kstep = pl.program_id(1)

    @pl.when(kstep == 0)
    def _init():
        h_ref[...] = jnp.zeros_like(h_ref)

    h_ref[...] += jnp.dot(x_ref[...], w1_ref[...], preferred_element_type=jnp.float32)

    @pl.when(kstep == pl.num_programs(1) - 1)
    def _finalize():
        h = jnp.maximum(h_ref[...] + b1_ref[...], 0.0).astype(w2_ref.dtype)
        o_ref[...] = (jnp.dot(h, w2_ref[...], preferred_element_type=jnp.float32)
                      + b2_ref[...]).astype(o_ref.dtype)


# ------------------------------ glue (plain JAX) ----------------------------

def _conv_pool_window_patches(x_nhwc):
    """3x3/stride-1/pad-1 patches grouped by 2x2 pool-window position.

    Returns (4, N*(H/2)*(W/2), 9*C); patch k-index = (kh*3+kw)*C + c.
    """
    N, H, W, C = x_nhwc.shape
    xp = jnp.pad(x_nhwc, ((0, 0), (1, 1), (1, 1), (0, 0)))
    cols = [xp[:, kh:kh + H, kw:kw + W, :] for kh in range(3) for kw in range(3)]
    pat = jnp.stack(cols, axis=3).reshape(N, H, W, 9 * C)
    quads = [pat[:, di::2, dj::2, :] for di in range(2) for dj in range(2)]
    return jnp.stack(quads, axis=0).reshape(4, N * (H // 2) * (W // 2), 9 * C)


def conv3x3_relu_pool(x_nhwc, w_pad, b_pad):
    """maxpool2x2(relu(conv3x3(x) + b)) -> (N, H/2, W/2, Np); padded channels are 0."""
    N, H, W, C = x_nhwc.shape
    K = 9 * C
    Np = w_pad.shape[1]
    M4 = N * (H // 2) * (W // 2)
    # TODO(synk): at real 224x224 sizes, build the 3x3 patches inside the kernel from a
    # halo'd NHWC row block (manual make_async_copy double-buffer) so the 9x im2col
    # expansion never hits HBM (dominant cost on v5e/v6e), and pack conv2's true 64
    # output channels two-pixels-per-128-lane row to drop the 2x padded-FLOP/byte waste.
    p4 = _conv_pool_window_patches(x_nhwc)
    # 512+ rows per tile ~= 85% HBM roofline; cap ~1024 on v7x (64 MiB VMEM), ~2048 on
    # v5e/v6e, and at real sizes keep M4//tm >= 2 so both v7x TensorCores stay busy.
    tm = _fit_tile(M4, 512, 8)
    out = pl.pallas_call(
        _conv_relu_pool_kernel,
        out_shape=jax.ShapeDtypeStruct((M4, Np), x_nhwc.dtype),
        grid_spec=pltpu.PrefetchScalarGridSpec(
            num_scalar_prefetch=0,
            grid=(M4 // tm,),
            in_specs=[
                pl.BlockSpec((4, tm, K), lambda i: (0, i, 0)),
                pl.BlockSpec((K, Np), lambda i: (0, 0)),   # weights resident
                pl.BlockSpec((1, Np), lambda i: (0, 0)),   # bias resident
            ],
            out_specs=pl.BlockSpec((tm, Np), lambda i: (i, 0)),
        ),
        compiler_params=pltpu.CompilerParams(
            dimension_semantics=("parallel",),
            vmem_limit_bytes=VMEM_LIMIT,
        ),
    )(p4, w_pad, b_pad.reshape(1, Np))
    return out.reshape(N, H // 2, W // 2, Np)


def fused_fc(x, w1, b1, w2, b2):
    """One-kernel relu(x @ w1 + b1) @ w2 + b2. x:(M,K) bf16, w1:(K,H), w2:(H,NCp)."""
    M, K = x.shape
    K1, H = w1.shape
    H2, NCp = w2.shape
    assert K == K1 and H == H2 and NCp % LANE == 0 and H % LANE == 0
    tm = _fit_tile(M, 256, 8)
    tk = _fit_tile(K, 2048, LANE)   # prefer full-K: single grid step, no acc round trip
    grid = (M // tm, K // tk)
    return pl.pallas_call(
        _fused_fc_kernel,
        out_shape=jax.ShapeDtypeStruct((M, NCp), jnp.float32),
        grid_spec=pltpu.PrefetchScalarGridSpec(
            num_scalar_prefetch=0,
            grid=grid,
            in_specs=[
                pl.BlockSpec((tm, tk), lambda i, k: (i, k)),
                pl.BlockSpec((tk, H), lambda i, k: (k, 0)),
                pl.BlockSpec((1, H), lambda i, k: (0, 0)),     # bias1 resident
                pl.BlockSpec((H, NCp), lambda i, k: (0, 0)),   # wfc2 resident
                pl.BlockSpec((1, NCp), lambda i, k: (0, 0)),   # bias2 resident
            ],
            out_specs=pl.BlockSpec((tm, NCp), lambda i, k: (i, 0)),
            scratch_shapes=[pltpu.VMEM((tm, H), jnp.float32)],
        ),
        compiler_params=pltpu.CompilerParams(
            dimension_semantics=("parallel", "arbitrary"),
            vmem_limit_bytes=VMEM_LIMIT,
        ),
    )(x, w1, b1.reshape(1, H), w2, b2.reshape(1, NCp))


# ------------------------------ PlantNet forward ----------------------------

def plantnet_forward(x_nchw, params, *, num_classes):
    x = jnp.transpose(x_nchw, (0, 2, 3, 1)).astype(jnp.bfloat16)       # NCHW -> NHWC
    N = x.shape[0]

    y = conv3x3_relu_pool(x, params["w1"], params["b1"])               # (N, H/2, W/2, 128)
    y = conv3x3_relu_pool(y[..., :32], params["w2"], params["b2"])     # (N, H/4, W/4, 128)

    # conv2's zero-padded channels are exact zeros and wfc1 has matching zero rows, so
    # the padded NHWC flatten feeds fc1 directly (free reshape, no channel-slice pass).
    feat = y.reshape(N, -1)
    mp = _round_up(N, 8)
    if mp != N:
        feat = jnp.pad(feat, ((0, mp - N), (0, 0)))
    logits = fused_fc(feat, params["wfc1"], params["bfc1"],
                      params["wfc2"], params["bfc2"])
    return logits[:N, :num_classes]


def init_params(key, num_classes, hp, wp):
    """Random params generated in PyTorch layout, converted to the kernel layouts."""
    ks = jax.random.split(key, 8)
    scale = 0.05
    fc1_in = 64 * hp * wp

    def conv_w(k, cout, cin):
        # PyTorch (Cout, Cin, kh, kw) -> matmul form [(kh*3+kw)*Cin + cin, Cout]
        w_pt = scale * jax.random.normal(k, (cout, cin, 3, 3), jnp.float32)
        return w_pt.transpose(2, 3, 1, 0).reshape(9 * cin, cout)

    def pad_cols(a, n):
        return jnp.pad(a, ((0, 0), (0, n - a.shape[1])))

    def pad_vec(a, n):
        return jnp.pad(a, (0, n - a.shape[0]))

    w1 = conv_w(ks[0], 32, 3)
    b1 = scale * jax.random.normal(ks[1], (32,), jnp.float32)
    w2 = conv_w(ks[2], 64, 32)
    b2 = scale * jax.random.normal(ks[3], (64,), jnp.float32)

    # fc1: PyTorch (512, fc1_in) with rows of the input flattened in NCHW order.
    wfc1_pt = scale * jax.random.normal(ks[4], (512, fc1_in), jnp.float32)
    # -> (fc1_in, 512); permute rows NCHW-flatten -> NHWC-flatten order, then insert
    # zero rows for the 64->128 zero-padded conv2 output channels so fc1 consumes the
    # padded conv2 layout directly.
    wfc1_nhwc = wfc1_pt.T.reshape(64, hp, wp, 512).transpose(1, 2, 0, 3)   # (hp,wp,64,512)
    wfc1 = jnp.pad(wfc1_nhwc, ((0, 0), (0, 0), (0, LANE - 64), (0, 0)))
    wfc1 = wfc1.reshape(hp * wp * LANE, 512)
    bfc1 = scale * jax.random.normal(ks[5], (512,), jnp.float32)

    wfc2 = (scale * jax.random.normal(ks[6], (num_classes, 512), jnp.float32)).T
    bfc2 = scale * jax.random.normal(ks[7], (num_classes,), jnp.float32)

    nc_pad = _round_up(num_classes, LANE)
    return {
        # conv weights zero-padded to 128 output channels for lane-dense stores
        "w1": pad_cols(w1, LANE).astype(jnp.bfloat16),
        "b1": pad_vec(b1, LANE),
        "w2": pad_cols(w2, LANE).astype(jnp.bfloat16),
        "b2": pad_vec(b2, LANE),
        "wfc1": wfc1.astype(jnp.bfloat16),
        "bfc1": bfc1,
        "wfc2": pad_cols(wfc2, nc_pad).astype(jnp.bfloat16),
        "bfc2": pad_vec(bfc2, nc_pad),
    }


if __name__ == "__main__":
    batch, in_ch, spatial = 2, 3, 16
    num_classes = 5
    hp = wp = spatial // 4            # pooled spatial size feeding fc1 (4x4 here)

    key = jax.random.PRNGKey(0)
    kx, kp = jax.random.split(key)
    x = jax.random.normal(kx, (batch, in_ch, spatial, spatial), jnp.float32)  # NCHW
    params = init_params(kp, num_classes, hp, wp)

    fwd = jax.jit(functools.partial(plantnet_forward, num_classes=num_classes))
    logits = fwd(x, params)
    jax.block_until_ready(logits)
    assert logits.shape == (batch, num_classes)
    assert bool(jnp.all(jnp.isfinite(logits)))
    print("KERNEL_OK")
</pallas_src>

<mosaic_0001>
module attributes {stable_mosaic.version = 11 : i64} {
  func.func @_conv_relu_pool_kernel(%arg0: i32, %arg1: memref<4x128x27xbf16, #tpu.memory_space<vmem>>, %arg2: memref<27x128xbf16, #tpu.memory_space<vmem>>, %arg3: memref<1x128xf32, #tpu.memory_space<vmem>>, %arg4: memref<128x128xbf16, #tpu.memory_space<vmem>>) attributes {dimension_semantics = [#tpu.dimension_semantics<parallel>], iteration_bounds = array<i64: 1>, scalar_prefetch = 0 : i64, scratch_operands = 0 : i64, tpu.core_type = #tpu.core_type<tc>, window_params = [{transform_indices = @transform_0, window_bounds = array<i64: 4, 128, 27>}, {pipeline_mode = #tpu.pipeline_mode<synchronous>, transform_indices = @transform_1, window_bounds = array<i64: 27, 128>}, {pipeline_mode = #tpu.pipeline_mode<synchronous>, transform_indices = @transform_2, window_bounds = array<i64: 1, 128>}, {transform_indices = @transform_3, window_bounds = array<i64: 128, 128>}]} {
    %c0 = arith.constant 0 : index
    %c0_0 = arith.constant 0 : index
    %c0_1 = arith.constant 0 : index
    %0 = vector.load %arg1[%c0, %c0_0, %c0_1] : memref<4x128x27xbf16, #tpu.memory_space<vmem>>, vector<4x128x27xbf16>
    %1 = vector.shape_cast %0 : vector<4x128x27xbf16> to vector<512x27xbf16>
    %c0_2 = arith.constant 0 : index
    %c0_3 = arith.constant 0 : index
    %2 = vector.load %arg2[%c0_2, %c0_3] : memref<27x128xbf16, #tpu.memory_space<vmem>>, vector<27x128xbf16>
    %cst = arith.constant dense<0.000000e+00> : vector<512x128xf32>
    %3 = tpu.matmul %1, %2, %cst {dimension_numbers = #tpu.dot_dimension_numbers<[1], [0], [0], [1], [0, 0, 1, 1], [], []>} : vector<512x27xbf16>, vector<27x128xbf16>, vector<512x128xf32> -> vector<512x128xf32>
    %4 = vector.shape_cast %3 : vector<512x128xf32> to vector<4x128x128xf32>
    %5 = vector.extract_strided_slice %4 {offsets = [0, 0, 0], sizes = [1, 128, 128], strides = [1, 1, 1]} : vector<4x128x128xf32> to vector<1x128x128xf32>
    %6 = vector.shape_cast %5 : vector<1x128x128xf32> to vector<128x128xf32>
    %7 = vector.extract_strided_slice %4 {offsets = [1, 0, 0], sizes = [1, 128, 128], strides = [1, 1, 1]} : vector<4x128x128xf32> to vector<1x128x128xf32>
    %8 = vector.shape_cast %7 : vector<1x128x128xf32> to vector<128x128xf32>
    %9 = arith.maximumf %6, %8 : vector<128x128xf32>
    %10 = vector.extract_strided_slice %4 {offsets = [2, 0, 0], sizes = [1, 128, 128], strides = [1, 1, 1]} : vector<4x128x128xf32> to vector<1x128x128xf32>
    %11 = vector.shape_cast %10 : vector<1x128x128xf32> to vector<128x128xf32>
    %12 = vector.extract_strided_slice %4 {offsets = [3, 0, 0], sizes = [1, 128, 128], strides = [1, 1, 1]} : vector<4x128x128xf32> to vector<1x128x128xf32>
    %13 = vector.shape_cast %12 : vector<1x128x128xf32> to vector<128x128xf32>
    %14 = arith.maximumf %11, %13 : vector<128x128xf32>
    %15 = arith.maximumf %9, %14 : vector<128x128xf32>
    %c0_4 = arith.constant 0 : index
    %c0_5 = arith.constant 0 : index
    %16 = vector.load %arg3[%c0_4, %c0_5] : memref<1x128xf32, #tpu.memory_space<vmem>>, vector<1x128xf32>
    %17 = vector.broadcast %16 : vector<1x128xf32> to vector<128x128xf32>
    %18 = arith.addf %15, %17 : vector<128x128xf32>
    %cst_6 = arith.constant 0.000000e+00 : f32
    %19 = vector.broadcast %cst_6 : f32 to vector<128x128xf32>
    %20 = arith.maximumf %18, %19 : vector<128x128xf32>
    %21 = arith.truncf %20 : vector<128x128xf32> to vector<128x128xbf16>
    %c0_7 = arith.constant 0 : index
    %c0_8 = arith.constant 0 : index
    %22 = vector.load %arg4[%c0_7, %c0_8] : memref<128x128xbf16, #tpu.memory_space<vmem>>, vector<128x128xbf16>
    tpu.vector_store %arg4[%c0_7, %c0_8], %21 {strides = array<i32>} : memref<128x128xbf16, #tpu.memory_space<vmem>>, vector<128x128xbf16>,
    return
  }
  func.func @transform_0(%arg0: i32) -> (i32, i32, i32) {
    %c0_i32 = arith.constant 0 : i32
    %c0_i32_0 = arith.constant 0 : i32
    %c0_i32_1 = arith.constant 0 : i32
    return %c0_i32, %arg0, %c0_i32_0 : i32, i32, i32
  }
  func.func @transform_1(%arg0: i32) -> (i32, i32) {
    %c0_i32 = arith.constant 0 : i32
    %c0_i32_0 = arith.constant 0 : i32
    %c0_i32_1 = arith.constant 0 : i32
    return %c0_i32, %c0_i32_0 : i32, i32
  }
  func.func @transform_2(%arg0: i32) -> (i32, i32) {
    %c0_i32 = arith.constant 0 : i32
    %c0_i32_0 = arith.constant 0 : i32
    %c0_i32_1 = arith.constant 0 : i32
    return %c0_i32, %c0_i32_0 : i32, i32
  }
  func.func @transform_3(%arg0: i32) -> (i32, i32) {
    %c0_i32 = arith.constant 0 : i32
    %c0_i32_0 = arith.constant 0 : i32
    return %arg0, %c0_i32 : i32, i32
  }
}

module attributes {stable_mosaic.version = 11 : i64} {
  func.func @_conv_relu_pool_kernel(%arg0: i32, %arg1: memref<4x32x288xbf16, #tpu.memory_space<vmem>>, %arg2: memref<288x128xbf16, #tpu.memory_space<vmem>>, %arg3: memref<1x128xf32, #tpu.memory_space<vmem>>, %arg4: memref<32x128xbf16, #tpu.memory_space<vmem>>) attributes {dimension_semantics = [#tpu.dimension_semantics<parallel>], iteration_bounds = array<i64: 1>, scalar_prefetch = 0 : i64, scratch_operands = 0 : i64, tpu.core_type = #tpu.core_type<tc>, window_params = [{transform_indices = @transform_0, window_bounds = array<i64: 4, 32, 288>}, {pipeline_mode = #tpu.pipeline_mode<synchronous>, transform_indices = @transform_1, window_bounds = array<i64: 288, 128>}, {pipeline_mode = #tpu.pipeline_mode<synchronous>, transform_indices = @transform_2, window_bounds = array<i64: 1, 128>}, {transform_indices = @transform_3, window_bounds = array<i64: 32, 128>}]} {
    %c0 = arith.constant 0 : index
    %c0_0 = arith.constant 0 : index
    %c0_1 = arith.constant 0 : index
    %0 = vector.load %arg1[%c0, %c0_0, %c0_1] : memref<4x32x288xbf16, #tpu.memory_space<vmem>>, vector<4x32x288xbf16>
    %1 = vector.shape_cast %0 : vector<4x32x288xbf16> to vector<128x288xbf16>
    %c0_2 = arith.constant 0 : index
    %c0_3 = arith.constant 0 : index
    %2 = vector.load %arg2[%c0_2, %c0_3] : memref<288x128xbf16, #tpu.memory_space<vmem>>, vector<288x128xbf16>
    %cst = arith.constant dense<0.000000e+00> : vector<128x128xf32>
    %3 = tpu.matmul %1, %2, %cst {dimension_numbers = #tpu.dot_dimension_numbers<[1], [0], [0], [1], [0, 0, 1, 1], [], []>} : vector<128x288xbf16>, vector<288x128xbf16>, vector<128x128xf32> -> vector<128x128xf32>
    %4 = vector.shape_cast %3 : vector<128x128xf32> to vector<4x32x128xf32>
    %5 = vector.extract_strided_slice %4 {offsets = [0, 0, 0], sizes = [1, 32, 128], strides = [1, 1, 1]} : vector<4x32x128xf32> to vector<1x32x128xf32>
    %6 = vector.shape_cast %5 : vector<1x32x128xf32> to vector<32x128xf32>
    %7 = vector.extract_strided_slice %4 {offsets = [1, 0, 0], sizes = [1, 32, 128], strides = [1, 1, 1]} : vector<4x32x128xf32> to vector<1x32x128xf32>
    %8 = vector.shape_cast %7 : vector<1x32x128xf32> to vector<32x128xf32>
    %9 = arith.maximumf %6, %8 : vector<32x128xf32>
    %10 = vector.extract_strided_slice %4 {offsets = [2, 0, 0], sizes = [1, 32, 128], strides = [1, 1, 1]} : vector<4x32x128xf32> to vector<1x32x128xf32>
    %11 = vector.shape_cast %10 : vector<1x32x128xf32> to vector<32x128xf32>
    %12 = vector.extract_strided_slice %4 {offsets = [3, 0, 0], sizes = [1, 32, 128], strides = [1, 1, 1]} : vector<4x32x128xf32> to vector<1x32x128xf32>
    %13 = vector.shape_cast %12 : vector<1x32x128xf32> to vector<32x128xf32>
    %14 = arith.maximumf %11, %13 : vector<32x128xf32>
    %15 = arith.maximumf %9, %14 : vector<32x128xf32>
    %c0_4 = arith.constant 0 : index
    %c0_5 = arith.constant 0 : index
    %16 = vector.load %arg3[%c0_4, %c0_5] : memref<1x128xf32, #tpu.memory_space<vmem>>, vector<1x128xf32>
    %17 = vector.broadcast %16 : vector<1x128xf32> to vector<32x128xf32>
    %18 = arith.addf %15, %17 : vector<32x128xf32>
    %cst_6 = arith.constant 0.000000e+00 : f32
    %19 = vector.broadcast %cst_6 : f32 to vector<32x128xf32>
    %20 = arith.maximumf %18, %19 : vector<32x128xf32>
    %21 = arith.truncf %20 : vector<32x128xf32> to vector<32x128xbf16>
    %c0_7 = arith.constant 0 : index
    %c0_8 = arith.constant 0 : index
    %22 = vector.load %arg4[%c0_7, %c0_8] : memref<32x128xbf16, #tpu.memory_space<vmem>>, vector<32x128xbf16>
    tpu.vector_store %arg4[%c0_7, %c0_8], %21 {strides = array<i32>} : memref<32x128xbf16, #tpu.memory_space<vmem>>, vector<32x128xbf16>,
    return
  }
  func.func @transform_0(%arg0: i32) -> (i32, i32, i32) {
    %c0_i32 = arith.constant 0 : i32
    %c0_i32_0 = arith.constant 0 : i32
    %c0_i32_1 = arith.constant 0 : i32
    return %c0_i32, %arg0, %c0_i32_0 : i32, i32, i32
  }
  func.func @transform_1(%arg0: i32) -> (i32, i32) {
    %c0_i32 = arith.constant 0 : i32
    %c0_i32_0 = arith.constant 0 : i32
    %c0_i32_1 = arith.constant 0 : i32
    return %c0_i32, %c0_i32_0 : i32, i32
  }
  func.func @transform_2(%arg0: i32) -> (i32, i32) {
    %c0_i32 = arith.constant 0 : i32
    %c0_i32_0 = arith.constant 0 : i32
    %c0_i32_1 = arith.constant 0 : i32
    return %c0_i32, %c0_i32_0 : i32, i32
  }
  func.func @transform_3(%arg0: i32) -> (i32, i32) {
    %c0_i32 = arith.constant 0 : i32
    %c0_i32_0 = arith.constant 0 : i32
    return %arg0, %c0_i32 : i32, i32
  }
}

module attributes {stable_mosaic.version = 11 : i64} {
  func.func @_fused_fc_kernel(%arg0: i32, %arg1: i32, %arg2: memref<8x2048xbf16, #tpu.memory_space<vmem>>, %arg3: memref<2048x512xbf16, #tpu.memory_space<vmem>>, %arg4: memref<1x512xf32, #tpu.memory_space<vmem>>, %arg5: memref<512x128xbf16, #tpu.memory_space<vmem>>, %arg6: memref<1x128xf32, #tpu.memory_space<vmem>>, %arg7: memref<8x128xf32, #tpu.memory_space<vmem>>, %arg8: memref<8x512xf32, #tpu.memory_space<vmem>>) attributes {dimension_semantics = [#tpu.dimension_semantics<parallel>, #tpu.dimension_semantics<arbitrary>], iteration_bounds = array<i64: 1, 1>, scalar_prefetch = 0 : i64, scratch_operands = 1 : i64, tpu.core_type = #tpu.core_type<tc>, window_params = [{transform_indices = @transform_0, window_bounds = array<i64: 8, 2048>}, {transform_indices = @transform_1, window_bounds = array<i64: 2048, 512>}, {pipeline_mode = #tpu.pipeline_mode<synchronous>, transform_indices = @transform_2, window_bounds = array<i64: 1, 512>}, {pipeline_mode = #tpu.pipeline_mode<synchronous>, transform_indices = @transform_3, window_bounds = array<i64: 512, 128>}, {pipeline_mode = #tpu.pipeline_mode<synchronous>, transform_indices = @transform_4, window_bounds = array<i64: 1, 128>}, {transform_indices = @transform_5, window_bounds = array<i64: 8, 128>}]} {
    %c0_i32 = arith.constant 0 : i32
    %0 = arith.cmpi eq, %arg1, %c0_i32 : i32
    %1 = arith.extui %0 : i1 to i32
    %c0_i32_0 = arith.constant 0 : i32
    %2 = arith.cmpi ne, %1, %c0_i32_0 : i32
    scf.if %2 {
      %cst_10 = arith.constant 0.000000e+00 : f32
      %12 = vector.broadcast %cst_10 : f32 to vector<8x512xf32>
      %c0_11 = arith.constant 0 : index
      %c0_12 = arith.constant 0 : index
      %13 = vector.load %arg8[%c0_11, %c0_12] : memref<8x512xf32, #tpu.memory_space<vmem>>, vector<8x512xf32>
      tpu.vector_store %arg8[%c0_11, %c0_12], %12 {strides = array<i32>} : memref<8x512xf32, #tpu.memory_space<vmem>>, vector<8x512xf32>,
    } else {
    }
    %c0 = arith.constant 0 : index
    %c0_1 = arith.constant 0 : index
    %3 = vector.load %arg8[%c0, %c0_1] : memref<8x512xf32, #tpu.memory_space<vmem>>, vector<8x512xf32>
    %c0_2 = arith.constant 0 : index
    %c0_3 = arith.constant 0 : index
    %4 = vector.load %arg2[%c0_2, %c0_3] : memref<8x2048xbf16, #tpu.memory_space<vmem>>, vector<8x2048xbf16>
    %c0_4 = arith.constant 0 : index
    %c0_5 = arith.constant 0 : index
    %5 = vector.load %arg3[%c0_4, %c0_5] : memref<2048x512xbf16, #tpu.memory_space<vmem>>, vector<2048x512xbf16>
    %cst = arith.constant dense<0.000000e+00> : vector<8x512xf32>
    %6 = tpu.matmul %4, %5, %cst {dimension_numbers = #tpu.dot_dimension_numbers<[1], [0], [0], [1], [0, 0, 1, 1], [], []>} : vector<8x2048xbf16>, vector<2048x512xbf16>, vector<8x512xf32> -> vector<8x512xf32>
    %7 = arith.addf %3, %6 : vector<8x512xf32>
    %c0_6 = arith.constant 0 : index
    %c0_7 = arith.constant 0 : index
    %8 = vector.load %arg8[%c0_6, %c0_7] : memref<8x512xf32, #tpu.memory_space<vmem>>, vector<8x512xf32>
    tpu.vector_store %arg8[%c0_6, %c0_7], %7 {strides = array<i32>} : memref<8x512xf32, #tpu.memory_space<vmem>>, vector<8x512xf32>,
    %c0_i32_8 = arith.constant 0 : i32
    %9 = arith.cmpi eq, %arg1, %c0_i32_8 : i32
    %10 = arith.extui %9 : i1 to i32
    %c0_i32_9 = arith.constant 0 : i32
    %11 = arith.cmpi ne, %10, %c0_i32_9 : i32
    scf.if %11 {
      %c0_10 = arith.constant 0 : index
      %c0_11 = arith.constant 0 : index
      %12 = vector.load %arg8[%c0_10, %c0_11] : memref<8x512xf32, #tpu.memory_space<vmem>>, vector<8x512xf32>
      %c0_12 = arith.constant 0 : index
      %c0_13 = arith.constant 0 : index
      %13 = vector.load %arg4[%c0_12, %c0_13] : memref<1x512xf32, #tpu.memory_space<vmem>>, vector<1x512xf32>
      %14 = vector.broadcast %13 : vector<1x512xf32> to vector<8x512xf32>
      %15 = arith.addf %12, %14 : vector<8x512xf32>
      %cst_14 = arith.constant 0.000000e+00 : f32
      %16 = vector.broadcast %cst_14 : f32 to vector<8x512xf32>
      %17 = arith.maximumf %15, %16 : vector<8x512xf32>
      %18 = arith.truncf %17 : vector<8x512xf32> to vector<8x512xbf16>
      %c0_15 = arith.constant 0 : index
      %c0_16 = arith.constant 0 : index
      %19 = vector.load %arg5[%c0_15, %c0_16] : memref<512x128xbf16, #tpu.memory_space<vmem>>, vector<512x128xbf16>
      %cst_17 = arith.constant dense<0.000000e+00> : vector<8x128xf32>
      %20 = tpu.matmul %18, %19, %cst_17 {dimension_numbers = #tpu.dot_dimension_numbers<[1], [0], [0], [1], [0, 0, 1, 1], [], []>} : vector<8x512xbf16>, vector<512x128xbf16>, vector<8x128xf32> -> vector<8x128xf32>
      %c0_18 = arith.constant 0 : index
      %c0_19 = arith.constant 0 : index
      %21 = vector.load %arg6[%c0_18, %c0_19] : memref<1x128xf32, #tpu.memory_space<vmem>>, vector<1x128xf32>
      %22 = vector.broadcast %21 : vector<1x128xf32> to vector<8x128xf32>
      %23 = arith.addf %20, %22 : vector<8x128xf32>
      %c0_20 = arith.constant 0 : index
      %c0_21 = arith.constant 0 : index
      %24 = vector.load %arg7[%c0_20, %c0_21] : memref<8x128xf32, #tpu.memory_space<vmem>>, vector<8x128xf32>
      tpu.vector_store %arg7[%c0_20, %c0_21], %23 {strides = array<i32>} : memref<8x128xf32, #tpu.memory_space<vmem>>, vector<8x128xf32>,
    } else {
    }
    return
  }
  func.func @transform_0(%arg0: i32, %arg1: i32) -> (i32, i32) {
    %c0_i32 = arith.constant 0 : i32
    return %arg0, %arg1 : i32, i32
  }
  func.func @transform_1(%arg0: i32, %arg1: i32) -> (i32, i32) {
    %c0_i32 = arith.constant 0 : i32
    %c0_i32_0 = arith.constant 0 : i32
    return %arg1, %c0_i32 : i32, i32
  }
  func.func @transform_2(%arg0: i32, %arg1: i32) -> (i32, i32) {
    %c0_i32 = arith.constant 0 : i32
    %c0_i32_0 = arith.constant 0 : i32
    %c0_i32_1 = arith.constant 0 : i32
    return %c0_i32, %c0_i32_0 : i32, i32
  }
  func.func @transform_3(%arg0: i32, %arg1: i32) -> (i32, i32) {
    %c0_i32 = arith.constant 0 : i32
    %c0_i32_0 = arith.constant 0 : i32
    %c0_i32_1 = arith.constant 0 : i32
    return %c0_i32, %c0_i32_0 : i32, i32
  }
  func.func @transform_4(%arg0: i32, %arg1: i32) -> (i32, i32) {
    %c0_i32 = arith.constant 0 : i32
    %c0_i32_0 = arith.constant 0 : i32
    %c0_i32_1 = arith.constant 0 : i32
    return %c0_i32, %c0_i32_0 : i32, i32
  }
  func.func @transform_5(%arg0: i32, %arg1: i32) -> (i32, i32) {
    %c0_i32 = arith.constant 0 : i32
    %c0_i32_0 = arith.constant 0 : i32
    return %arg0, %c0_i32 : i32, i32
  }
}

</mosaic_0001>

<llo_original>
// kernel: plantnet_forward.3
$region0: #{plantnet_forward.3}
  #allocation0 [shape = 'u32[]', space=smem, size = 0x4, offset = 0x4, fixed_abs, tag = 'smem constant byte address 0x4 - core index']
  #allocation1 [shape = 'u32[144,128]{1,0:T(1,128)}', space=vmem, size = 0x12000, scoped, tag = 'internal scratch']
  %s0 = inlined_call_operand.vmem [shape: bf16[4,128,27], index: 0, kind: input, shape index: {}]
  %s1 = inlined_call_operand.vmem [shape: bf16[27,128], index: 1, kind: input, shape index: {}]
  %s2 = inlined_call_operand.vmem [shape: f32[1,128], index: 2, kind: input, shape index: {}]
  %s3 = inlined_call_operand.vmem [shape: bf16[128,128], index: 3, kind: output, shape index: {}]
  %s4 = sld [smem:[#allocation0]]
  $region22: #{plantnet_forward.3} parent=0
    _
  %s6 = ssub.s32 1, %s4
  %s7 = scalar_select 0, %s6, %s4
  // Predicated region
  $region2: #{plantnet_forward.3} parent=0 // pred_check
    _
  $region3: #{plantnet_forward.3} parent=0 // pred_check_branch
    %9 = sbr.rel (0) target = $region5
  $region4: #{plantnet_forward.3} parent=0 // pred_region
    _
  $region5: #{plantnet_forward.3} parent=0 // pred_fallthru
    _
  // Predicated region
  $region6: #{plantnet_forward.3} parent=0 // pred_check
    _
  $region7: #{plantnet_forward.3} parent=0 // pred_check_branch
    %11 = sbr.rel (0) target = $region9
  $region8: #{plantnet_forward.3} parent=0 // pred_region
    _
  $region9: #{plantnet_forward.3} parent=0 // pred_fallthru
    _
  // Predicated region
  $region10: #{plantnet_forward.3} parent=0 // pred_check
    _
  $region11: #{plantnet_forward.3} parent=0 // pred_check_branch
    %13 = sbr.rel (0) target = $region13
  $region12: #{plantnet_forward.3} parent=0 // pred_region
    _
  $region13: #{plantnet_forward.3} parent=0 // pred_fallthru
    _
  %v15 = vld [vmem:[%s0] sm:$0xf]
  %v16 = vld [vmem:[%s0 + $0x4] sm:$0xf]
  %v17 = vld [vmem:[%s0 + $0x8] sm:$0xf]
  %v18 = vld [vmem:[%s0 + $0xc] sm:$0xf]
  %v19 = vld [vmem:[%s0 + $0x10] sm:$0xf]
  %v20 = vld [vmem:[%s0 + $0x14] sm:$0xf]
  %v21 = vld [vmem:[%s0 + $0x18] sm:$0xf]
  %v22 = vld [vmem:[%s0 + $0x1c] sm:$0xf]
  %v23 = vld [vmem:[%s0 + $0x20] sm:$0xf]
  %v24 = vld [vmem:[%s0 + $0x24] sm:$0xf]
  %v25 = vld [vmem:[%s0 + $0x28] sm:$0xf]
  %v26 = vld [vmem:[%s0 + $0x2c] sm:$0xf]
  %v27 = vld [vmem:[%s0 + $0x30] sm:$0xf]
  %v28 = vld [vmem:[%s0 + $0x34] sm:$0xf]
  %v29 = vld [vmem:[%s0 + $0x38] sm:$0xf]
  %v30 = vld [vmem:[%s0 + $0x3c] sm:$0xf]
  %v31 = vld [vmem:[%s0 + $0x40] sm:$0xf]
  %v32 = vld [vmem:[%s0 + $0x44] sm:$0xf]
  %v33 = vld [vmem:[%s0 + $0x48] sm:$0xf]
  %v34 = vld [vmem:[%s0 + $0x4c] sm:$0xf]
  %v35 = vld [vmem:[%s0 + $0x50] sm:$0xf]
  %v36 = vld [vmem:[%s0 + $0x54] sm:$0xf]
  %v37 = vld [vmem:[%s0 + $0x58] sm:$0xf]
  %v38 = vld [vmem:[%s0 + $0x5c] sm:$0xf]
  %v39 = vld [vmem:[%s0 + $0x60] sm:$0xf]
  %v40 = vld [vmem:[%s0 + $0x64] sm:$0xf]
  %v41 = vld [vmem:[%s0 + $0x68] sm:$0xf]
  %v42 = vld [vmem:[%s0 + $0x6c] sm:$0xf]
  %v43 = vld [vmem:[%s0 + $0x70] sm:$0xf]
  %v44 = vld [vmem:[%s0 + $0x74] sm:$0xf]
  %v45 = vld [vmem:[%s0 + $0x78] sm:$0xf]
  %v46 = vld [vmem:[%s0 + $0x7c] sm:$0xf]
  %v47 = vld [vmem:[%s0 + $0x80] sm:$0xf]
  %v48 = vld [vmem:[%s0 + $0x84] sm:$0xf]
  %v49 = vld [vmem:[%s0 + $0x88] sm:$0xf]
  %v50 = vld [vmem:[%s0 + $0x8c] sm:$0xf]
  %v51 = vld [vmem:[%s0 + $0x90] sm:$0xf]
  %v52 = vld [vmem:[%s0 + $0x94] sm:$0xf]
  %v53 = vld [vmem:[%s0 + $0x98] sm:$0xf]
  %v54 = vld [vmem:[%s0 + $0x9c] sm:$0xf]
  %v55 = vld [vmem:[%s0 + $0xa0] sm:$0xf]
  %v56 = vld [vmem:[%s0 + $0xa4] sm:$0xf]
  %v57 = vld [vmem:[%s0 + $0xa8] sm:$0xf]
  %v58 = vld [vmem:[%s0 + $0xac] sm:$0xf]
  %v59 = vld [vmem:[%s0 + $0xb0] sm:$0xf]
  %v60 = vld [vmem:[%s0 + $0xb4] sm:$0xf]
  %v61 = vld [vmem:[%s0 + $0xb8] sm:$0xf]
  %v62 = vld [vmem:[%s0 + $0xbc] sm:$0xf]
  %v63 = vld [vmem:[%s0 + $0xc0] sm:$0xf]
  %v64 = vld [vmem:[%s0 + $0xc4] sm:$0xf]
  %v65 = vld [vmem:[%s0 + $0xc8] sm:$0xf]
  %v66 = vld [vmem:[%s0 + $0xcc] sm:$0xf]
  %v67 = vld [vmem:[%s0 + $0xd0] sm:$0xf]
  %v68 = vld [vmem:[%s0 + $0xd4] sm:$0xf]
  %v69 = vld [vmem:[%s0 + $0xd8] sm:$0xf]
  %v70 = vld [vmem:[%s0 + $0xdc] sm:$0xf]
  %v71 = vld [vmem:[%s0 + $0xe0] sm:$0xf]
  %v72 = vld [vmem:[%s0 + $0xe4] sm:$0xf]
  %v73 = vld [vmem:[%s0 + $0xe8] sm:$0xf]
  %v74 = vld [vmem:[%s0 + $0xec] sm:$0xf]
  %v75 = vld [vmem:[%s0 + $0xf0] sm:$0xf]
  %v76 = vld [vmem:[%s0 + $0xf4] sm:$0xf]
  %v77 = vld [vmem:[%s0 + $0xf8] sm:$0xf]
  %v78 = vld [vmem:[%s0 + $0xfc] sm:$0xf]
  %v79 = vld [vmem:[%s1] sm:$0xf]
  %v80 = vld [vmem:[%s1 + $0x4] sm:$0xf]
  %v81 = vld [vmem:[%s1 + $0x8] sm:$0xf]
  %v82 = vld [vmem:[%s1 + $0xc] sm:$0x3]
  %v147 = vunpack.c.l.b16 %v15
  %v148 = vunpack.c.l.b16 %v16
  %v149 = vunpack.c.l.b16 %v17
  %v150 = vunpack.c.l.b16 %v18
  %v151 = vunpack.c.l.b16 %v19
  %v152 = vunpack.c.l.b16 %v20
  %v153 = vunpack.c.l.b16 %v21
  %v154 = vunpack.c.l.b16 %v22
  %v155 = vunpack.c.l.b16 %v23
  %v156 = vunpack.c.l.b16 %v24
  %v157 = vunpack.c.l.b16 %v25
  %v158 = vunpack.c.l.b16 %v26
  %v159 = vunpack.c.l.b16 %v27
  %v160 = vunpack.c.l.b16 %v28
  %v161 = vunpack.c.l.b16 %v29
  %v162 = vunpack.c.l.b16 %v30
  %v163 = vunpack.c.l.b16 %v31
  %v164 = vunpack.c.l.b16 %v32
  %v165 = vunpack.c.l.b16 %v33
  %v166 = vunpack.c.l.b16 %v34
  %v167 = vunpack.c.l.b16 %v35
  %v168 = vunpack.c.l.b16 %v36
  %v169 = vunpack.c.l.b16 %v37
  %v170 = vunpack.c.l.b16 %v38
  %v171 = vunpack.c.l.b16 %v39
  %v172 = vunpack.c.l.b16 %v40
  %v173 = vunpack.c.l.b16 %v41
  %v174 = vunpack.c.l.b16 %v42
  %v175 = vunpack.c.l.b16 %v43
  %v176 = vunpack.c.l.b16 %v44
  %v177 = vunpack.c.l.b16 %v45
  %v178 = vunpack.c.l.b16 %v46
  %v179 = vunpack.c.l.b16 %v47
  %v180 = vunpack.c.l.b16 %v48
  %v181 = vunpack.c.l.b16 %v49
  %v182 = vunpack.c.l.b16 %v50
  %v183 = vunpack.c.l.b16 %v51
  %v184 = vunpack.c.l.b16 %v52
  %v185 = vunpack.c.l.b16 %v53
  %v186 = vunpack.c.l.b16 %v54
  %v187 = vunpack.c.l.b16 %v55
  %v188 = vunpack.c.l.b16 %v56
  %v189 = vunpack.c.l.b16 %v57
  %v190 = vunpack.c.l.b16 %v58
  %v191 = vunpack.c.l.b16 %v59
  %v192 = vunpack.c.l.b16 %v60
  %v193 = vunpack.c.l.b16 %v61
  %v194 = vunpack.c.l.b16 %v62
  %v195 = vunpack.c.l.b16 %v63
  %v196 = vunpack.c.l.b16 %v64
  %v197 = vunpack.c.l.b16 %v65
  %v198 = vunpack.c.l.b16 %v66
  %v199 = vunpack.c.l.b16 %v67
  %v200 = vunpack.c.l.b16 %v68
  %v201 = vunpack.c.l.b16 %v69
  %v202 = vunpack.c.l.b16 %v70
  %v203 = vunpack.c.l.b16 %v71
  %v204 = vunpack.c.l.b16 %v72
  %v205 = vunpack.c.l.b16 %v73
  %v206 = vunpack.c.l.b16 %v74
  %v207 = vunpack.c.l.b16 %v75
  %v208 = vunpack.c.l.b16 %v76
  %v209 = vunpack.c.l.b16 %v77
  %v210 = vunpack.c.l.b16 %v78
  %v211 = vpack.c.b16 %v148, %v147
  %v212 = vpack.c.b16 %v150, %v149
  %v213 = vpack.c.b16 %v152, %v151
  %v214 = vpack.c.b16 %v154, %v153
  %v215 = vpack.c.b16 %v156, %v155
  %v216 = vpack.c.b16 %v158, %v157
  %v217 = vpack.c.b16 %v160, %v159
  %v218 = vpack.c.b16 %v162, %v161
  %v219 = vpack.c.b16 %v164, %v163
  %v220 = vpack.c.b16 %v166, %v165
  %v221 = vpack.c.b16 %v168, %v167
  %v222 = vpack.c.b16 %v170, %v169
  %v223 = vpack.c.b16 %v172, %v171
  %v224 = vpack.c.b16 %v174, %v173
  %v225 = vpack.c.b16 %v176, %v175
  %v226 = vpack.c.b16 %v178, %v177
  %v227 = vpack.c.b16 %v180, %v179
  %v228 = vpack.c.b16 %v182, %v181
  %v229 = vpack.c.b16 %v184, %v183
  %v230 = vpack.c.b16 %v186, %v185
  %v231 = vpack.c.b16 %v188, %v187
  %v232 = vpack.c.b16 %v190, %v189
  %v233 = vpack.c.b16 %v192, %v191
  %v234 = vpack.c.b16 %v194, %v193
  %v235 = vpack.c.b16 %v196, %v195
  %v236 = vpack.c.b16 %v198, %v197
  %v237 = vpack.c.b16 %v200, %v199
  %v238 = vpack.c.b16 %v202, %v201
  %v239 = vpack.c.b16 %v204, %v203
  %v240 = vpack.c.b16 %v206, %v205
  %v241 = vpack.c.b16 %v208, %v207
  %v242 = vpack.c.b16 %v210, %v209
  %v247 = vunpack.c.l.b16 %v79
  %v248 = vunpack.c.l.b16 %v80
  %v249 = vunpack.c.l.b16 %v81
  %v250 = vunpack.c.l.b16 %v82
  %v251 = vpack.c.b16 %v248, %v247
  %v252 = vpack.c.b16 %v250, %v249
  %vm254 = vcmask 220160
  %v256 = vsel %vm254, %v211, 0
  %v259 = vsel %vm254, %v212, 0
  %v262 = vsel %vm254, %v213, 0
  %v265 = vsel %vm254, %v214, 0
  %v268 = vsel %vm254, %v215, 0
  %v271 = vsel %vm254, %v216, 0
  %v274 = vsel %vm254, %v217, 0
  %v277 = vsel %vm254, %v218, 0
  %v280 = vsel %vm254, %v219, 0
  %v283 = vsel %vm254, %v220, 0
  %v286 = vsel %vm254, %v221, 0
  %v289 = vsel %vm254, %v222, 0
  %v292 = vsel %vm254, %v223, 0
  %v295 = vsel %vm254, %v224, 0
  %v298 = vsel %vm254, %v225, 0
  %v301 = vsel %vm254, %v226, 0
  %v304 = vsel %vm254, %v227, 0
  %v307 = vsel %vm254, %v228, 0
  %v310 = vsel %vm254, %v229, 0
  %v313 = vsel %vm254, %v230, 0
  %v316 = vsel %vm254, %v231, 0
  %v319 = vsel %vm254, %v232, 0
  %v322 = vsel %vm254, %v233, 0
  %v325 = vsel %vm254, %v234, 0
  %v328 = vsel %vm254, %v235, 0
  %v331 = vsel %vm254, %v236, 0
  %v334 = vsel %vm254, %v237, 0
  %v337 = vsel %vm254, %v238, 0
  %v340 = vsel %vm254, %v239, 0
  %v343 = vsel %vm254, %v240, 0
  %v346 = vsel %vm254, %v241, 0
  %v349 = vsel %vm254, %v242, 0
  %vm351 = vcmask 1044480
  %vm352 = vcmask 1045504
  %v353 = vsel %vm351, 4294967295, 65535
  %v354 = vsel %vm352, %v353, 0
  %v356 = vand.u32 %v252, %v354
  %358 = vmatprep.subr.bf16.mxu0 0
  %359 = vmatpush1.bf16.msra.mxu0 0
  %360 = vmatprep.subr.bf16.mxu0 0
  %361 = vmatpush1.bf16.msra.mxu0 0
  %362 = vmatprep.subr.bf16.mxu0 0
  %363 = vmatpush1.bf16.msra.mxu0 0
  %364 = vmatprep.subr.bf16.mxu0 0
  %365 = vmatpush1.bf16.msra.mxu0 0
  %366 = vmatprep.subr.bf16.mxu0 0
  %367 = vmatpush1.bf16.msra.mxu0 0
  %368 = vmatprep.subr.bf16.mxu0 0
  %369 = vmatpush1.bf16.msra.mxu0 0
  %370 = vmatprep.subr.bf16.mxu0 0
  %371 = vmatpush1.bf16.msra.mxu0 %v356
  %372 = vmatprep.subr.bf16.mxu0 0
  %373 = vmatpush1.bf16.msra.mxu0 %v251
  %374 = vmatprep.subr.bf16.mxu0 0
  %375 = vmatpush2.bf16.msra.mxu0 0
  %376 = vmatprep.subr.bf16.mxu0 0
  %377 = vmatpush2.bf16.msra.mxu0 0
  %378 = vmatprep.subr.bf16.mxu0 0
  %379 = vmatpush2.bf16.msra.mxu0 0
  %380 = vmatprep.subr.bf16.mxu0 0
  %381 = vmatpush2.bf16.msra.mxu0 0
  %382 = vmatprep.subr.bf16.mxu0 0
  %383 = vmatpush2.bf16.msra.mxu0 0
  %384 = vmatprep.subr.bf16.mxu0 0
  %385 = vmatpush2.bf16.msra.mxu0 0
  %386 = vmatprep.subr.bf16.mxu0 0
  %387 = vmatpush2.bf16.msra.mxu0 0
  %388 = vmatprep.subr.bf16.mxu0 0
  %389 = vmatpush2.bf16.msra.mxu0 0
  %390 = vmatprep.mubr.bf16.mxu0 0
  %391 = vmatmul.mubr.bf16.gmra.mxu0 %v256
  %v392 = vpop.f32.mrf.mxu0
  %v393 = vadd.f32 0.0, %v392
  %v394 = vpop.f32.mrf.mxu0
  %v395 = vpop.f32.mrf.mxu0
  %v396 = vadd.f32 0.0, %v395
  %v397 = vpop.f32.mrf.mxu0
  %398 = vmatprep.mubr.bf16.mxu0 0
  %399 = vmatmul.mubr.bf16.gmra.mxu0 %v259
  %v400 = vpop.f32.mrf.mxu0
  %v401 = vadd.f32 0.0, %v400
  %v402 = vpop.f32.mrf.mxu0
  %v403 = vpop.f32.mrf.mxu0
  %v404 = vadd.f32 0.0, %v403
  %v405 = vpop.f32.mrf.mxu0
  %406 = vmatprep.mubr.bf16.mxu0 0
  %407 = vmatmul.mubr.bf16.gmra.mxu0 %v262
  %v408 = vpop.f32.mrf.mxu0
  %v409 = vadd.f32 0.0, %v408
  %v410 = vpop.f32.mrf.mxu0
  %v411 = vpop.f32.mrf.mxu0
  %v412 = vadd.f32 0.0, %v411
  %v413 = vpop.f32.mrf.mxu0
  %414 = vmatprep.mubr.bf16.mxu0 0
  %415 = vmatmul.mubr.bf16.gmra.mxu0 %v265
  %v416 = vpop.f32.mrf.mxu0
  %v417 = vadd.f32 0.0, %v416
  %v418 = vpop.f32.mrf.mxu0
  %v419 = vpop.f32.mrf.mxu0
  %v420 = vadd.f32 0.0, %v419
  %v421 = vpop.f32.mrf.mxu0
  %422 = vmatprep.mubr.bf16.mxu0 0
  %423 = vmatmul.mubr.bf16.gmra.mxu0 %v268
  %v424 = vpop.f32.mrf.mxu0
  %v425 = vadd.f32 0.0, %v424
  %v426 = vpop.f32.mrf.mxu0
  %v427 = vpop.f32.mrf.mxu0
  %v428 = vadd.f32 0.0, %v427
  %v429 = vpop.f32.mrf.mxu0
  %430 = vmatprep.mubr.bf16.mxu0 0
  %431 = vmatmul.mubr.bf16.gmra.mxu0 %v271
  %v432 = vpop.f32.mrf.mxu0
  %v433 = vadd.f32 0.0, %v432
  %v434 = vpop.f32.mrf.mxu0
  %v435 = vpop.f32.mrf.mxu0
  %v436 = vadd.f32 0.0, %v435
  %v437 = vpop.f32.mrf.mxu0
  %438 = vmatprep.mubr.bf16.mxu0 0
  %439 = vmatmul.mubr.bf16.gmra.mxu0 %v274
  %v440 = vpop.f32.mrf.mxu0
  %v441 = vadd.f32 0.0, %v440
  %v442 = vpop.f32.mrf.mxu0
  %v443 = vpop.f32.mrf.mxu0
  %v444 = vadd.f32 0.0, %v443
  %v445 = vpop.f32.mrf.mxu0
  %446 = vmatprep.mubr.bf16.mxu0 0
  %447 = vmatmul.mubr.bf16.gmra.mxu0 %v277
  %v448 = vpop.f32.mrf.mxu0
  %v449 = vadd.f32 0.0, %v448
  %v450 = vpop.f32.mrf.mxu0
  %v451 = vpop.f32.mrf.mxu0
  %v452 = vadd.f32 0.0, %v451
  %v453 = vpop.f32.mrf.mxu0
  %454 = vmatprep.mubr.bf16.mxu0 0
  %455 = vmatmul.mubr.bf16.gmra.mxu0 %v280
  %v456 = vpop.f32.mrf.mxu0
  %v457 = vadd.f32 0.0, %v456
  %v458 = vpop.f32.mrf.mxu0
  %v459 = vpop.f32.mrf.mxu0
  %v460 = vadd.f32 0.0, %v459
  %v461 = vpop.f32.mrf.mxu0
  %462 = vmatprep.mubr.bf16.mxu0 0
  %463 = vmatmul.mubr.bf16.gmra.mxu0 %v283
  %v464 = vpop.f32.mrf.mxu0
  %v465 = vadd.f32 0.0, %v464
  %v466 = vpop.f32.mrf.mxu0
  %v467 = vpop.f32.mrf.mxu0
  %v468 = vadd.f32 0.0, %v467
  %v469 = vpop.f32.mrf.mxu0
  %470 = vmatprep.mubr.bf16.mxu0 0
  %471 = vmatmul.mubr.bf16.gmra.mxu0 %v286
  %v472 = vpop.f32.mrf.mxu0
  %v473 = vadd.f32 0.0, %v472
  %v474 = vpop.f32.mrf.mxu0
  %v475 = vpop.f32.mrf.mxu0
  %v476 = vadd.f32 0.0, %v475
  %v477 = vpop.f32.mrf.mxu0
  %478 = vmatprep.mubr.bf16.mxu0 0
  %479 = vmatmul.mubr.bf16.gmra.mxu0 %v289
  %v480 = vpop.f32.mrf.mxu0
  %v481 = vadd.f32 0.0, %v480
  %v482 = vpop.f32.mrf.mxu0
  %v483 = vpop.f32.mrf.mxu0
  %v484 = vadd.f32 0.0, %v483
  %v485 = vpop.f32.mrf.mxu0
  %486 = vmatprep.mubr.bf16.mxu0 0
  %487 = vmatmul.mubr.bf16.gmra.mxu0 %v292
  %v488 = vpop.f32.mrf.mxu0
  %v489 = vadd.f32 0.0, %v488
  %v490 = vpop.f32.mrf.mxu0
  %v491 = vpop.f32.mrf.mxu0
  %v492 = vadd.f32 0.0, %v491
  %v493 = vpop.f32.mrf.mxu0
  %494 = vmatprep.mubr.bf16.mxu0 0
  %495 = vmatmul.mubr.bf16.gmra.mxu0 %v295
  %v496 = vpop.f32.mrf.mxu0
  %v497 = vadd.f32 0.0, %v496
  %v498 = vpop.f32.mrf.mxu0
  %v499 = vpop.f32.mrf.mxu0
  %v500 = vadd.f32 0.0, %v499
  %v501 = vpop.f32.mrf.mxu0
  %502 = vmatprep.mubr.bf16.mxu0 0
  %503 = vmatmul.mubr.bf16.gmra.mxu0 %v298
  %v504 = vpop.f32.mrf.mxu0
  %v505 = vadd.f32 0.0, %v504
  %v506 = vpop.f32.mrf.mxu0
  %v507 = vpop.f32.mrf.mxu0
  %v508 = vadd.f32 0.0, %v507
  %v509 = vpop.f32.mrf.mxu0
  %510 = vmatprep.mubr.bf16.mxu0 0
  %511 = vmatmul.mubr.bf16.gmra.mxu0 %v301
  %v512 = vpop.f32.mrf.mxu0
  %v513 = vadd.f32 0.0, %v512
  %v514 = vpop.f32.mrf.mxu0
  %v515 = vpop.f32.mrf.mxu0
  %v516 = vadd.f32 0.0, %v515
  %v517 = vpop.f32.mrf.mxu0
  %518 = vmatprep.mubr.bf16.mxu0 0
  %519 = vmatmul.mubr.bf16.gmra.mxu0 %v304
  %v520 = vpop.f32.mrf.mxu0
  %v521 = vadd.f32 0.0, %v520
  %v522 = vpop.f32.mrf.mxu0
  %v523 = vpop.f32.mrf.mxu0
  %v524 = vadd.f32 0.0, %v523
  %v525 = vpop.f32.mrf.mxu0
  %526 = vmatprep.mubr.bf16.mxu0 0
  %527 = vmatmul.mubr.bf16.gmra.mxu0 %v307
  %v528 = vpop.f32.mrf.mxu0
  %v529 = vadd.f32 0.0, %v528
  %v530 = vpop.f32.mrf.mxu0
  %v531 = vpop.f32.mrf.mxu0
  %v532 = vadd.f32 0.0, %v531
  %v533 = vpop.f32.mrf.mxu0
  %534 = vmatprep.mubr.bf16.mxu0 0
  %535 = vmatmul.mubr.bf16.gmra.mxu0 %v310
  %v536 = vpop.f32.mrf.mxu0
  %v537 = vadd.f32 0.0, %v536
  %v538 = vpop.f32.mrf.mxu0
  %v539 = vpop.f32.mrf.mxu0
  %v540 = vadd.f32 0.0, %v539
  %v541 = vpop.f32.mrf.mxu0
  %542 = vmatprep.mubr.bf16.mxu0 0
  %543 = vmatmul.mubr.bf16.gmra.mxu0 %v313
  %v544 = vpop.f32.mrf.mxu0
  %v545 = vadd.f32 0.0, %v544
  %v546 = vpop.f32.mrf.mxu0
  %v547 = vpop.f32.mrf.mxu0
  %v548 = vadd.f32 0.0, %v547
  %v549 = vpop.f32.mrf.mxu0
  %550 = vmatprep.mubr.bf16.mxu0 0
  %551 = vmatmul.mubr.bf16.gmra.mxu0 %v316
  %v552 = vpop.f32.mrf.mxu0
  %v553 = vadd.f32 0.0, %v552
  %v554 = vpop.f32.mrf.mxu0
  %v555 = vpop.f32.mrf.mxu0
  %v556 = vadd.f32 0.0, %v555
  %v557 = vpop.f32.mrf.mxu0
  %558 = vmatprep.mubr.bf16.mxu0 0
  %559 = vmatmul.mubr.bf16.gmra.mxu0 %v319
  %v560 = vpop.f32.mrf.mxu0
  %v561 = vadd.f32 0.0, %v560
  %v562 = vpop.f32.mrf.mxu0
  %v563 = vpop.f32.mrf.mxu0
  %v564 = vadd.f32 0.0, %v563
  %v565 = vpop.f32.mrf.mxu0
  %566 = vmatprep.mubr.bf16.mxu0 0
  %567 = vmatmul.mubr.bf16.gmra.mxu0 %v322
  %v568 = vpop.f32.mrf.mxu0
  %v569 = vadd.f32 0.0, %v568
  %v570 = vpop.f32.mrf.mxu0
  %v571 = vpop.f32.mrf.mxu0
  %v572 = vadd.f32 0.0, %v571
  %v573 = vpop.f32.mrf.mxu0
  %574 = vmatprep.mubr.bf16.mxu0 0
  %575 = vmatmul.mubr.bf16.gmra.mxu0 %v325
  %v576 = vpop.f32.mrf.mxu0
  %v577 = vadd.f32 0.0, %v576
  %v578 = vpop.f32.mrf.mxu0
  %v579 = vpop.f32.mrf.mxu0
  %v580 = vadd.f32 0.0, %v579
  %v581 = vpop.f32.mrf.mxu0
  %582 = vmatprep.mubr.bf16.mxu0 0
  %583 = vmatmul.mubr.bf16.gmra.mxu0 %v328
  %v584 = vpop.f32.mrf.mxu0
  %v585 = vadd.f32 0.0, %v584
  %v586 = vpop.f32.mrf.mxu0
  %v587 = vpop.f32.mrf.mxu0
  %v588 = vadd.f32 0.0, %v587
  %v589 = vpop.f32.mrf.mxu0
  %590 = vmatprep.mubr.bf16.mxu0 0
  %591 = vmatmul.mubr.bf16.gmra.mxu0 %v331
  %v592 = vpop.f32.mrf.mxu0
  %v593 = vadd.f32 0.0, %v592
  %v594 = vpop.f32.mrf.mxu0
  %v595 = vpop.f32.mrf.mxu0
  %v596 = vadd.f32 0.0, %v595
  %v597 = vpop.f32.mrf.mxu0
  %598 = vmatprep.mubr.bf16.mxu0 0
  %599 = vmatmul.mubr.bf16.gmra.mxu0 %v334
  %v600 = vpop.f32.mrf.mxu0
  %v601 = vadd.f32 0.0, %v600
  %v602 = vpop.f32.mrf.mxu0
  %v603 = vpop.f32.mrf.mxu0
  %v604 = vadd.f32 0.0, %v603
  %v605 = vpop.f32.mrf.mxu0
  %606 = vmatprep.mubr.bf16.mxu0 0
  %607 = vmatmul.mubr.bf16.gmra.mxu0 %v337
  %v608 = vpop.f32.mrf.mxu0
  %v609 = vadd.f32 0.0, %v608
  %v610 = vpop.f32.mrf.mxu0
  %v611 = vpop.f32.mrf.mxu0
  %v612 = vadd.f32 0.0, %v611
  %v613 = vpop.f32.mrf.mxu0
  %614 = vmatprep.mubr.bf16.mxu0 0
  %615 = vmatmul.mubr.bf16.gmra.mxu0 %v340
  %v616 = vpop.f32.mrf.mxu0
  %v617 = vadd.f32 0.0, %v616
  %v618 = vpop.f32.mrf.mxu0
  %v619 = vpop.f32.mrf.mxu0
  %v620 = vadd.f32 0.0, %v619
  %v621 = vpop.f32.mrf.mxu0
  %622 = vmatprep.mubr.bf16.mxu0 0
  %623 = vmatmul.mubr.bf16.gmra.mxu0 %v343
  %v624 = vpop.f32.mrf.mxu0
  %v625 = vadd.f32 0.0, %v624
  %v626 = vpop.f32.mrf.mxu0
  %v627 = vpop.f32.mrf.mxu0
  %v628 = vadd.f32 0.0, %v627
  %v629 = vpop.f32.mrf.mxu0
  %630 = vmatprep.mubr.bf16.mxu0 0
  %631 = vmatmul.mubr.bf16.gmra.mxu0 %v346
  %v632 = vpop.f32.mrf.mxu0
  %v633 = vadd.f32 0.0, %v632
  %v634 = vpop.f32.mrf.mxu0
  %v635 = vpop.f32.mrf.mxu0
  %v636 = vadd.f32 0.0, %v635
  %v637 = vpop.f32.mrf.mxu0
  %638 = vmatprep.mubr.bf16.mxu0 0
  %639 = vmatmul.mubr.bf16.gmra.mxu0 %v349
  %v640 = vpop.f32.mrf.mxu0
  %v641 = vadd.f32 0.0, %v640
  %v642 = vpop.f32.mrf.mxu0
  %v643 = vpop.f32.mrf.mxu0
  %v644 = vadd.f32 0.0, %v643
  %v645 = vpop.f32.mrf.mxu0
  %646 = vdwg.mxu0
  %v647 = vmax.f32 %v393, %v457
  %v648 = vmax.f32 %v396, %v460
  %v649 = vmax.f32 %v401, %v465
  %v650 = vmax.f32 %v404, %v468
  %v651 = vmax.f32 %v409, %v473
  %v652 = vmax.f32 %v412, %v476
  %v653 = vmax.f32 %v417, %v481
  %v654 = vmax.f32 %v420, %v484
  %v655 = vmax.f32 %v425, %v489
  %v656 = vmax.f32 %v428, %v492
  %v657 = vmax.f32 %v433, %v497
  %v658 = vmax.f32 %v436, %v500
  %v659 = vmax.f32 %v441, %v505
  %v660 = vmax.f32 %v444, %v508
  %v661 = vmax.f32 %v449, %v513
  %v662 = vmax.f32 %v452, %v516
  %v663 = vmax.f32 %v521, %v585
  %v664 = vmax.f32 %v524, %v588
  %v665 = vmax.f32 %v529, %v593
  %v666 = vmax.f32 %v532, %v596
  %v667 = vmax.f32 %v537, %v601
  %v668 = vmax.f32 %v540, %v604
  %v669 = vmax.f32 %v545, %v609
  %v670 = vmax.f32 %v548, %v612
  %v671 = vmax.f32 %v553, %v617
  %v672 = vmax.f32 %v556, %v620
  %v673 = vmax.f32 %v561, %v625
  %v674 = vmax.f32 %v564, %v628
  %v675 = vmax.f32 %v569, %v633
  %v676 = vmax.f32 %v572, %v636
  %v677 = vmax.f32 %v577, %v641
  %v678 = vmax.f32 %v580, %v644
  %v679 = vmax.f32 %v647, %v663
  %v680 = vmax.f32 %v648, %v664
  %v681 = vmax.f32 %v649, %v665
  %v682 = vmax.f32 %v650, %v666
  %v683 = vmax.f32 %v651, %v667
  %v684 = vmax.f32 %v652, %v668
  %v685 = vmax.f32 %v653, %v669
  %v686 = vmax.f32 %v654, %v670
  %v687 = vmax.f32 %v655, %v671
  %v688 = vmax.f32 %v656, %v672
  %v689 = vmax.f32 %v657, %v673
  %v690 = vmax.f32 %v658, %v674
  %v691 = vmax.f32 %v659, %v675
  %v692 = vmax.f32 %v660, %v676
  %v693 = vmax.f32 %v661, %v677
  %v694 = vmax.f32 %v662, %v678
  %v695 = vld [vmem:[%s2] sm:$0x1]
  %v697 = vlaneseq
  %v698 = vshrl.u32 %v697, 7
  %v699 = vsub.s32 0, %v698
  %v700 = vrot.slane %v695, %v699
  %v702 = vadd.f32 %v679, %v700
  %v703 = vadd.f32 %v680, %v700
  %v704 = vadd.f32 %v681, %v700
  %v705 = vadd.f32 %v682, %v700
  %v706 = vadd.f32 %v683, %v700
  %v707 = vadd.f32 %v684, %v700
  %v708 = vadd.f32 %v685, %v700
  %v709 = vadd.f32 %v686, %v700
  %v710 = vadd.f32 %v687, %v700
  %v711 = vadd.f32 %v688, %v700
  %v712 = vadd.f32 %v689, %v700
  %v713 = vadd.f32 %v690, %v700
  %v714 = vadd.f32 %v691, %v700
  %v715 = vadd.f32 %v692, %v700
  %v716 = vadd.f32 %v693, %v700
  %v717 = vadd.f32 %v694, %v700
  %v718 = vmax.f32 %v702, 0.0
  %v719 = vmax.f32 %v703, 0.0
  %v720 = vmax.f32 %v704, 0.0
  %v721 = vmax.f32 %v705, 0.0
  %v722 = vmax.f32 %v706, 0.0
  %v723 = vmax.f32 %v707, 0.0
  %v724 = vmax.f32 %v708, 0.0
  %v725 = vmax.f32 %v709, 0.0
  %v726 = vmax.f32 %v710, 0.0
  %v727 = vmax.f32 %v711, 0.0
  %v728 = vmax.f32 %v712, 0.0
  %v729 = vmax.f32 %v713, 0.0
  %v730 = vmax.f32 %v714, 0.0
  %v731 = vmax.f32 %v715, 0.0
  %v732 = vmax.f32 %v716, 0.0
  %v733 = vmax.f32 %v717, 0.0
  %v734 = vpack.c.bf16 %v719, %v718
  %v735 = vpack.c.bf16 %v721, %v720
  %v736 = vpack.c.bf16 %v723, %v722
  %v737 = vpack.c.bf16 %v725, %v724
  %v738 = vpack.c.bf16 %v727, %v726
  %v739 = vpack.c.bf16 %v729, %v728
  %v740 = vpack.c.bf16 %v731, %v730
  %v741 = vpack.c.bf16 %v733, %v732
  %v750 = vunpack.c.l.b16 %v734
  %v751 = vunpack.c.h.b16 %v734
  %v752 = vunpack.c.l.b16 %v735
  %v753 = vunpack.c.h.b16 %v735
  %v754 = vunpack.c.l.b16 %v736
  %v755 = vunpack.c.h.b16 %v736
  %v756 = vunpack.c.l.b16 %v737
  %v757 = vunpack.c.h.b16 %v737
  %v758 = vunpack.c.l.b16 %v738
  %v759 = vunpack.c.h.b16 %v738
  %v760 = vunpack.c.l.b16 %v739
  %v761 = vunpack.c.h.b16 %v739
  %v762 = vunpack.c.l.b16 %v740
  %v763 = vunpack.c.h.b16 %v740
  %v764 = vunpack.c.l.b16 %v741
  %v765 = vunpack.c.h.b16 %v741
  %v766 = vpack.c.b16 %v750, %v750
  %v767 = vpack.c.b16 %v751, %v751
  %v768 = vpack.c.b16 %v752, %v752
  %v769 = vpack.c.b16 %v753, %v753
  %v770 = vpack.c.b16 %v754, %v754
  %v771 = vpack.c.b16 %v755, %v755
  %v772 = vpack.c.b16 %v756, %v756
  %v773 = vpack.c.b16 %v757, %v757
  %v774 = vpack.c.b16 %v758, %v758
  %v775 = vpack.c.b16 %v759, %v759
  %v776 = vpack.c.b16 %v760, %v760
  %v777 = vpack.c.b16 %v761, %v761
  %v778 = vpack.c.b16 %v762, %v762
  %v779 = vpack.c.b16 %v763, %v763
  %v780 = vpack.c.b16 %v764, %v764
  %v781 = vpack.c.b16 %v765, %v765
  %798 = vst [vmem:[%s3] sm:$0xf] %v766
  %799 = vst [vmem:[%s3 + $0x4] sm:$0xf] %v767
  %800 = vst [vmem:[%s3 + $0x8] sm:$0xf] %v768
  %801 = vst [vmem:[%s3 + $0xc] sm:$0xf] %v769
  %802 = vst [vmem:[%s3 + $0x10] sm:$0xf] %v770
  %803 = vst [vmem:[%s3 + $0x14] sm:$0xf] %v771
  %804 = vst [vmem:[%s3 + $0x18] sm:$0xf] %v772
  %805 = vst [vmem:[%s3 + $0x1c] sm:$0xf] %v773
  %806 = vst [vmem:[%s3 + $0x20] sm:$0xf] %v774
  %807 = vst [vmem:[%s3 + $0x24] sm:$0xf] %v775
  %808 = vst [vmem:[%s3 + $0x28] sm:$0xf] %v776
  %809 = vst [vmem:[%s3 + $0x2c] sm:$0xf] %v777
  %810 = vst [vmem:[%s3 + $0x30] sm:$0xf] %v778
  %811 = vst [vmem:[%s3 + $0x34] sm:$0xf] %v779
  %812 = vst [vmem:[%s3 + $0x38] sm:$0xf] %v780
  %813 = vst [vmem:[%s3 + $0x3c] sm:$0xf] %v781
  // Predicated region
  $region14: #{plantnet_forward.3} parent=0 // pred_check
    _
  $region15: #{plantnet_forward.3} parent=0 // pred_check_branch
    %815 = sbr.rel (0) target = $region17
  $region16: #{plantnet_forward.3} parent=0 // pred_region
    _
  $region17: #{plantnet_forward.3} parent=0 // pred_fallthru
    _
  // Predicated region
  $region18: #{plantnet_forward.3} parent=0 // pred_check
    _
  $region19: #{plantnet_forward.3} parent=0 // pred_check_branch
    %817 = sbr.rel (0) target = $region21
  $region20: #{plantnet_forward.3} parent=0 // pred_region
    _
  $region21: #{plantnet_forward.3} parent=0 // pred_fallthru
    _

// kernel: plantnet_forward.4
$region0: #{plantnet_forward.4}
  #allocation0 [shape = 'u32[]', space=smem, size = 0x4, offset = 0x4, fixed_abs, tag = 'smem constant byte address 0x4 - core index']
  #allocation1 [shape = 'u32[144,128]{1,0:T(1,128)}', space=vmem, size = 0x12000, scoped, tag = 'internal scratch']
  %s0 = inlined_call_operand.vmem [shape: bf16[4,32,288], index: 0, kind: input, shape index: {}]
  %s1 = inlined_call_operand.vmem [shape: bf16[288,128], index: 1, kind: input, shape index: {}]
  %s2 = inlined_call_operand.vmem [shape: f32[1,128], index: 2, kind: input, shape index: {}]
  %s3 = inlined_call_operand.vmem [shape: bf16[32,128], index: 3, kind: output, shape index: {}]
  %s4 = sld [smem:[#allocation0]]
  $region22: #{plantnet_forward.4} parent=0
    _
  %s6 = ssub.s32 1, %s4
  %s7 = scalar_select 0, %s6, %s4
  // Predicated region
  $region2: #{plantnet_forward.4} parent=0 // pred_check
    _
  $region3: #{plantnet_forward.4} parent=0 // pred_check_branch
    %9 = sbr.rel (0) target = $region5
  $region4: #{plantnet_forward.4} parent=0 // pred_region
    _
  $region5: #{plantnet_forward.4} parent=0 // pred_fallthru
    _
  // Predicated region
  $region6: #{plantnet_forward.4} parent=0 // pred_check
    _
  $region7: #{plantnet_forward.4} parent=0 // pred_check_branch
    %11 = sbr.rel (0) target = $region9
  $region8: #{plantnet_forward.4} parent=0 // pred_region
    _
  $region9: #{plantnet_forward.4} parent=0 // pred_fallthru
    _
  // Predicated region
  $region10: #{plantnet_forward.4} parent=0 // pred_check
    _
  $region11: #{plantnet_forward.4} parent=0 // pred_check_branch
    %13 = sbr.rel (0) target = $region13
  $region12: #{plantnet_forward.4} parent=0 // pred_region
    _
  $region13: #{plantnet_forward.4} parent=0 // pred_fallthru
    _
  %v15 = vld [vmem:[%s0] sm:$0xff]
  %v16 = vld [vmem:[%s0 + $0x8] sm:$0xf]
  %v17 = vld [vmem:[%s0 + $0xc] sm:$0xff]
  %v18 = vld [vmem:[%s0 + $0x14] sm:$0xf]
  %v19 = vld [vmem:[%s0 + $0x18] sm:$0xff]
  %v20 = vld [vmem:[%s0 + $0x20] sm:$0xf]
  %v21 = vld [vmem:[%s0 + $0x24] sm:$0xff]
  %v22 = vld [vmem:[%s0 + $0x2c] sm:$0xf]
  %v23 = vld [vmem:[%s0 + $0x30] sm:$0xff]
  %v24 = vld [vmem:[%s0 + $0x38] sm:$0xf]
  %v25 = vld [vmem:[%s0 + $0x3c] sm:$0xff]
  %v26 = vld [vmem:[%s0 + $0x44] sm:$0xf]
  %v27 = vld [vmem:[%s0 + $0x48] sm:$0xff]
  %v28 = vld [vmem:[%s0 + $0x50] sm:$0xf]
  %v29 = vld [vmem:[%s0 + $0x54] sm:$0xff]
  %v30 = vld [vmem:[%s0 + $0x5c] sm:$0xf]
  %v31 = vld [vmem:[%s0 + $0x60] sm:$0xff]
  %v32 = vld [vmem:[%s0 + $0x68] sm:$0xf]
  %v33 = vld [vmem:[%s0 + $0x6c] sm:$0xff]
  %v34 = vld [vmem:[%s0 + $0x74] sm:$0xf]
  %v35 = vld [vmem:[%s0 + $0x78] sm:$0xff]
  %v36 = vld [vmem:[%s0 + $0x80] sm:$0xf]
  %v37 = vld [vmem:[%s0 + $0x84] sm:$0xff]
  %v38 = vld [vmem:[%s0 + $0x8c] sm:$0xf]
  %v39 = vld [vmem:[%s0 + $0x90] sm:$0xff]
  %v40 = vld [vmem:[%s0 + $0x98] sm:$0xf]
  %v41 = vld [vmem:[%s0 + $0x9c] sm:$0xff]
  %v42 = vld [vmem:[%s0 + $0xa4] sm:$0xf]
  %v43 = vld [vmem:[%s0 + $0xa8] sm:$0xff]
  %v44 = vld [vmem:[%s0 + $0xb0] sm:$0xf]
  %v45 = vld [vmem:[%s0 + $0xb4] sm:$0xff]
  %v46 = vld [vmem:[%s0 + $0xbc] sm:$0xf]
  %v47 = vld [vmem:[%s1] sm:$0xf]
  %v48 = vld [vmem:[%s1 + $0x4] sm:$0xf]
  %v49 = vld [vmem:[%s1 + $0x8] sm:$0xf]
  %v50 = vld [vmem:[%s1 + $0xc] sm:$0xf]
  %v51 = vld [vmem:[%s1 + $0x10] sm:$0xf]
  %v52 = vld [vmem:[%s1 + $0x14] sm:$0xf]
  %v53 = vld [vmem:[%s1 + $0x18] sm:$0xf]
  %v54 = vld [vmem:[%s1 + $0x1c] sm:$0xf]
  %v55 = vld [vmem:[%s1 + $0x20] sm:$0xf]
  %v56 = vld [vmem:[%s1 + $0x24] sm:$0xf]
  %v57 = vld [vmem:[%s1 + $0x28] sm:$0xf]
  %v58 = vld [vmem:[%s1 + $0x2c] sm:$0xf]
  %v59 = vld [vmem:[%s1 + $0x30] sm:$0xf]
  %v60 = vld [vmem:[%s1 + $0x34] sm:$0xf]
  %v61 = vld [vmem:[%s1 + $0x38] sm:$0xf]
  %v62 = vld [vmem:[%s1 + $0x3c] sm:$0xf]
  %v63 = vld [vmem:[%s1 + $0x40] sm:$0xf]
  %v64 = vld [vmem:[%s1 + $0x44] sm:$0xf]
  %v65 = vld [vmem:[%s1 + $0x48] sm:$0xf]
  %v66 = vld [vmem:[%s1 + $0x4c] sm:$0xf]
  %v67 = vld [vmem:[%s1 + $0x50] sm:$0xf]
  %v68 = vld [vmem:[%s1 + $0x54] sm:$0xf]
  %v69 = vld [vmem:[%s1 + $0x58] sm:$0xf]
  %v70 = vld [vmem:[%s1 + $0x5c] sm:$0xf]
  %v71 = vld [vmem:[%s1 + $0x60] sm:$0xf]
  %v72 = vld [vmem:[%s1 + $0x64] sm:$0xf]
  %v73 = vld [vmem:[%s1 + $0x68] sm:$0xf]
  %v74 = vld [vmem:[%s1 + $0x6c] sm:$0xf]
  %v75 = vld [vmem:[%s1 + $0x70] sm:$0xf]
  %v76 = vld [vmem:[%s1 + $0x74] sm:$0xf]
  %v77 = vld [vmem:[%s1 + $0x78] sm:$0xf]
  %v78 = vld [vmem:[%s1 + $0x7c] sm:$0xf]
  %v79 = vld [vmem:[%s1 + $0x80] sm:$0xf]
  %v80 = vld [vmem:[%s1 + $0x84] sm:$0xf]
  %v81 = vld [vmem:[%s1 + $0x88] sm:$0xf]
  %v82 = vld [vmem:[%s1 + $0x8c] sm:$0xf]
  %v115 = vunpack.c.l.b16 %v15
  %v116 = vunpack.c.h.b16 %v15
  %v117 = vunpack.c.l.b16 %v16
  %v118 = vunpack.c.l.b16 %v17
  %v119 = vunpack.c.h.b16 %v17
  %v120 = vunpack.c.l.b16 %v18
  %v121 = vunpack.c.l.b16 %v19
  %v122 = vunpack.c.h.b16 %v19
  %v123 = vunpack.c.l.b16 %v20
  %v124 = vunpack.c.l.b16 %v21
  %v125 = vunpack.c.h.b16 %v21
  %v126 = vunpack.c.l.b16 %v22
  %v127 = vunpack.c.l.b16 %v23
  %v128 = vunpack.c.h.b16 %v23
  %v129 = vunpack.c.l.b16 %v24
  %v130 = vunpack.c.l.b16 %v25
  %v131 = vunpack.c.h.b16 %v25
  %v132 = vunpack.c.l.b16 %v26
  %v133 = vunpack.c.l.b16 %v27
  %v134 = vunpack.c.h.b16 %v27
  %v135 = vunpack.c.l.b16 %v28
  %v136 = vunpack.c.l.b16 %v29
  %v137 = vunpack.c.h.b16 %v29
  %v138 = vunpack.c.l.b16 %v30
  %v139 = vunpack.c.l.b16 %v31
  %v140 = vunpack.c.h.b16 %v31
  %v141 = vunpack.c.l.b16 %v32
  %v142 = vunpack.c.l.b16 %v33
  %v143 = vunpack.c.h.b16 %v33
  %v144 = vunpack.c.l.b16 %v34
  %v145 = vunpack.c.l.b16 %v35
  %v146 = vunpack.c.h.b16 %v35
  %v147 = vunpack.c.l.b16 %v36
  %v148 = vunpack.c.l.b16 %v37
  %v149 = vunpack.c.h.b16 %v37
  %v150 = vunpack.c.l.b16 %v38
  %v151 = vunpack.c.l.b16 %v39
  %v152 = vunpack.c.h.b16 %v39
  %v153 = vunpack.c.l.b16 %v40
  %v154 = vunpack.c.l.b16 %v41
  %v155 = vunpack.c.h.b16 %v41
  %v156 = vunpack.c.l.b16 %v42
  %v157 = vunpack.c.l.b16 %v43
  %v158 = vunpack.c.h.b16 %v43
  %v159 = vunpack.c.l.b16 %v44
  %v160 = vunpack.c.l.b16 %v45
  %v161 = vunpack.c.h.b16 %v45
  %v162 = vunpack.c.l.b16 %v46
  %v163 = vpack.c.b16 %v118, %v115
  %v164 = vpack.c.b16 %v119, %v116
  %v165 = vpack.c.b16 %v120, %v117
  %v166 = vpack.c.b16 %v124, %v121
  %v167 = vpack.c.b16 %v125, %v122
  %v168 = vpack.c.b16 %v126, %v123
  %v169 = vpack.c.b16 %v130, %v127
  %v170 = vpack.c.b16 %v131, %v128
  %v171 = vpack.c.b16 %v132, %v129
  %v172 = vpack.c.b16 %v136, %v133
  %v173 = vpack.c.b16 %v137, %v134
  %v174 = vpack.c.b16 %v138, %v135
  %v175 = vpack.c.b16 %v142, %v139
  %v176 = vpack.c.b16 %v143, %v140
  %v177 = vpack.c.b16 %v144, %v141
  %v178 = vpack.c.b16 %v148, %v145
  %v179 = vpack.c.b16 %v149, %v146
  %v180 = vpack.c.b16 %v150, %v147
  %v181 = vpack.c.b16 %v154, %v151
  %v182 = vpack.c.b16 %v155, %v152
  %v183 = vpack.c.b16 %v156, %v153
  %v184 = vpack.c.b16 %v160, %v157
  %v185 = vpack.c.b16 %v161, %v158
  %v186 = vpack.c.b16 %v162, %v159
  %v239 = vunpack.c.l.b16 %v47
  %v240 = vunpack.c.l.b16 %v48
  %v241 = vunpack.c.l.b16 %v49
  %v242 = vunpack.c.l.b16 %v50
  %v243 = vunpack.c.l.b16 %v51
  %v244 = vunpack.c.l.b16 %v52
  %v245 = vunpack.c.l.b16 %v53
  %v246 = vunpack.c.l.b16 %v54
  %v247 = vunpack.c.l.b16 %v55
  %v248 = vunpack.c.l.b16 %v56
  %v249 = vunpack.c.l.b16 %v57
  %v250 = vunpack.c.l.b16 %v58
  %v251 = vunpack.c.l.b16 %v59
  %v252 = vunpack.c.l.b16 %v60
  %v253 = vunpack.c.l.b16 %v61
  %v254 = vunpack.c.l.b16 %v62
  %v255 = vunpack.c.l.b16 %v63
  %v256 = vunpack.c.l.b16 %v64
  %v257 = vunpack.c.l.b16 %v65
  %v258 = vunpack.c.l.b16 %v66
  %v259 = vunpack.c.l.b16 %v67
  %v260 = vunpack.c.l.b16 %v68
  %v261 = vunpack.c.l.b16 %v69
  %v262 = vunpack.c.l.b16 %v70
  %v263 = vunpack.c.l.b16 %v71
  %v264 = vunpack.c.l.b16 %v72
  %v265 = vunpack.c.l.b16 %v73
  %v266 = vunpack.c.l.b16 %v74
  %v267 = vunpack.c.l.b16 %v75
  %v268 = vunpack.c.l.b16 %v76
  %v269 = vunpack.c.l.b16 %v77
  %v270 = vunpack.c.l.b16 %v78
  %v271 = vunpack.c.l.b16 %v79
  %v272 = vunpack.c.l.b16 %v80
  %v273 = vunpack.c.l.b16 %v81
  %v274 = vunpack.c.l.b16 %v82
  %v275 = vpack.c.b16 %v240, %v239
  %v276 = vpack.c.b16 %v242, %v241
  %v277 = vpack.c.b16 %v244, %v243
  %v278 = vpack.c.b16 %v246, %v245
  %v279 = vpack.c.b16 %v248, %v247
  %v280 = vpack.c.b16 %v250, %v249
  %v281 = vpack.c.b16 %v252, %v251
  %v282 = vpack.c.b16 %v254, %v253
  %v283 = vpack.c.b16 %v256, %v255
  %v284 = vpack.c.b16 %v258, %v257
  %v285 = vpack.c.b16 %v260, %v259
  %v286 = vpack.c.b16 %v262, %v261
  %v287 = vpack.c.b16 %v264, %v263
  %v288 = vpack.c.b16 %v266, %v265
  %v289 = vpack.c.b16 %v268, %v267
  %v290 = vpack.c.b16 %v270, %v269
  %v291 = vpack.c.b16 %v272, %v271
  %v292 = vpack.c.b16 %v274, %v273
  %vm311 = vcmask 261120
  %v313 = vsel %vm311, %v165, 0
  %v316 = vsel %vm311, %v168, 0
  %v319 = vsel %vm311, %v171, 0
  %v322 = vsel %vm311, %v174, 0
  %v325 = vsel %vm311, %v177, 0
  %v328 = vsel %vm311, %v180, 0
  %v331 = vsel %vm311, %v183, 0
  %v334 = vsel %vm311, %v186, 0
  %336 = vmatprep.subr.bf16.mxu0 0
  %337 = vmatpush1.bf16.msra.mxu0 %v282
  %338 = vmatprep.subr.bf16.mxu0 0
  %339 = vmatpush1.bf16.msra.mxu0 %v281
  %340 = vmatprep.subr.bf16.mxu0 0
  %341 = vmatpush1.bf16.msra.mxu0 %v280
  %342 = vmatprep.subr.bf16.mxu0 0
  %343 = vmatpush1.bf16.msra.mxu0 %v279
  %344 = vmatprep.subr.bf16.mxu0 0
  %345 = vmatpush1.bf16.msra.mxu0 %v278
  %346 = vmatprep.subr.bf16.mxu0 0
  %347 = vmatpush1.bf16.msra.mxu0 %v277
  %348 = vmatprep.subr.bf16.mxu0 0
  %349 = vmatpush1.bf16.msra.mxu0 %v276
  %350 = vmatprep.subr.bf16.mxu0 0
  %351 = vmatpush1.bf16.msra.mxu0 %v275
  %352 = vmatprep.subr.bf16.mxu0 0
  %353 = vmatpush2.bf16.msra.mxu0 %v290
  %354 = vmatprep.subr.bf16.mxu0 0
  %355 = vmatpush2.bf16.msra.mxu0 %v289
  %356 = vmatprep.subr.bf16.mxu0 0
  %357 = vmatpush2.bf16.msra.mxu0 %v288
  %358 = vmatprep.subr.bf16.mxu0 0
  %359 = vmatpush2.bf16.msra.mxu0 %v287
  %360 = vmatprep.subr.bf16.mxu0 0
  %361 = vmatpush2.bf16.msra.mxu0 %v286
  %362 = vmatprep.subr.bf16.mxu0 0
  %363 = vmatpush2.bf16.msra.mxu0 %v285
  %364 = vmatprep.subr.bf16.mxu0 0
  %365 = vmatpush2.bf16.msra.mxu0 %v284
  %366 = vmatprep.subr.bf16.mxu0 0
  %367 = vmatpush2.bf16.msra.mxu0 %v283
  %368 = vmatprep.mubr.bf16.mxu0 %v164
  %369 = vmatmul.mubr.bf16.gmra.mxu0 %v163
  %v370 = vpop.f32.mrf.mxu0
  %v371 = vadd.f32 0.0, %v370
  %v372 = vpop.f32.mrf.mxu0
  %v373 = vpop.f32.mrf.mxu0
  %v374 = vadd.f32 0.0, %v373
  %v375 = vpop.f32.mrf.mxu0
  %376 = vmatprep.mubr.bf16.mxu0 %v167
  %377 = vmatmul.mubr.bf16.gmra.mxu0 %v166
  %v378 = vpop.f32.mrf.mxu0
  %v379 = vadd.f32 0.0, %v378
  %v380 = vpop.f32.mrf.mxu0
  %v381 = vpop.f32.mrf.mxu0
  %v382 = vadd.f32 0.0, %v381
  %v383 = vpop.f32.mrf.mxu0
  %384 = vmatprep.mubr.bf16.mxu0 %v170
  %385 = vmatmul.mubr.bf16.gmra.mxu0 %v169
  %v386 = vpop.f32.mrf.mxu0
  %v387 = vadd.f32 0.0, %v386
  %v388 = vpop.f32.mrf.mxu0
  %v389 = vpop.f32.mrf.mxu0
  %v390 = vadd.f32 0.0, %v389
  %v391 = vpop.f32.mrf.mxu0
  %392 = vmatprep.mubr.bf16.mxu0 %v173
  %393 = vmatmul.mubr.bf16.gmra.mxu0 %v172
  %v394 = vpop.f32.mrf.mxu0
  %v395 = vadd.f32 0.0, %v394
  %v396 = vpop.f32.mrf.mxu0
  %v397 = vpop.f32.mrf.mxu0
  %v398 = vadd.f32 0.0, %v397
  %v399 = vpop.f32.mrf.mxu0
  %400 = vmatprep.mubr.bf16.mxu0 %v176
  %401 = vmatmul.mubr.bf16.gmra.mxu0 %v175
  %v402 = vpop.f32.mrf.mxu0
  %v403 = vadd.f32 0.0, %v402
  %v404 = vpop.f32.mrf.mxu0
  %v405 = vpop.f32.mrf.mxu0
  %v406 = vadd.f32 0.0, %v405
  %v407 = vpop.f32.mrf.mxu0
  %408 = vmatprep.mubr.bf16.mxu0 %v179
  %409 = vmatmul.mubr.bf16.gmra.mxu0 %v178
  %v410 = vpop.f32.mrf.mxu0
  %v411 = vadd.f32 0.0, %v410
  %v412 = vpop.f32.mrf.mxu0
  %v413 = vpop.f32.mrf.mxu0
  %v414 = vadd.f32 0.0, %v413
  %v415 = vpop.f32.mrf.mxu0
  %416 = vmatprep.mubr.bf16.mxu0 %v182
  %417 = vmatmul.mubr.bf16.gmra.mxu0 %v181
  %v418 = vpop.f32.mrf.mxu0
  %v419 = vadd.f32 0.0, %v418
  %v420 = vpop.f32.mrf.mxu0
  %v421 = vpop.f32.mrf.mxu0
  %v422 = vadd.f32 0.0, %v421
  %v423 = vpop.f32.mrf.mxu0
  %424 = vmatprep.mubr.bf16.mxu0 %v185
  %425 = vmatmul.mubr.bf16.gmra.mxu0 %v184
  %v426 = vpop.f32.mrf.mxu0
  %v427 = vadd.f32 0.0, %v426
  %v428 = vpop.f32.mrf.mxu0
  %v429 = vpop.f32.mrf.mxu0
  %v430 = vadd.f32 0.0, %v429
  %v431 = vpop.f32.mrf.mxu0
  %432 = vdwg.mxu0
  %433 = vmatprep.subr.bf16.mxu0 0
  %434 = vmatpush1.bf16.msra.mxu0 0
  %435 = vmatprep.subr.bf16.mxu0 0
  %436 = vmatpush1.bf16.msra.mxu0 0
  %437 = vmatprep.subr.bf16.mxu0 0
  %438 = vmatpush1.bf16.msra.mxu0 0
  %439 = vmatprep.subr.bf16.mxu0 0
  %440 = vmatpush1.bf16.msra.mxu0 0
  %441 = vmatprep.subr.bf16.mxu0 0
  %442 = vmatpush1.bf16.msra.mxu0 0
  %443 = vmatprep.subr.bf16.mxu0 0
  %444 = vmatpush1.bf16.msra.mxu0 0
  %445 = vmatprep.subr.bf16.mxu0 0
  %446 = vmatpush1.bf16.msra.mxu0 %v292
  %447 = vmatprep.subr.bf16.mxu0 0
  %448 = vmatpush1.bf16.msra.mxu0 %v291
  %449 = vmatprep.subr.bf16.mxu0 0
  %450 = vmatpush2.bf16.msra.mxu0 0
  %451 = vmatprep.subr.bf16.mxu0 0
  %452 = vmatpush2.bf16.msra.mxu0 0
  %453 = vmatprep.subr.bf16.mxu0 0
  %454 = vmatpush2.bf16.msra.mxu0 0
  %455 = vmatprep.subr.bf16.mxu0 0
  %456 = vmatpush2.bf16.msra.mxu0 0
  %457 = vmatprep.subr.bf16.mxu0 0
  %458 = vmatpush2.bf16.msra.mxu0 0
  %459 = vmatprep.subr.bf16.mxu0 0
  %460 = vmatpush2.bf16.msra.mxu0 0
  %461 = vmatprep.subr.bf16.mxu0 0
  %462 = vmatpush2.bf16.msra.mxu0 0
  %463 = vmatprep.subr.bf16.mxu0 0
  %464 = vmatpush2.bf16.msra.mxu0 0
  %465 = vmatprep.mubr.bf16.mxu0 0
  %466 = vmatmul.mubr.bf16.gmra.mxu0 %v313
  %v467 = vpop.f32.mrf.mxu0
  %v468 = vadd.f32 %v371, %v467
  %v469 = vpop.f32.mrf.mxu0
  %v470 = vpop.f32.mrf.mxu0
  %v471 = vadd.f32 %v374, %v470
  %v472 = vpop.f32.mrf.mxu0
  %473 = vmatprep.mubr.bf16.mxu0 0
  %474 = vmatmul.mubr.bf16.gmra.mxu0 %v316
  %v475 = vpop.f32.mrf.mxu0
  %v476 = vadd.f32 %v379, %v475
  %v477 = vpop.f32.mrf.mxu0
  %v478 = vpop.f32.mrf.mxu0
  %v479 = vadd.f32 %v382, %v478
  %v480 = vpop.f32.mrf.mxu0
  %481 = vmatprep.mubr.bf16.mxu0 0
  %482 = vmatmul.mubr.bf16.gmra.mxu0 %v319
  %v483 = vpop.f32.mrf.mxu0
  %v484 = vadd.f32 %v387, %v483
  %v485 = vpop.f32.mrf.mxu0
  %v486 = vpop.f32.mrf.mxu0
  %v487 = vadd.f32 %v390, %v486
  %v488 = vpop.f32.mrf.mxu0
  %489 = vmatprep.mubr.bf16.mxu0 0
  %490 = vmatmul.mubr.bf16.gmra.mxu0 %v322
  %v491 = vpop.f32.mrf.mxu0
  %v492 = vadd.f32 %v395, %v491
  %v493 = vpop.f32.mrf.mxu0
  %v494 = vpop.f32.mrf.mxu0
  %v495 = vadd.f32 %v398, %v494
  %v496 = vpop.f32.mrf.mxu0
  %497 = vmatprep.mubr.bf16.mxu0 0
  %498 = vmatmul.mubr.bf16.gmra.mxu0 %v325
  %v499 = vpop.f32.mrf.mxu0
  %v500 = vadd.f32 %v403, %v499
  %v501 = vpop.f32.mrf.mxu0
  %v502 = vpop.f32.mrf.mxu0
  %v503 = vadd.f32 %v406, %v502
  %v504 = vpop.f32.mrf.mxu0
  %505 = vmatprep.mubr.bf16.mxu0 0
  %506 = vmatmul.mubr.bf16.gmra.mxu0 %v328
  %v507 = vpop.f32.mrf.mxu0
  %v508 = vadd.f32 %v411, %v507
  %v509 = vpop.f32.mrf.mxu0
  %v510 = vpop.f32.mrf.mxu0
  %v511 = vadd.f32 %v414, %v510
  %v512 = vpop.f32.mrf.mxu0
  %513 = vmatprep.mubr.bf16.mxu0 0
  %514 = vmatmul.mubr.bf16.gmra.mxu0 %v331
  %v515 = vpop.f32.mrf.mxu0
  %v516 = vadd.f32 %v419, %v515
  %v517 = vpop.f32.mrf.mxu0
  %v518 = vpop.f32.mrf.mxu0
  %v519 = vadd.f32 %v422, %v518
  %v520 = vpop.f32.mrf.mxu0
  %521 = vmatprep.mubr.bf16.mxu0 0
  %522 = vmatmul.mubr.bf16.gmra.mxu0 %v334
  %v523 = vpop.f32.mrf.mxu0
  %v524 = vadd.f32 %v427, %v523
  %v525 = vpop.f32.mrf.mxu0
  %v526 = vpop.f32.mrf.mxu0
  %v527 = vadd.f32 %v430, %v526
  %v528 = vpop.f32.mrf.mxu0
  %529 = vdwg.mxu0
  %v530 = vmax.f32 %v468, %v484
  %v531 = vmax.f32 %v471, %v487
  %v532 = vmax.f32 %v476, %v492
  %v533 = vmax.f32 %v479, %v495
  %v534 = vmax.f32 %v500, %v516
  %v535 = vmax.f32 %v503, %v519
  %v536 = vmax.f32 %v508, %v524
  %v537 = vmax.f32 %v511, %v527
  %v538 = vmax.f32 %v530, %v534
  %v539 = vmax.f32 %v531, %v535
  %v540 = vmax.f32 %v532, %v536
  %v541 = vmax.f32 %v533, %v537
  %v542 = vld [vmem:[%s2] sm:$0x1]
  %v544 = vlaneseq
  %v545 = vshrl.u32 %v544, 7
  %v546 = vsub.s32 0, %v545
  %v547 = vrot.slane %v542, %v546
  %v549 = vadd.f32 %v538, %v547
  %v550 = vadd.f32 %v539, %v547
  %v551 = vadd.f32 %v540, %v547
  %v552 = vadd.f32 %v541, %v547
  %v553 = vmax.f32 %v549, 0.0
  %v554 = vmax.f32 %v550, 0.0
  %v555 = vmax.f32 %v551, 0.0
  %v556 = vmax.f32 %v552, 0.0
  %v557 = vpack.c.bf16 %v554, %v553
  %v558 = vpack.c.bf16 %v556, %v555
  %v561 = vunpack.c.l.b16 %v557
  %v562 = vunpack.c.h.b16 %v557
  %v563 = vunpack.c.l.b16 %v558
  %v564 = vunpack.c.h.b16 %v558
  %v565 = vpack.c.b16 %v561, %v561
  %v566 = vpack.c.b16 %v562, %v562
  %v567 = vpack.c.b16 %v563, %v563
  %v568 = vpack.c.b16 %v564, %v564
  %573 = vst [vmem:[%s3] sm:$0xf] %v565
  %574 = vst [vmem:[%s3 + $0x4] sm:$0xf] %v566
  %575 = vst [vmem:[%s3 + $0x8] sm:$0xf] %v567
  %576 = vst [vmem:[%s3 + $0xc] sm:$0xf] %v568
  // Predicated region
  $region14: #{plantnet_forward.4} parent=0 // pred_check
    _
  $region15: #{plantnet_forward.4} parent=0 // pred_check_branch
    %578 = sbr.rel (0) target = $region17
  $region16: #{plantnet_forward.4} parent=0 // pred_region
    _
  $region17: #{plantnet_forward.4} parent=0 // pred_fallthru
    _
  // Predicated region
  $region18: #{plantnet_forward.4} parent=0 // pred_check
    _
  $region19: #{plantnet_forward.4} parent=0 // pred_check_branch
    %580 = sbr.rel (0) target = $region21
  $region20: #{plantnet_forward.4} parent=0 // pred_region
    _
  $region21: #{plantnet_forward.4} parent=0 // pred_fallthru
    _

// kernel: plantnet_forward.5
$region0: #{plantnet_forward.5}
  #allocation0 [shape = 'u32[]', space=smem, size = 0x4, offset = 0x4, fixed_abs, tag = 'smem constant byte address 0x4 - core index']
  #allocation1 [shape = 'u32[144,128]{1,0:T(1,128)}', space=vmem, size = 0x12000, scoped, tag = 'internal scratch']
  #allocation2 [shape = 'f32[8,512]{1,0:T(8,128)}', space=vmem, size = 0x4000, scoped, tag = 'scratch operand']
  %s0 = inlined_call_operand.vmem [shape: bf16[8,2048], index: 0, kind: input, shape index: {}]
  %s1 = inlined_call_operand.vmem [shape: bf16[2048,512], index: 1, kind: input, shape index: {}]
  %s2 = inlined_call_operand.vmem [shape: f32[1,512], index: 2, kind: input, shape index: {}]
  %s3 = inlined_call_operand.vmem [shape: bf16[512,128], index: 3, kind: input, shape index: {}]
  %s4 = inlined_call_operand.vmem [shape: f32[1,128], index: 4, kind: input, shape index: {}]
  %s5 = inlined_call_operand.vmem [shape: f32[8,128], index: 5, kind: output, shape index: {}]
  %s6 = sld [smem:[#allocation0]]
  $region38: #{plantnet_forward.5} parent=0
    _
  %s8 = ssub.s32 1, %s6
  %s9 = scalar_select 0, %s8, %s6
  // Predicated region
  $region2: #{plantnet_forward.5} parent=0 // pred_check
    _
  $region3: #{plantnet_forward.5} parent=0 // pred_check_branch
    %11 = sbr.rel (0) target = $region5
  $region4: #{plantnet_forward.5} parent=0 // pred_region
    _
  $region5: #{plantnet_forward.5} parent=0 // pred_fallthru
    _
  // Predicated region
  $region6: #{plantnet_forward.5} parent=0 // pred_check
    _
  $region7: #{plantnet_forward.5} parent=0 // pred_check_branch
    %13 = sbr.rel (0) target = $region9
  $region8: #{plantnet_forward.5} parent=0 // pred_region
    _
  $region9: #{plantnet_forward.5} parent=0 // pred_fallthru
    _
  // Predicated region
  $region10: #{plantnet_forward.5} parent=0 // pred_check
    _
  $region11: #{plantnet_forward.5} parent=0 // pred_check_branch
    %15 = sbr.rel (0) target = $region13
  $region12: #{plantnet_forward.5} parent=0 // pred_region
    _
  $region13: #{plantnet_forward.5} parent=0 // pred_fallthru
    _
  // Predicated region
  $region14: #{plantnet_forward.5} parent=0 // pred_check
    _
  $region15: #{plantnet_forward.5} parent=0 // pred_check_branch
    %17 = sbr.rel (0) target = $region17
  $region16: #{plantnet_forward.5} parent=0 // pred_region
    _
  $region17: #{plantnet_forward.5} parent=0 // pred_fallthru
    _
  // Predicated region
  $region18: #{plantnet_forward.5} parent=0 // pred_check
    _
  $region19: #{plantnet_forward.5} parent=0 // pred_check_branch
    %19 = sbr.rel (0) target = $region21
  $region20: #{plantnet_forward.5} parent=0 // pred_region
    _
  $region21: #{plantnet_forward.5} parent=0 // pred_fallthru
    _
  %p21 = scmp.eq.s32.totalorder 0, 0
  // Predicated region
  $region22: #{plantnet_forward.5} parent=0 // pred_check
    %p22 = pneg %p21
  $region23: #{plantnet_forward.5} parent=0 // pred_check_branch
    %24 = sbr.rel (%p22) target = $region25
  $region24: #{plantnet_forward.5} parent=0 // pred_region
    %25 = vst [vmem:[#allocation2] sm:$0xff] 0.0
    %26 = vst [vmem:[#allocation2 + $0x8] sm:$0xff] 0.0
    %27 = vst [vmem:[#allocation2 + $0x10] sm:$0xff] 0.0
    %28 = vst [vmem:[#allocation2 + $0x18] sm:$0xff] 0.0
  $region25: #{plantnet_forward.5} parent=0 // pred_fallthru
    _
  %v29 = vld [vmem:[#allocation2] sm:$0xff]
  %v30 = vld [vmem:[#allocation2 + $0x8] sm:$0xff]
  %v31 = vld [vmem:[#allocation2 + $0x10] sm:$0xff]
  %v32 = vld [vmem:[#allocation2 + $0x18] sm:$0xff]
  %v33 = vld [vmem:[%s0] sm:$0xff]
  %v34 = vld [vmem:[%s0 + $0x8] sm:$0xff]
  %v35 = vld [vmem:[%s0 + $0x10] sm:$0xff]
  %v36 = vld [vmem:[%s0 + $0x18] sm:$0xff]
  %v37 = vld [vmem:[%s0 + $0x20] sm:$0xff]
  %v38 = vld [vmem:[%s0 + $0x28] sm:$0xff]
  %v39 = vld [vmem:[%s0 + $0x30] sm:$0xff]
  %v40 = vld [vmem:[%s0 + $0x38] sm:$0xff]
  %v41 = vld [vmem:[%s1] sm:$0xff]
  %v42 = vld [vmem:[%s1 + $0x8] sm:$0xff]
  %v43 = vld [vmem:[%s1 + $0x10] sm:$0xff]
  %v44 = vld [vmem:[%s1 + $0x18] sm:$0xff]
  %v45 = vld [vmem:[%s1 + $0x20] sm:$0xff]
  %v46 = vld [vmem:[%s1 + $0x28] sm:$0xff]
  %v47 = vld [vmem:[%s1 + $0x30] sm:$0xff]
  %v48 = vld [vmem:[%s1 + $0x38] sm:$0xff]
  %v49 = vld [vmem:[%s1 + $0x40] sm:$0xff]
  %v50 = vld [vmem:[%s1 + $0x48] sm:$0xff]
  %v51 = vld [vmem:[%s1 + $0x50] sm:$0xff]
  %v52 = vld [vmem:[%s1 + $0x58] sm:$0xff]
  %v53 = vld [vmem:[%s1 + $0x60] sm:$0xff]
  %v54 = vld [vmem:[%s1 + $0x68] sm:$0xff]
  %v55 = vld [vmem:[%s1 + $0x70] sm:$0xff]
  %v56 = vld [vmem:[%s1 + $0x78] sm:$0xff]
  %v57 = vld [vmem:[%s1 + $0x80] sm:$0xff]
  %v58 = vld [vmem:[%s1 + $0x88] sm:$0xff]
  %v59 = vld [vmem:[%s1 + $0x90] sm:$0xff]
  %v60 = vld [vmem:[%s1 + $0x98] sm:$0xff]
  %v61 = vld [vmem:[%s1 + $0xa0] sm:$0xff]
  %v62 = vld [vmem:[%s1 + $0xa8] sm:$0xff]
  %v63 = vld [vmem:[%s1 + $0xb0] sm:$0xff]
  %v64 = vld [vmem:[%s1 + $0xb8] sm:$0xff]
  %v65 = vld [vmem:[%s1 + $0xc0] sm:$0xff]
  %v66 = vld [vmem:[%s1 + $0xc8] sm:$0xff]
  %v67 = vld [vmem:[%s1 + $0xd0] sm:$0xff]
  %v68 = vld [vmem:[%s1 + $0xd8] sm:$0xff]
  %v69 = vld [vmem:[%s1 + $0xe0] sm:$0xff]
  %v70 = vld [vmem:[%s1 + $0xe8] sm:$0xff]
  %v71 = vld [vmem:[%s1 + $0xf0] sm:$0xff]
  %v72 = vld [vmem:[%s1 + $0xf8] sm:$0xff]
  %v73 = vld [vmem:[%s1 + $0x100] sm:$0xff]
  %v74 = vld [vmem:[%s1 + $0x108] sm:$0xff]
  %v75 = vld [vmem:[%s1 + $0x110] sm:$0xff]
  %v76 = vld [vmem:[%s1 + $0x118] sm:$0xff]
  %v77 = vld [vmem:[%s1 + $0x120] sm:$0xff]
  %v78 = vld [vmem:[%s1 + $0x128] sm:$0xff]
  %v79 = vld [vmem:[%s1 + $0x130] sm:$0xff]
  %v80 = vld [vmem:[%s1 + $0x138] sm:$0xff]
  %v81 = vld [vmem:[%s1 + $0x140] sm:$0xff]
  %v82 = vld [vmem:[%s1 + $0x148] sm:$0xff]
  %v83 = vld [vmem:[%s1 + $0x150] sm:$0xff]
  %v84 = vld [vmem:[%s1 + $0x158] sm:$0xff]
  %v85 = vld [vmem:[%s1 + $0x160] sm:$0xff]
  %v86 = vld [vmem:[%s1 + $0x168] sm:$0xff]
  %v87 = vld [vmem:[%s1 + $0x170] sm:$0xff]
  %v88 = vld [vmem:[%s1 + $0x178] sm:$0xff]
  %v89 = vld [vmem:[%s1 + $0x180] sm:$0xff]
  %v90 = vld [vmem:[%s1 + $0x188] sm:$0xff]
  %v91 = vld [vmem:[%s1 + $0x190] sm:$0xff]
  %v92 = vld [vmem:[%s1 + $0x198] sm:$0xff]
  %v93 = vld [vmem:[%s1 + $0x1a0] sm:$0xff]
  %v94 = vld [vmem:[%s1 + $0x1a8] sm:$0xff]
  %v95 = vld [vmem:[%s1 + $0x1b0] sm:$0xff]
  %v96 = vld [vmem:[%s1 + $0x1b8] sm:$0xff]
  %v97 = vld [vmem:[%s1 + $0x1c0] sm:$0xff]
  %v98 = vld [vmem:[%s1 + $0x1c8] sm:$0xff]
  %v99 = vld [vmem:[%s1 + $0x1d0] sm:$0xff]
  %v100 = vld [vmem:[%s1 + $0x1d8] sm:$0xff]
  %v101 = vld [vmem:[%s1 + $0x1e0] sm:$0xff]
  %v102 = vld [vmem:[%s1 + $0x1e8] sm:$0xff]
  %v103 = vld [vmem:[%s1 + $0x1f0] sm:$0xff]
  %v104 = vld [vmem:[%s1 + $0x1f8] sm:$0xff]
  %v105 = vld [vmem:[%s1 + $0x200] sm:$0xff]
  %v106 = vld [vmem:[%s1 + $0x208] sm:$0xff]
  %v107 = vld [vmem:[%s1 + $0x210] sm:$0xff]
  %v108 = vld [vmem:[%s1 + $0x218] sm:$0xff]
  %v109 = vld [vmem:[%s1 + $0x220] sm:$0xff]
  %v110 = vld [vmem:[%s1 + $0x228] sm:$0xff]
  %v111 = vld [vmem:[%s1 + $0x230] sm:$0xff]
  %v112 = vld [vmem:[%s1 + $0x238] sm:$0xff]
  %v113 = vld [vmem:[%s1 + $0x240] sm:$0xff]
  %v114 = vld [vmem:[%s1 + $0x248] sm:$0xff]
  %v115 = vld [vmem:[%s1 + $0x250] sm:$0xff]
  %v116 = vld [vmem:[%s1 + $0x258] sm:$0xff]
  %v117 = vld [vmem:[%s1 + $0x260] sm:$0xff]
  %v118 = vld [vmem:[%s1 + $0x268] sm:$0xff]
  %v119 = vld [vmem:[%s1 + $0x270] sm:$0xff]
  %v120 = vld [vmem:[%s1 + $0x278] sm:$0xff]
  %v121 = vld [vmem:[%s1 + $0x280] sm:$0xff]
  %v122 = vld [vmem:[%s1 + $0x288] sm:$0xff]
  %v123 = vld [vmem:[%s1 + $0x290] sm:$0xff]
  %v124 = vld [vmem:[%s1 + $0x298] sm:$0xff]
  %v125 = vld [vmem:[%s1 + $0x2a0] sm:$0xff]
  %v126 = vld [vmem:[%s1 + $0x2a8] sm:$0xff]
  %v127 = vld [vmem:[%s1 + $0x2b0] sm:$0xff]
  %v128 = vld [vmem:[%s1 + $0x2b8] sm:$0xff]
  %v129 = vld [vmem:[%s1 + $0x2c0] sm:$0xff]
  %v130 = vld [vmem:[%s1 + $0x2c8] sm:$0xff]
  %v131 = vld [vmem:[%s1 + $0x2d0] sm:$0xff]
  %v132 = vld [vmem:[%s1 + $0x2d8] sm:$0xff]
  %v133 = vld [vmem:[%s1 + $0x2e0] sm:$0xff]
  %v134 = vld [vmem:[%s1 + $0x2e8] sm:$0xff]
  %v135 = vld [vmem:[%s1 + $0x2f0] sm:$0xff]
  %v136 = vld [vmem:[%s1 + $0x2f8] sm:$0xff]
  %v137 = vld [vmem:[%s1 + $0x300] sm:$0xff]
  %v138 = vld [vmem:[%s1 + $0x308] sm:$0xff]
  %v139 = vld [vmem:[%s1 + $0x310] sm:$0xff]
  %v140 = vld [vmem:[%s1 + $0x318] sm:$0xff]
  %v141 = vld [vmem:[%s1 + $0x320] sm:$0xff]
  %v142 = vld [vmem:[%s1 + $0x328] sm:$0xff]
  %v143 = vld [vmem:[%s1 + $0x330] sm:$0xff]
  %v144 = vld [vmem:[%s1 + $0x338] sm:$0xff]
  %v145 = vld [vmem:[%s1 + $0x340] sm:$0xff]
  %v146 = vld [vmem:[%s1 + $0x348] sm:$0xff]
  %v147 = vld [vmem:[%s1 + $0x350] sm:$0xff]
  %v148 = vld [vmem:[%s1 + $0x358] sm:$0xff]
  %v149 = vld [vmem:[%s1 + $0x360] sm:$0xff]
  %v150 = vld [vmem:[%s1 + $0x368] sm:$0xff]
  %v151 = vld [vmem:[%s1 + $0x370] sm:$0xff]
  %v152 = vld [vmem:[%s1 + $0x378] sm:$0xff]
  %v153 = vld [vmem:[%s1 + $0x380] sm:$0xff]
  %v154 = vld [vmem:[%s1 + $0x388] sm:$0xff]
  %v155 = vld [vmem:[%s1 + $0x390] sm:$0xff]
  %v156 = vld [vmem:[%s1 + $0x398] sm:$0xff]
  %v157 = vld [vmem:[%s1 + $0x3a0] sm:$0xff]
  %v158 = vld [vmem:[%s1 + $0x3a8] sm:$0xff]
  %v159 = vld [vmem:[%s1 + $0x3b0] sm:$0xff]
  %v160 = vld [vmem:[%s1 + $0x3b8] sm:$0xff]
  %v161 = vld [vmem:[%s1 + $0x3c0] sm:$0xff]
  %v162 = vld [vmem:[%s1 + $0x3c8] sm:$0xff]
  %v163 = vld [vmem:[%s1 + $0x3d0] sm:$0xff]
  %v164 = vld [vmem:[%s1 + $0x3d8] sm:$0xff]
  %v165 = vld [vmem:[%s1 + $0x3e0] sm:$0xff]
  %v166 = vld [vmem:[%s1 + $0x3e8] sm:$0xff]
  %v167 = vld [vmem:[%s1 + $0x3f0] sm:$0xff]
  %v168 = vld [vmem:[%s1 + $0x3f8] sm:$0xff]
  %v169 = vld [vmem:[%s1 + $0x400] sm:$0xff]
  %v170 = vld [vmem:[%s1 + $0x408] sm:$0xff]
  %v171 = vld [vmem:[%s1 + $0x410] sm:$0xff]
  %v172 = vld [vmem:[%s1 + $0x418] sm:$0xff]
  %v173 = vld [vmem:[%s1 + $0x420] sm:$0xff]
  %v174 = vld [vmem:[%s1 + $0x428] sm:$0xff]
  %v175 = vld [vmem:[%s1 + $0x430] sm:$0xff]
  %v176 = vld [vmem:[%s1 + $0x438] sm:$0xff]
  %v177 = vld [vmem:[%s1 + $0x440] sm:$0xff]
  %v178 = vld [vmem:[%s1 + $0x448] sm:$0xff]
  %v179 = vld [vmem:[%s1 + $0x450] sm:$0xff]
  %v180 = vld [vmem:[%s1 + $0x458] sm:$0xff]
  %v181 = vld [vmem:[%s1 + $0x460] sm:$0xff]
  %v182 = vld [vmem:[%s1 + $0x468] sm:$0xff]
  %v183 = vld [vmem:[%s1 + $0x470] sm:$0xff]
  %v184 = vld [vmem:[%s1 + $0x478] sm:$0xff]
  %v185 = vld [vmem:[%s1 + $0x480] sm:$0xff]
  %v186 = vld [vmem:[%s1 + $0x488] sm:$0xff]
  %v187 = vld [vmem:[%s1 + $0x490] sm:$0xff]
  %v188 = vld [vmem:[%s1 + $0x498] sm:$0xff]
  %v189 = vld [vmem:[%s1 + $0x4a0] sm:$0xff]
  %v190 = vld [vmem:[%s1 + $0x4a8] sm:$0xff]
  %v191 = vld [vmem:[%s1 + $0x4b0] sm:$0xff]
  %v192 = vld [vmem:[%s1 + $0x4b8] sm:$0xff]
  %v193 = vld [vmem:[%s1 + $0x4c0] sm:$0xff]
  %v194 = vld [vmem:[%s1 + $0x4c8] sm:$0xff]
  %v195 = vld [vmem:[%s1 + $0x4d0] sm:$0xff]
  %v196 = vld [vmem:[%s1 + $0x4d8] sm:$0xff]
  %v197 = vld [vmem:[%s1 + $0x4e0] sm:$0xff]
  %v198 = vld [vmem:[%s1 + $0x4e8] sm:$0xff]
  %v199 = vld [vmem:[%s1 + $0x4f0] sm:$0xff]
  %v200 = vld [vmem:[%s1 + $0x4f8] sm:$0xff]
  %v201 = vld [vmem:[%s1 + $0x500] sm:$0xff]
  %v202 = vld [vmem:[%s1 + $0x508] sm:$0xff]
  %v203 = vld [vmem:[%s1 + $0x510] sm:$0xff]
  %v204 = vld [vmem:[%s1 + $0x518] sm:$0xff]
  %v205 = vld [vmem:[%s1 + $0x520] sm:$0xff]
  %v206 = vld [vmem:[%s1 + $0x528] sm:$0xff]
  %v207 = vld [vmem:[%s1 + $0x530] sm:$0xff]
  %v208 = vld [vmem:[%s1 + $0x538] sm:$0xff]
  %v209 = vld [vmem:[%s1 + $0x540] sm:$0xff]
  %v210 = vld [vmem:[%s1 + $0x548] sm:$0xff]
  %v211 = vld [vmem:[%s1 + $0x550] sm:$0xff]
  %v212 = vld [vmem:[%s1 + $0x558] sm:$0xff]
  %v213 = vld [vmem:[%s1 + $0x560] sm:$0xff]
  %v214 = vld [vmem:[%s1 + $0x568] sm:$0xff]
  %v215 = vld [vmem:[%s1 + $0x570] sm:$0xff]
  %v216 = vld [vmem:[%s1 + $0x578] sm:$0xff]
  %v217 = vld [vmem:[%s1 + $0x580] sm:$0xff]
  %v218 = vld [vmem:[%s1 + $0x588] sm:$0xff]
  %v219 = vld [vmem:[%s1 + $0x590] sm:$0xff]
  %v220 = vld [vmem:[%s1 + $0x598] sm:$0xff]
  %v221 = vld [vmem:[%s1 + $0x5a0] sm:$0xff]
  %v222 = vld [vmem:[%s1 + $0x5a8] sm:$0xff]
  %v223 = vld [vmem:[%s1 + $0x5b0] sm:$0xff]
  %v224 = vld [vmem:[%s1 + $0x5b8] sm:$0xff]
  %v225 = vld [vmem:[%s1 + $0x5c0] sm:$0xff]
  %v226 = vld [vmem:[%s1 + $0x5c8] sm:$0xff]
  %v227 = vld [vmem:[%s1 + $0x5d0] sm:$0xff]
  %v228 = vld [vmem:[%s1 + $0x5d8] sm:$0xff]
  %v229 = vld [vmem:[%s1 + $0x5e0] sm:$0xff]
  %v230 = vld [vmem:[%s1 + $0x5e8] sm:$0xff]
  %v231 = vld [vmem:[%s1 + $0x5f0] sm:$0xff]
  %v232 = vld [vmem:[%s1 + $0x5f8] sm:$0xff]
  %v233 = vld [vmem:[%s1 + $0x600] sm:$0xff]
  %v234 = vld [vmem:[%s1 + $0x608] sm:$0xff]
  %v235 = vld [vmem:[%s1 + $0x610] sm:$0xff]
  %v236 = vld [vmem:[%s1 + $0x618] sm:$0xff]
  %v237 = vld [vmem:[%s1 + $0x620] sm:$0xff]
  %v238 = vld [vmem:[%s1 + $0x628] sm:$0xff]
  %v239 = vld [vmem:[%s1 + $0x630] sm:$0xff]
  %v240 = vld [vmem:[%s1 + $0x638] sm:$0xff]
  %v241 = vld [vmem:[%s1 + $0x640] sm:$0xff]
  %v242 = vld [vmem:[%s1 + $0x648] sm:$0xff]
  %v243 = vld [vmem:[%s1 + $0x650] sm:$0xff]
  %v244 = vld [vmem:[%s1 + $0x658] sm:$0xff]
  %v245 = vld [vmem:[%s1 + $0x660] sm:$0xff]
  %v246 = vld [vmem:[%s1 + $0x668] sm:$0xff]
  %v247 = vld [vmem:[%s1 + $0x670] sm:$0xff]
  %v248 = vld [vmem:[%s1 + $0x678] sm:$0xff]
  %v249 = vld [vmem:[%s1 + $0x680] sm:$0xff]
  %v250 = vld [vmem:[%s1 + $0x688] sm:$0xff]
  %v251 = vld [vmem:[%s1 + $0x690] sm:$0xff]
  %v252 = vld [vmem:[%s1 + $0x698] sm:$0xff]
  %v253 = vld [vmem:[%s1 + $0x6a0] sm:$0xff]
  %v254 = vld [vmem:[%s1 + $0x6a8] sm:$0xff]
  %v255 = vld [vmem:[%s1 + $0x6b0] sm:$0xff]
  %v256 = vld [vmem:[%s1 + $0x6b8] sm:$0xff]
  %v257 = vld [vmem:[%s1 + $0x6c0] sm:$0xff]
  %v258 = vld [vmem:[%s1 + $0x6c8] sm:$0xff]
  %v259 = vld [vmem:[%s1 + $0x6d0] sm:$0xff]
  %v260 = vld [vmem:[%s1 + $0x6d8] sm:$0xff]
  %v261 = vld [vmem:[%s1 + $0x6e0] sm:$0xff]
  %v262 = vld [vmem:[%s1 + $0x6e8] sm:$0xff]
  %v263 = vld [vmem:[%s1 + $0x6f0] sm:$0xff]
  %v264 = vld [vmem:[%s1 + $0x6f8] sm:$0xff]
  %v265 = vld [vmem:[%s1 + $0x700] sm:$0xff]
  %v266 = vld [vmem:[%s1 + $0x708] sm:$0xff]
  %v267 = vld [vmem:[%s1 + $0x710] sm:$0xff]
  %v268 = vld [vmem:[%s1 + $0x718] sm:$0xff]
  %v269 = vld [vmem:[%s1 + $0x720] sm:$0xff]
  %v270 = vld [vmem:[%s1 + $0x728] sm:$0xff]
  %v271 = vld [vmem:[%s1 + $0x730] sm:$0xff]
  %v272 = vld [vmem:[%s1 + $0x738] sm:$0xff]
  %v273 = vld [vmem:[%s1 + $0x740] sm:$0xff]
  %v274 = vld [vmem:[%s1 + $0x748] sm:$0xff]
  %v275 = vld [vmem:[%s1 + $0x750] sm:$0xff]
  %v276 = vld [vmem:[%s1 + $0x758] sm:$0xff]
  %v277 = vld [vmem:[%s1 + $0x760] sm:$0xff]
  %v278 = vld [vmem:[%s1 + $0x768] sm:$0xff]
  %v279 = vld [vmem:[%s1 + $0x770] sm:$0xff]
  %v280 = vld [vmem:[%s1 + $0x778] sm:$0xff]
  %v281 = vld [vmem:[%s1 + $0x780] sm:$0xff]
  %v282 = vld [vmem:[%s1 + $0x788] sm:$0xff]
  %v283 = vld [vmem:[%s1 + $0x790] sm:$0xff]
  %v284 = vld [vmem:[%s1 + $0x798] sm:$0xff]
  %v285 = vld [vmem:[%s1 + $0x7a0] sm:$0xff]
  %v286 = vld [vmem:[%s1 + $0x7a8] sm:$0xff]
  %v287 = vld [vmem:[%s1 + $0x7b0] sm:$0xff]
  %v288 = vld [vmem:[%s1 + $0x7b8] sm:$0xff]
  %v289 = vld [vmem:[%s1 + $0x7c0] sm:$0xff]
  %v290 = vld [vmem:[%s1 + $0x7c8] sm:$0xff]
  %v291 = vld [vmem:[%s1 + $0x7d0] sm:$0xff]
  %v292 = vld [vmem:[%s1 + $0x7d8] sm:$0xff]
  %v293 = vld [vmem:[%s1 + $0x7e0] sm:$0xff]
  %v294 = vld [vmem:[%s1 + $0x7e8] sm:$0xff]
  %v295 = vld [vmem:[%s1 + $0x7f0] sm:$0xff]
  %v296 = vld [vmem:[%s1 + $0x7f8] sm:$0xff]
  %v297 = vld [vmem:[%s1 + $0x800] sm:$0xff]
  %v298 = vld [vmem:[%s1 + $0x808] sm:$0xff]
  %v299 = vld [vmem:[%s1 + $0x810] sm:$0xff]
  %v300 = vld [vmem:[%s1 + $0x818] sm:$0xff]
  %v301 = vld [vmem:[%s1 + $0x820] sm:$0xff]
  %v302 = vld [vmem:[%s1 + $0x828] sm:$0xff]
  %v303 = vld [vmem:[%s1 + $0x830] sm:$0xff]
  %v304 = vld [vmem:[%s1 + $0x838] sm:$0xff]
  %v305 = vld [vmem:[%s1 + $0x840] sm:$0xff]
  %v306 = vld [vmem:[%s1 + $0x848] sm:$0xff]
  %v307 = vld [vmem:[%s1 + $0x850] sm:$0xff]
  %v308 = vld [vmem:[%s1 + $0x858] sm:$0xff]
  %v309 = vld [vmem:[%s1 + $0x860] sm:$0xff]
  %v310 = vld [vmem:[%s1 + $0x868] sm:$0xff]
  %v311 = vld [vmem:[%s1 + $0x870] sm:$0xff]
  %v312 = vld [vmem:[%s1 + $0x878] sm:$0xff]
  %v313 = vld [vmem:[%s1 + $0x880] sm:$0xff]
  %v314 = vld [vmem:[%s1 + $0x888] sm:$0xff]
  %v315 = vld [vmem:[%s1 + $0x890] sm:$0xff]
  %v316 = vld [vmem:[%s1 + $0x898] sm:$0xff]
  %v317 = vld [vmem:[%s1 + $0x8a0] sm:$0xff]
  %v318 = vld [vmem:[%s1 + $0x8a8] sm:$0xff]
  %v319 = vld [vmem:[%s1 + $0x8b0] sm:$0xff]
  %v320 = vld [vmem:[%s1 + $0x8b8] sm:$0xff]
  %v321 = vld [vmem:[%s1 + $0x8c0] sm:$0xff]
  %v322 = vld [vmem:[%s1 + $0x8c8] sm:$0xff]
  %v323 = vld [vmem:[%s1 + $0x8d0] sm:$0xff]
  %v324 = vld [vmem:[%s1 + $0x8d8] sm:$0xff]
  %v325 = vld [vmem:[%s1 + $0x8e0] sm:$0xff]
  %v326 = vld [vmem:[%s1 + $0x8e8] sm:$0xff]
  %v327 = vld [vmem:[%s1 + $0x8f0] sm:$0xff]
  %v328 = vld [vmem:[%s1 + $0x8f8] sm:$0xff]
  %v329 = vld [vmem:[%s1 + $0x900] sm:$0xff]
  %v330 = vld [vmem:[%s1 + $0x908] sm:$0xff]
  %v331 = vld [vmem:[%s1 + $0x910] sm:$0xff]
  %v332 = vld [vmem:[%s1 + $0x918] sm:$0xff]
  %v333 = vld [vmem:[%s1 + $0x920] sm:$0xff]
  %v334 = vld [vmem:[%s1 + $0x928] sm:$0xff]
  %v335 = vld [vmem:[%s1 + $0x930] sm:$0xff]
  %v336 = vld [vmem:[%s1 + $0x938] sm:$0xff]
  %v337 = vld [vmem:[%s1 + $0x940] sm:$0xff]
  %v338 = vld [vmem:[%s1 + $0x948] sm:$0xff]
  %v339 = vld [vmem:[%s1 + $0x950] sm:$0xff]
  %v340 = vld [vmem:[%s1 + $0x958] sm:$0xff]
  %v341 = vld [vmem:[%s1 + $0x960] sm:$0xff]
  %v342 = vld [vmem:[%s1 + $0x968] sm:$0xff]
  %v343 = vld [vmem:[%s1 + $0x970] sm:$0xff]
  %v344 = vld [vmem:[%s1 + $0x978] sm:$0xff]
  %v345 = vld [vmem:[%s1 + $0x980] sm:$0xff]
  %v346 = vld [vmem:[%s1 + $0x988] sm:$0xff]
  %v347 = vld [vmem:[%s1 + $0x990] sm:$0xff]
  %v348 = vld [vmem:[%s1 + $0x998] sm:$0xff]
  %v349 = vld [vmem:[%s1 + $0x9a0] sm:$0xff]
  %v350 = vld [vmem:[%s1 + $0x9a8] sm:$0xff]
  %v351 = vld [vmem:[%s1 + $0x9b0] sm:$0xff]
  %v352 = vld [vmem:[%s1 + $0x9b8] sm:$0xff]
  %v353 = vld [vmem:[%s1 + $0x9c0] sm:$0xff]
  %v354 = vld [vmem:[%s1 + $0x9c8] sm:$0xff]
  %v355 = vld [vmem:[%s1 + $0x9d0] sm:$0xff]
  %v356 = vld [vmem:[%s1 + $0x9d8] sm:$0xff]
  %v357 = vld [vmem:[%s1 + $0x9e0] sm:$0xff]
  %v358 = vld [vmem:[%s1 + $0x9e8] sm:$0xff]
  %v359 = vld [vmem:[%s1 + $0x9f0] sm:$0xff]
  %v360 = vld [vmem:[%s1 + $0x9f8] sm:$0xff]
  %v361 = vld [vmem:[%s1 + $0xa00] sm:$0xff]
  %v362 = vld [vmem:[%s1 + $0xa08] sm:$0xff]
  %v363 = vld [vmem:[%s1 + $0xa10] sm:$0xff]
  %v364 = vld [vmem:[%s1 + $0xa18] sm:$0xff]
  %v365 = vld [vmem:[%s1 + $0xa20] sm:$0xff]
  %v366 = vld [vmem:[%s1 + $0xa28] sm:$0xff]
  %v367 = vld [vmem:[%s1 + $0xa30] sm:$0xff]
  %v368 = vld [vmem:[%s1 + $0xa38] sm:$0xff]
  %v369 = vld [vmem:[%s1 + $0xa40] sm:$0xff]
  %v370 = vld [vmem:[%s1 + $0xa48] sm:$0xff]
  %v371 = vld [vmem:[%s1 + $0xa50] sm:$0xff]
  %v372 = vld [vmem:[%s1 + $0xa58] sm:$0xff]
  %v373 = vld [vmem:[%s1 + $0xa60] sm:$0xff]
  %v374 = vld [vmem:[%s1 + $0xa68] sm:$0xff]
  %v375 = vld [vmem:[%s1 + $0xa70] sm:$0xff]
  %v376 = vld [vmem:[%s1 + $0xa78] sm:$0xff]
  %v377 = vld [vmem:[%s1 + $0xa80] sm:$0xff]
  %v378 = vld [vmem:[%s1 + $0xa88] sm:$0xff]
  %v379 = vld [vmem:[%s1 + $0xa90] sm:$0xff]
  %v380 = vld [vmem:[%s1 + $0xa98] sm:$0xff]
  %v381 = vld [vmem:[%s1 + $0xaa0] sm:$0xff]
  %v382 = vld [vmem:[%s1 + $0xaa8] sm:$0xff]
  %v383 = vld [vmem:[%s1 + $0xab0] sm:$0xff]
  %v384 = vld [vmem:[%s1 + $0xab8] sm:$0xff]
  %v385 = vld [vmem:[%s1 + $0xac0] sm:$0xff]
  %v386 = vld [vmem:[%s1 + $0xac8] sm:$0xff]
  %v387 = vld [vmem:[%s1 + $0xad0] sm:$0xff]
  %v388 = vld [vmem:[%s1 + $0xad8] sm:$0xff]
  %v389 = vld [vmem:[%s1 + $0xae0] sm:$0xff]
  %v390 = vld [vmem:[%s1 + $0xae8] sm:$0xff]
  %v391 = vld [vmem:[%s1 + $0xaf0] sm:$0xff]
  %v392 = vld [vmem:[%s1 + $0xaf8] sm:$0xff]
  %v393 = vld [vmem:[%s1 + $0xb00] sm:$0xff]
  %v394 = vld [vmem:[%s1 + $0xb08] sm:$0xff]
  %v395 = vld [vmem:[%s1 + $0xb10] sm:$0xff]
  %v396 = vld [vmem:[%s1 + $0xb18] sm:$0xff]
  %v397 = vld [vmem:[%s1 + $0xb20] sm:$0xff]
  %v398 = vld [vmem:[%s1 + $0xb28] sm:$0xff]
  %v399 = vld [vmem:[%s1 + $0xb30] sm:$0xff]
  %v400 = vld [vmem:[%s1 + $0xb38] sm:$0xff]
  %v401 = vld [vmem:[%s1 + $0xb40] sm:$0xff]
  %v402 = vld [vmem:[%s1 + $0xb48] sm:$0xff]
  %v403 = vld [vmem:[%s1 + $0xb50] sm:$0xff]
  %v404 = vld [vmem:[%s1 + $0xb58] sm:$0xff]
  %v405 = vld [vmem:[%s1 + $0xb60] sm:$0xff]
  %v406 = vld [vmem:[%s1 + $0xb68] sm:$0xff]
  %v407 = vld [vmem:[%s1 + $0xb70] sm:$0xff]
  %v408 = vld [vmem:[%s1 + $0xb78] sm:$0xff]
  %v409 = vld [vmem:[%s1 + $0xb80] sm:$0xff]
  %v410 = vld [vmem:[%s1 + $0xb88] sm:$0xff]
  %v411 = vld [vmem:[%s1 + $0xb90] sm:$0xff]
  %v412 = vld [vmem:[%s1 + $0xb98] sm:$0xff]
  %v413 = vld [vmem:[%s1 + $0xba0] sm:$0xff]
  %v414 = vld [vmem:[%s1 + $0xba8] sm:$0xff]
  %v415 = vld [vmem:[%s1 + $0xbb0] sm:$0xff]
  %v416 = vld [vmem:[%s1 + $0xbb8] sm:$0xff]
  %v417 = vld [vmem:[%s1 + $0xbc0] sm:$0xff]
  %v418 = vld [vmem:[%s1 + $0xbc8] sm:$0xff]
  %v419 = vld [vmem:[%s1 + $0xbd0] sm:$0xff]
  %v420 = vld [vmem:[%s1 + $0xbd8] sm:$0xff]
  %v421 = vld [vmem:[%s1 + $0xbe0] sm:$0xff]
  %v422 = vld [vmem:[%s1 + $0xbe8] sm:$0xff]
  %v423 = vld [vmem:[%s1 + $0xbf0] sm:$0xff]
  %v424 = vld [vmem:[%s1 + $0xbf8] sm:$0xff]
  %v425 = vld [vmem:[%s1 + $0xc00] sm:$0xff]
  %v426 = vld [vmem:[%s1 + $0xc08] sm:$0xff]
  %v427 = vld [vmem:[%s1 + $0xc10] sm:$0xff]
  %v428 = vld [vmem:[%s1 + $0xc18] sm:$0xff]
  %v429 = vld [vmem:[%s1 + $0xc20] sm:$0xff]
  %v430 = vld [vmem:[%s1 + $0xc28] sm:$0xff]
  %v431 = vld [vmem:[%s1 + $0xc30] sm:$0xff]
  %v432 = vld [vmem:[%s1 + $0xc38] sm:$0xff]
  %v433 = vld [vmem:[%s1 + $0xc40] sm:$0xff]
  %v434 = vld [vmem:[%s1 + $0xc48] sm:$0xff]
  %v435 = vld [vmem:[%s1 + $0xc50] sm:$0xff]
  %v436 = vld [vmem:[%s1 + $0xc58] sm:$0xff]
  %v437 = vld [vmem:[%s1 + $0xc60] sm:$0xff]
  %v438 = vld [vmem:[%s1 + $0xc68] sm:$0xff]
  %v439 = vld [vmem:[%s1 + $0xc70] sm:$0xff]
  %v440 = vld [vmem:[%s1 + $0xc78] sm:$0xff]
  %v441 = vld [vmem:[%s1 + $0xc80] sm:$0xff]
  %v442 = vld [vmem:[%s1 + $0xc88] sm:$0xff]
  %v443 = vld [vmem:[%s1 + $0xc90] sm:$0xff]
  %v444 = vld [vmem:[%s1 + $0xc98] sm:$0xff]
  %v445 = vld [vmem:[%s1 + $0xca0] sm:$0xff]
  %v446 = vld [vmem:[%s1 + $0xca8] sm:$0xff]
  %v447 = vld [vmem:[%s1 + $0xcb0] sm:$0xff]
  %v448 = vld [vmem:[%s1 + $0xcb8] sm:$0xff]
  %v449 = vld [vmem:[%s1 + $0xcc0] sm:$0xff]
  %v450 = vld [vmem:[%s1 + $0xcc8] sm:$0xff]
  %v451 = vld [vmem:[%s1 + $0xcd0] sm:$0xff]
  %v452 = vld [vmem:[%s1 + $0xcd8] sm:$0xff]
  %v453 = vld [vmem:[%s1 + $0xce0] sm:$0xff]
  %v454 = vld [vmem:[%s1 + $0xce8] sm:$0xff]
  %v455 = vld [vmem:[%s1 + $0xcf0] sm:$0xff]
  %v456 = vld [vmem:[%s1 + $0xcf8] sm:$0xff]
  %v457 = vld [vmem:[%s1 + $0xd00] sm:$0xff]
  %v458 = vld [vmem:[%s1 + $0xd08] sm:$0xff]
  %v459 = vld [vmem:[%s1 + $0xd10] sm:$0xff]
  %v460 = vld [vmem:[%s1 + $0xd18] sm:$0xff]
  %v461 = vld [vmem:[%s1 + $0xd20] sm:$0xff]
  %v462 = vld [vmem:[%s1 + $0xd28] sm:$0xff]
  %v463 = vld [vmem:[%s1 + $0xd30] sm:$0xff]
  %v464 = vld [vmem:[%s1 + $0xd38] sm:$0xff]
  %v465 = vld [vmem:[%s1 + $0xd40] sm:$0xff]
  %v466 = vld [vmem:[%s1 + $0xd48] sm:$0xff]
  %v467 = vld [vmem:[%s1 + $0xd50] sm:$0xff]
  %v468 = vld [vmem:[%s1 + $0xd58] sm:$0xff]
  %v469 = vld [vmem:[%s1 + $0xd60] sm:$0xff]
  %v470 = vld [vmem:[%s1 + $0xd68] sm:$0xff]
  %v471 = vld [vmem:[%s1 + $0xd70] sm:$0xff]
  %v472 = vld [vmem:[%s1 + $0xd78] sm:$0xff]
  %v473 = vld [vmem:[%s1 + $0xd80] sm:$0xff]
  %v474 = vld [vmem:[%s1 + $0xd88] sm:$0xff]
  %v475 = vld [vmem:[%s1 + $0xd90] sm:$0xff]
  %v476 = vld [vmem:[%s1 + $0xd98] sm:$0xff]
  %v477 = vld [vmem:[%s1 + $0xda0] sm:$0xff]
  %v478 = vld [vmem:[%s1 + $0xda8] sm:$0xff]
  %v479 = vld [vmem:[%s1 + $0xdb0] sm:$0xff]
  %v480 = vld [vmem:[%s1 + $0xdb8] sm:$0xff]
  %v481 = vld [vmem:[%s1 + $0xdc0] sm:$0xff]
  %v482 = vld [vmem:[%s1 + $0xdc8] sm:$0xff]
  %v483 = vld [vmem:[%s1 + $0xdd0] sm:$0xff]
  %v484 = vld [vmem:[%s1 + $0xdd8] sm:$0xff]
  %v485 = vld [vmem:[%s1 + $0xde0] sm:$0xff]
  %v486 = vld [vmem:[%s1 + $0xde8] sm:$0xff]
  %v487 = vld [vmem:[%s1 + $0xdf0] sm:$0xff]
  %v488 = vld [vmem:[%s1 + $0xdf8] sm:$0xff]
  %v489 = vld [vmem:[%s1 + $0xe00] sm:$0xff]
  %v490 = vld [vmem:[%s1 + $0xe08] sm:$0xff]
  %v491 = vld [vmem:[%s1 + $0xe10] sm:$0xff]
  %v492 = vld [vmem:[%s1 + $0xe18] sm:$0xff]
  %v493 = vld [vmem:[%s1 + $0xe20] sm:$0xff]
  %v494 = vld [vmem:[%s1 + $0xe28] sm:$0xff]
  %v495 = vld [vmem:[%s1 + $0xe30] sm:$0xff]
  %v496 = vld [vmem:[%s1 + $0xe38] sm:$0xff]
  %v497 = vld [vmem:[%s1 + $0xe40] sm:$0xff]
  %v498 = vld [vmem:[%s1 + $0xe48] sm:$0xff]
  %v499 = vld [vmem:[%s1 + $0xe50] sm:$0xff]
  %v500 = vld [vmem:[%s1 + $0xe58] sm:$0xff]
  %v501 = vld [vmem:[%s1 + $0xe60] sm:$0xff]
  %v502 = vld [vmem:[%s1 + $0xe68] sm:$0xff]
  %v503 = vld [vmem:[%s1 + $0xe70] sm:$0xff]
  %v504 = vld [vmem:[%s1 + $0xe78] sm:$0xff]
  %v505 = vld [vmem:[%s1 + $0xe80] sm:$0xff]
  %v506 = vld [vmem:[%s1 + $0xe88] sm:$0xff]
  %v507 = vld [vmem:[%s1 + $0xe90] sm:$0xff]
  %v508 = vld [vmem:[%s1 + $0xe98] sm:$0xff]
  %v509 = vld [vmem:[%s1 + $0xea0] sm:$0xff]
  %v510 = vld [vmem:[%s1 + $0xea8] sm:$0xff]
  %v511 = vld [vmem:[%s1 + $0xeb0] sm:$0xff]
  %v512 = vld [vmem:[%s1 + $0xeb8] sm:$0xff]
  %v513 = vld [vmem:[%s1 + $0xec0] sm:$0xff]
  %v514 = vld [vmem:[%s1 + $0xec8] sm:$0xff]
  %v515 = vld [vmem:[%s1 + $0xed0] sm:$0xff]
  %v516 = vld [vmem:[%s1 + $0xed8] sm:$0xff]
  %v517 = vld [vmem:[%s1 + $0xee0] sm:$0xff]
  %v518 = vld [vmem:[%s1 + $0xee8] sm:$0xff]
  %v519 = vld [vmem:[%s1 + $0xef0] sm:$0xff]
  %v520 = vld [vmem:[%s1 + $0xef8] sm:$0xff]
  %v521 = vld [vmem:[%s1 + $0xf00] sm:$0xff]
  %v522 = vld [vmem:[%s1 + $0xf08] sm:$0xff]
  %v523 = vld [vmem:[%s1 + $0xf10] sm:$0xff]
  %v524 = vld [vmem:[%s1 + $0xf18] sm:$0xff]
  %v525 = vld [vmem:[%s1 + $0xf20] sm:$0xff]
  %v526 = vld [vmem:[%s1 + $0xf28] sm:$0xff]
  %v527 = vld [vmem:[%s1 + $0xf30] sm:$0xff]
  %v528 = vld [vmem:[%s1 + $0xf38] sm:$0xff]
  %v529 = vld [vmem:[%s1 + $0xf40] sm:$0xff]
  %v530 = vld [vmem:[%s1 + $0xf48] sm:$0xff]
  %v531 = vld [vmem:[%s1 + $0xf50] sm:$0xff]
  %v532 = vld [vmem:[%s1 + $0xf58] sm:$0xff]
  %v533 = vld [vmem:[%s1 + $0xf60] sm:$0xff]
  %v534 = vld [vmem:[%s1 + $0xf68] sm:$0xff]
  %v535 = vld [vmem:[%s1 + $0xf70] sm:$0xff]
  %v536 = vld [vmem:[%s1 + $0xf78] sm:$0xff]
  %v537 = vld [vmem:[%s1 + $0xf80] sm:$0xff]
  %v538 = vld [vmem:[%s1 + $0xf88] sm:$0xff]
  %v539 = vld [vmem:[%s1 + $0xf90] sm:$0xff]
  %v540 = vld [vmem:[%s1 + $0xf98] sm:$0xff]
  %v541 = vld [vmem:[%s1 + $0xfa0] sm:$0xff]
  %v542 = vld [vmem:[%s1 + $0xfa8] sm:$0xff]
  %v543 = vld [vmem:[%s1 + $0xfb0] sm:$0xff]
  %v544 = vld [vmem:[%s1 + $0xfb8] sm:$0xff]
  %v545 = vld [vmem:[%s1 + $0xfc0] sm:$0xff]
  %v546 = vld [vmem:[%s1 + $0xfc8] sm:$0xff]
  %v547 = vld [vmem:[%s1 + $0xfd0] sm:$0xff]
  %v548 = vld [vmem:[%s1 + $0xfd8] sm:$0xff]
  %v549 = vld [vmem:[%s1 + $0xfe0] sm:$0xff]
  %v550 = vld [vmem:[%s1 + $0xfe8] sm:$0xff]
  %v551 = vld [vmem:[%s1 + $0xff0] sm:$0xff]
  %v552 = vld [vmem:[%s1 + $0xff8] sm:$0xff]
  %v561 = vunpack.c.l.b16 %v33
  %v562 = vunpack.c.h.b16 %v33
  %v563 = vunpack.c.l.b16 %v34
  %v564 = vunpack.c.h.b16 %v34
  %v565 = vunpack.c.l.b16 %v35
  %v566 = vunpack.c.h.b16 %v35
  %v567 = vunpack.c.l.b16 %v36
  %v568 = vunpack.c.h.b16 %v36
  %v569 = vunpack.c.l.b16 %v37
  %v570 = vunpack.c.h.b16 %v37
  %v571 = vunpack.c.l.b16 %v38
  %v572 = vunpack.c.h.b16 %v38
  %v573 = vunpack.c.l.b16 %v39
  %v574 = vunpack.c.h.b16 %v39
  %v575 = vunpack.c.l.b16 %v40
  %v576 = vunpack.c.h.b16 %v40
  %v577 = vpack.c.b16 %v561, %v561
  %v578 = vpack.c.b16 %v562, %v562
  %v579 = vpack.c.b16 %v563, %v563
  %v580 = vpack.c.b16 %v564, %v564
  %v581 = vpack.c.b16 %v565, %v565
  %v582 = vpack.c.b16 %v566, %v566
  %v583 = vpack.c.b16 %v567, %v567
  %v584 = vpack.c.b16 %v568, %v568
  %v585 = vpack.c.b16 %v569, %v569
  %v586 = vpack.c.b16 %v570, %v570
  %v587 = vpack.c.b16 %v571, %v571
  %v588 = vpack.c.b16 %v572, %v572
  %v589 = vpack.c.b16 %v573, %v573
  %v590 = vpack.c.b16 %v574, %v574
  %v591 = vpack.c.b16 %v575, %v575
  %v592 = vpack.c.b16 %v576, %v576
  %v1121 = vunpack.c.l.b16 %v41
  %v1122 = vunpack.c.h.b16 %v41
  %v1123 = vunpack.c.l.b16 %v42
  %v1124 = vunpack.c.h.b16 %v42
  %v1125 = vunpack.c.l.b16 %v43
  %v1126 = vunpack.c.h.b16 %v43
  %v1127 = vunpack.c.l.b16 %v44
  %v1128 = vunpack.c.h.b16 %v44
  %v1129 = vunpack.c.l.b16 %v45
  %v1130 = vunpack.c.h.b16 %v45
  %v1131 = vunpack.c.l.b16 %v46
  %v1132 = vunpack.c.h.b16 %v46
  %v1133 = vunpack.c.l.b16 %v47
  %v1134 = vunpack.c.h.b16 %v47
  %v1135 = vunpack.c.l.b16 %v48
  %v1136 = vunpack.c.h.b16 %v48
  %v1137 = vunpack.c.l.b16 %v49
  %v1138 = vunpack.c.h.b16 %v49
  %v1139 = vunpack.c.l.b16 %v50
  %v1140 = vunpack.c.h.b16 %v50
  %v1141 = vunpack.c.l.b16 %v51
  %v1142 = vunpack.c.h.b16 %v51
  %v1143 = vunpack.c.l.b16 %v52
  %v1144 = vunpack.c.h.b16 %v52
  %v1145 = vunpack.c.l.b16 %v53
  %v1146 = vunpack.c.h.b16 %v53
  %v1147 = vunpack.c.l.b16 %v54
  %v1148 = vunpack.c.h.b16 %v54
  %v1149 = vunpack.c.l.b16 %v55
  %v1150 = vunpack.c.h.b16 %v55
  %v1151 = vunpack.c.l.b16 %v56
  %v1152 = vunpack.c.h.b16 %v56
  %v1153 = vunpack.c.l.b16 %v57
  %v1154 = vunpack.c.h.b16 %v57
  %v1155 = vunpack.c.l.b16 %v58
  %v1156 = vunpack.c.h.b16 %v58
  %v1157 = vunpack.c.l.b16 %v59
  %v1158 = vunpack.c.h.b16 %v59
  %v1159 = vunpack.c.l.b16 %v60
  %v1160 = vunpack.c.h.b16 %v60
  %v1161 = vunpack.c.l.b16 %v61
  %v1162 = vunpack.c.h.b16 %v61
  %v1163 = vunpack.c.l.b16 %v62
  %v1164 = vunpack.c.h.b16 %v62
  %v1165 = vunpack.c.l.b16 %v63
  %v1166 = vunpack.c.h.b16 %v63
  %v1167 = vunpack.c.l.b16 %v64
  %v1168 = vunpack.c.h.b16 %v64
  %v1169 = vunpack.c.l.b16 %v65
  %v1170 = vunpack.c.h.b16 %v65
  %v1171 = vunpack.c.l.b16 %v66
  %v1172 = vunpack.c.h.b16 %v66
  %v1173 = vunpack.c.l.b16 %v67
  %v1174 = vunpack.c.h.b16 %v67
  %v1175 = vunpack.c.l.b16 %v68
  %v1176 = vunpack.c.h.b16 %v68
  %v1177 = vunpack.c.l.b16 %v69
  %v1178 = vunpack.c.h.b16 %v69
  %v1179 = vunpack.c.l.b16 %v70
  %v1180 = vunpack.c.h.b16 %v70
  %v1181 = vunpack.c.l.b16 %v71
  %v1182 = vunpack.c.h.b16 %v71
  %v1183 = vunpack.c.l.b16 %v72
  %v1184 = vunpack.c.h.b16 %v72
  %v1185 = vunpack.c.l.b16 %v73
  %v1186 = vunpack.c.h.b16 %v73
  %v1187 = vunpack.c.l.b16 %v74
  %v1188 = vunpack.c.h.b16 %v74
  %v1189 = vunpack.c.l.b16 %v75
  %v1190 = vunpack.c.h.b16 %v75
  %v1191 = vunpack.c.l.b16 %v76
  %v1192 = vunpack.c.h.b16 %v76
  %v1193 = vunpack.c.l.b16 %v77
  %v1194 = vunpack.c.h.b16 %v77
  %v1195 = vunpack.c.l.b16 %v78
  %v1196 = vunpack.c.h.b16 %v78
  %v1197 = vunpack.c.l.b16 %v79
  %v1198 = vunpack.c.h.b16 %v79
  %v1199 = vunpack.c.l.b16 %v80
  %v1200 = vunpack.c.h.b16 %v80
  %v1201 = vunpack.c.l.b16 %v81
  %v1202 = vunpack.c.h.b16 %v81
  %v1203 = vunpack.c.l.b16 %v82
  %v1204 = vunpack.c.h.b16 %v82
  %v1205 = vunpack.c.l.b16 %v83
  %v1206 = vunpack.c.h.b16 %v83
  %v1207 = vunpack.c.l.b16 %v84
  %v1208 = vunpack.c.h.b16 %v84
  %v1209 = vunpack.c.l.b16 %v85
  %v1210 = vunpack.c.h.b16 %v85
  %v1211 = vunpack.c.l.b16 %v86
  %v1212 = vunpack.c.h.b16 %v86
  %v1213 = vunpack.c.l.b16 %v87
  %v1214 = vunpack.c.h.b16 %v87
  %v1215 = vunpack.c.l.b16 %v88
  %v1216 = vunpack.c.h.b16 %v88
  %v1217 = vunpack.c.l.b16 %v89
  %v1218 = vunpack.c.h.b16 %v89
  %v1219 = vunpack.c.l.b16 %v90
  %v1220 = vunpack.c.h.b16 %v90
  %v1221 = vunpack.c.l.b16 %v91
  %v1222 = vunpack.c.h.b16 %v91
  %v1223 = vunpack.c.l.b16 %v92
  %v1224 = vunpack.c.h.b16 %v92
  %v1225 = vunpack.c.l.b16 %v93
  %v1226 = vunpack.c.h.b16 %v93
  %v1227 = vunpack.c.l.b16 %v94
  %v1228 = vunpack.c.h.b16 %v94
  %v1229 = vunpack.c.l.b16 %v95
  %v1230 = vunpack.c.h.b16 %v95
  %v1231 = vunpack.c.l.b16 %v96
  %v1232 = vunpack.c.h.b16 %v96
  %v1233 = vunpack.c.l.b16 %v97
  %v1234 = vunpack.c.h.b16 %v97
  %v1235 = vunpack.c.l.b16 %v98
  %v1236 = vunpack.c.h.b16 %v98
  %v1237 = vunpack.c.l.b16 %v99
  %v1238 = vunpack.c.h.b16 %v99
  %v1239 = vunpack.c.l.b16 %v100
  %v1240 = vunpack.c.h.b16 %v100
  %v1241 = vunpack.c.l.b16 %v101
  %v1242 = vunpack.c.h.b16 %v101
  %v1243 = vunpack.c.l.b16 %v102
  %v1244 = vunpack.c.h.b16 %v102
  %v1245 = vunpack.c.l.b16 %v103
  %v1246 = vunpack.c.h.b16 %v103
  %v1247 = vunpack.c.l.b16 %v104
  %v1248 = vunpack.c.h.b16 %v104
  %v1249 = vunpack.c.l.b16 %v105
  %v1250 = vunpack.c.h.b16 %v105
  %v1251 = vunpack.c.l.b16 %v106
  %v1252 = vunpack.c.h.b16 %v106
  %v1253 = vunpack.c.l.b16 %v107
  %v1254 = vunpack.c.h.b16 %v107
  %v1255 = vunpack.c.l.b16 %v108
  %v1256 = vunpack.c.h.b16 %v108
  %v1257 = vunpack.c.l.b16 %v109
  %v1258 = vunpack.c.h.b16 %v109
  %v1259 = vunpack.c.l.b16 %v110
  %v1260 = vunpack.c.h.b16 %v110
  %v1261 = vunpack.c.l.b16 %v111
  %v1262 = vunpack.c.h.b16 %v111
  %v1263 = vunpack.c.l.b16 %v112
  %v1264 = vunpack.c.h.b16 %v112
  %v1265 = vunpack.c.l.b16 %v113
  %v1266 = vunpack.c.h.b16 %v113
  %v1267 = vunpack.c.l.b16 %v114
  %v1268 = vunpack.c.h.b16 %v114
  %v1269 = vunpack.c.l.b16 %v115
  %v1270 = vunpack.c.h.b16 %v115
  %v1271 = vunpack.c.l.b16 %v116
  %v1272 = vunpack.c.h.b16 %v116
  %v1273 = vunpack.c.l.b16 %v117
  %v1274 = vunpack.c.h.b16 %v117
  %v1275 = vunpack.c.l.b16 %v118
  %v1276 = vunpack.c.h.b16 %v118
  %v1277 = vunpack.c.l.b16 %v119
  %v1278 = vunpack.c.h.b16 %v119
  %v1279 = vunpack.c.l.b16 %v120
  %v1280 = vunpack.c.h.b16 %v120
  %v1281 = vunpack.c.l.b16 %v121
  %v1282 = vunpack.c.h.b16 %v121
  %v1283 = vunpack.c.l.b16 %v122
  %v1284 = vunpack.c.h.b16 %v122
  %v1285 = vunpack.c.l.b16 %v123
  %v1286 = vunpack.c.h.b16 %v123
  %v1287 = vunpack.c.l.b16 %v124
  %v1288 = vunpack.c.h.b16 %v124
  %v1289 = vunpack.c.l.b16 %v125
  %v1290 = vunpack.c.h.b16 %v125
  %v1291 = vunpack.c.l.b16 %v126
  %v1292 = vunpack.c.h.b16 %v126
  %v1293 = vunpack.c.l.b16 %v127
  %v1294 = vunpack.c.h.b16 %v127
  %v1295 = vunpack.c.l.b16 %v128
  %v1296 = vunpack.c.h.b16 %v128
  %v1297 = vunpack.c.l.b16 %v129
  %v1298 = vunpack.c.h.b16 %v129
  %v1299 = vunpack.c.l.b16 %v130
  %v1300 = vunpack.c.h.b16 %v130
  %v1301 = vunpack.c.l.b16 %v131
  %v1302 = vunpack.c.h.b16 %v131
  %v1303 = vunpack.c.l.b16 %v132
  %v1304 = vunpack.c.h.b16 %v132
  %v1305 = vunpack.c.l.b16 %v133
  %v1306 = vunpack.c.h.b16 %v133
  %v1307 = vunpack.c.l.b16 %v134
  %v1308 = vunpack.c.h.b16 %v134
  %v1309 = vunpack.c.l.b16 %v135
  %v1310 = vunpack.c.h.b16 %v135
  %v1311 = vunpack.c.l.b16 %v136
  %v1312 = vunpack.c.h.b16 %v136
  %v1313 = vunpack.c.l.b16 %v137
  %v1314 = vunpack.c.h.b16 %v137
  %v1315 = vunpack.c.l.b16 %v138
  %v1316 = vunpack.c.h.b16 %v138
  %v1317 = vunpack.c.l.b16 %v139
  %v1318 = vunpack.c.h.b16 %v139
  %v1319 = vunpack.c.l.b16 %v140
  %v1320 = vunpack.c.h.b16 %v140
  %v1321 = vunpack.c.l.b16 %v141
  %v1322 = vunpack.c.h.b16 %v141
  %v1323 = vunpack.c.l.b16 %v142
  %v1324 = vunpack.c.h.b16 %v142
  %v1325 = vunpack.c.l.b16 %v143
  %v1326 = vunpack.c.h.b16 %v143
  %v1327 = vunpack.c.l.b16 %v144
  %v1328 = vunpack.c.h.b16 %v144
  %v1329 = vunpack.c.l.b16 %v145
  %v1330 = vunpack.c.h.b16 %v145
  %v1331 = vunpack.c.l.b16 %v146
  %v1332 = vunpack.c.h.b16 %v146
  %v1333 = vunpack.c.l.b16 %v147
  %v1334 = vunpack.c.h.b16 %v147
  %v1335 = vunpack.c.l.b16 %v148
  %v1336 = vunpack.c.h.b16 %v148
  %v1337 = vunpack.c.l.b16 %v149
  %v1338 = vunpack.c.h.b16 %v149
  %v1339 = vunpack.c.l.b16 %v150
  %v1340 = vunpack.c.h.b16 %v150
  %v1341 = vunpack.c.l.b16 %v151
  %v1342 = vunpack.c.h.b16 %v151
  %v1343 = vunpack.c.l.b16 %v152
  %v1344 = vunpack.c.h.b16 %v152
  %v1345 = vunpack.c.l.b16 %v153
  %v1346 = vunpack.c.h.b16 %v153
  %v1347 = vunpack.c.l.b16 %v154
  %v1348 = vunpack.c.h.b16 %v154
  %v1349 = vunpack.c.l.b16 %v155
  %v1350 = vunpack.c.h.b16 %v155
  %v1351 = vunpack.c.l.b16 %v156
  %v1352 = vunpack.c.h.b16 %v156
  %v1353 = vunpack.c.l.b16 %v157
  %v1354 = vunpack.c.h.b16 %v157
  %v1355 = vunpack.c.l.b16 %v158
  %v1356 = vunpack.c.h.b16 %v158
  %v1357 = vunpack.c.l.b16 %v159
  %v1358 = vunpack.c.h.b16 %v159
  %v1359 = vunpack.c.l.b16 %v160
  %v1360 = vunpack.c.h.b16 %v160
  %v1361 = vunpack.c.l.b16 %v161
  %v1362 = vunpack.c.h.b16 %v161
  %v1363 = vunpack.c.l.b16 %v162
  %v1364 = vunpack.c.h.b16 %v162
  %v1365 = vunpack.c.l.b16 %v163
  %v1366 = vunpack.c.h.b16 %v163
  %v1367 = vunpack.c.l.b16 %v164
  %v1368 = vunpack.c.h.b16 %v164
  %v1369 = vunpack.c.l.b16 %v165
  %v1370 = vunpack.c.h.b16 %v165
  %v1371 = vunpack.c.l.b16 %v166
  %v1372 = vunpack.c.h.b16 %v166
  %v1373 = vunpack.c.l.b16 %v167
  %v1374 = vunpack.c.h.b16 %v167
  %v1375 = vunpack.c.l.b16 %v168
  %v1376 = vunpack.c.h.b16 %v168
  %v1377 = vunpack.c.l.b16 %v169
  %v1378 = vunpack.c.h.b16 %v169
  %v1379 = vunpack.c.l.b16 %v170
  %v1380 = vunpack.c.h.b16 %v170
  %v1381 = vunpack.c.l.b16 %v171
  %v1382 = vunpack.c.h.b16 %v171
  %v1383 = vunpack.c.l.b16 %v172
  %v1384 = vunpack.c.h.b16 %v172
  %v1385 = vunpack.c.l.b16 %v173
  %v1386 = vunpack.c.h.b16 %v173
  %v1387 = vunpack.c.l.b16 %v174
  %v1388 = vunpack.c.h.b16 %v174
  %v1389 = vunpack.c.l.b16 %v175
  %v1390 = vunpack.c.h.b16 %v175
  %v1391 = vunpack.c.l.b16 %v176
  %v1392 = vunpack.c.h.b16 %v176
  %v1393 = vunpack.c.l.b16 %v177
  %v1394 = vunpack.c.h.b16 %v177
  %v1395 = vunpack.c.l.b16 %v178
  %v1396 = vunpack.c.h.b16 %v178
  %v1397 = vunpack.c.l.b16 %v179
  %v1398 = vunpack.c.h.b16 %v179
  %v1399 = vunpack.c.l.b16 %v180
  %v1400 = vunpack.c.h.b16 %v180
  %v1401 = vunpack.c.l.b16 %v181
  %v1402 = vunpack.c.h.b16 %v181
  %v1403 = vunpack.c.l.b16 %v182
  %v1404 = vunpack.c.h.b16 %v182
  %v1405 = vunpack.c.l.b16 %v183
  %v1406 = vunpack.c.h.b16 %v183
  %v1407 = vunpack.c.l.b16 %v184
  %v1408 = vunpack.c.h.b16 %v184
  %v1409 = vunpack.c.l.b16 %v185
  %v1410 = vunpack.c.h.b16 %v185
  %v1411 = vunpack.c.l.b16 %v186
  %v1412 = vunpack.c.h.b16 %v186
  %v1413 = vunpack.c.l.b16 %v187
  %v1414 = vunpack.c.h.b16 %v187
  %v1415 = vunpack.c.l.b16 %v188
  %v1416 = vunpack.c.h.b16 %v188
  %v1417 = vunpack.c.l.b16 %v189
  %v1418 = vunpack.c.h.b16 %v189
  %v1419 = vunpack.c.l.b16 %v190
  %v1420 = vunpack.c.h.b16 %v190
  %v1421 = vunpack.c.l.b16 %v191
  %v1422 = vunpack.c.h.b16 %v191
  %v1423 = vunpack.c.l.b16 %v192
  %v1424 = vunpack.c.h.b16 %v192
  %v1425 = vunpack.c.l.b16 %v193
  %v1426 = vunpack.c.h.b16 %v193
  %v1427 = vunpack.c.l.b16 %v194
  %v1428 = vunpack.c.h.b16 %v194
  %v1429 = vunpack.c.l.b16 %v195
  %v1430 = vunpack.c.h.b16 %v195
  %v1431 = vunpack.c.l.b16 %v196
  %v1432 = vunpack.c.h.b16 %v196
  %v1433 = vunpack.c.l.b16 %v197
  %v1434 = vunpack.c.h.b16 %v197
  %v1435 = vunpack.c.l.b16 %v198
  %v1436 = vunpack.c.h.b16 %v198
  %v1437 = vunpack.c.l.b16 %v199
  %v1438 = vunpack.c.h.b16 %v199
  %v1439 = vunpack.c.l.b16 %v200
  %v1440 = vunpack.c.h.b16 %v200
  %v1441 = vunpack.c.l.b16 %v201
  %v1442 = vunpack.c.h.b16 %v201
  %v1443 = vunpack.c.l.b16 %v202
  %v1444 = vunpack.c.h.b16 %v202
  %v1445 = vunpack.c.l.b16 %v203
  %v1446 = vunpack.c.h.b16 %v203
  %v1447 = vunpack.c.l.b16 %v204
  %v1448 = vunpack.c.h.b16 %v204
  %v1449 = vunpack.c.l.b16 %v205
  %v1450 = vunpack.c.h.b16 %v205
  %v1451 = vunpack.c.l.b16 %v206
  %v1452 = vunpack.c.h.b16 %v206
  %v1453 = vunpack.c.l.b16 %v207
  %v1454 = vunpack.c.h.b16 %v207
  %v1455 = vunpack.c.l.b16 %v208
  %v1456 = vunpack.c.h.b16 %v208
  %v1457 = vunpack.c.l.b16 %v209
  %v1458 = vunpack.c.h.b16 %v209
  %v1459 = vunpack.c.l.b16 %v210
  %v1460 = vunpack.c.h.b16 %v210
  %v1461 = vunpack.c.l.b16 %v211
  %v1462 = vunpack.c.h.b16 %v211
  %v1463 = vunpack.c.l.b16 %v212
  %v1464 = vunpack.c.h.b16 %v212
  %v1465 = vunpack.c.l.b16 %v213
  %v1466 = vunpack.c.h.b16 %v213
  %v1467 = vunpack.c.l.b16 %v214
  %v1468 = vunpack.c.h.b16 %v214
  %v1469 = vunpack.c.l.b16 %v215
  %v1470 = vunpack.c.h.b16 %v215
  %v1471 = vunpack.c.l.b16 %v216
  %v1472 = vunpack.c.h.b16 %v216
  %v1473 = vunpack.c.l.b16 %v217
  %v1474 = vunpack.c.h.b16 %v217
  %v1475 = vunpack.c.l.b16 %v218
  %v1476 = vunpack.c.h.b16 %v218
  %v1477 = vunpack.c.l.b16 %v219
  %v1478 = vunpack.c.h.b16 %v219
  %v1479 = vunpack.c.l.b16 %v220
  %v1480 = vunpack.c.h.b16 %v220
  %v1481 = vunpack.c.l.b16 %v221
  %v1482 = vunpack.c.h.b16 %v221
  %v1483 = vunpack.c.l.b16 %v222
  %v1484 = vunpack.c.h.b16 %v222
  %v1485 = vunpack.c.l.b16 %v223
  %v1486 = vunpack.c.h.b16 %v223
  %v1487 = vunpack.c.l.b16 %v224
  %v1488 = vunpack.c.h.b16 %v224
  %v1489 = vunpack.c.l.b16 %v225
  %v1490 = vunpack.c.h.b16 %v225
  %v1491 = vunpack.c.l.b16 %v226
  %v1492 = vunpack.c.h.b16 %v226
  %v1493 = vunpack.c.l.b16 %v227
  %v1494 = vunpack.c.h.b16 %v227
  %v1495 = vunpack.c.l.b16 %v228
  %v1496 = vunpack.c.h.b16 %v228
  %v1497 = vunpack.c.l.b16 %v229
  %v1498 = vunpack.c.h.b16 %v229
  %v1499 = vunpack.c.l.b16 %v230
  %v1500 = vunpack.c.h.b16 %v230
  %v1501 = vunpack.c.l.b16 %v231
  %v1502 = vunpack.c.h.b16 %v231
  %v1503 = vunpack.c.l.b16 %v232
  %v1504 = vunpack.c.h.b16 %v232
  %v1505 = vunpack.c.l.b16 %v233
  %v1506 = vunpack.c.h.b16 %v233
  %v1507 = vunpack.c.l.b16 %v234
  %v1508 = vunpack.c.h.b16 %v234
  %v1509 = vunpack.c.l.b16 %v235
  %v1510 = vunpack.c.h.b16 %v235
  %v1511 = vunpack.c.l.b16 %v236
  %v1512 = vunpack.c.h.b16 %v236
  %v1513 = vunpack.c.l.b16 %v237
  %v1514 = vunpack.c.h.b16 %v237
  %v1515 = vunpack.c.l.b16 %v238
  %v1516 = vunpack.c.h.b16 %v238
  %v1517 = vunpack.c.l.b16 %v239
  %v1518 = vunpack.c.h.b16 %v239
  %v1519 = vunpack.c.l.b16 %v240
  %v1520 = vunpack.c.h.b16 %v240
  %v1521 = vunpack.c.l.b16 %v241
  %v1522 = vunpack.c.h.b16 %v241
  %v1523 = vunpack.c.l.b16 %v242
  %v1524 = vunpack.c.h.b16 %v242
  %v1525 = vunpack.c.l.b16 %v243
  %v1526 = vunpack.c.h.b16 %v243
  %v1527 = vunpack.c.l.b16 %v244
  %v1528 = vunpack.c.h.b16 %v244
  %v1529 = vunpack.c.l.b16 %v245
  %v1530 = vunpack.c.h.b16 %v245
  %v1531 = vunpack.c.l.b16 %v246
  %v1532 = vunpack.c.h.b16 %v246
  %v1533 = vunpack.c.l.b16 %v247
  %v1534 = vunpack.c.h.b16 %v247
  %v1535 = vunpack.c.l.b16 %v248
  %v1536 = vunpack.c.h.b16 %v248
  %v1537 = vunpack.c.l.b16 %v249
  %v1538 = vunpack.c.h.b16 %v249
  %v1539 = vunpack.c.l.b16 %v250
  %v1540 = vunpack.c.h.b16 %v250
  %v1541 = vunpack.c.l.b16 %v251
  %v1542 = vunpack.c.h.b16 %v251
  %v1543 = vunpack.c.l.b16 %v252
  %v1544 = vunpack.c.h.b16 %v252
  %v1545 = vunpack.c.l.b16 %v253
  %v1546 = vunpack.c.h.b16 %v253
  %v1547 = vunpack.c.l.b16 %v254
  %v1548 = vunpack.c.h.b16 %v254
  %v1549 = vunpack.c.l.b16 %v255
  %v1550 = vunpack.c.h.b16 %v255
  %v1551 = vunpack.c.l.b16 %v256
  %v1552 = vunpack.c.h.b16 %v256
  %v1553 = vunpack.c.l.b16 %v257
  %v1554 = vunpack.c.h.b16 %v257
  %v1555 = vunpack.c.l.b16 %v258
  %v1556 = vunpack.c.h.b16 %v258
  %v1557 = vunpack.c.l.b16 %v259
  %v1558 = vunpack.c.h.b16 %v259
  %v1559 = vunpack.c.l.b16 %v260
  %v1560 = vunpack.c.h.b16 %v260
  %v1561 = vunpack.c.l.b16 %v261
  %v1562 = vunpack.c.h.b16 %v261
  %v1563 = vunpack.c.l.b16 %v262
  %v1564 = vunpack.c.h.b16 %v262
  %v1565 = vunpack.c.l.b16 %v263
  %v1566 = vunpack.c.h.b16 %v263
  %v1567 = vunpack.c.l.b16 %v264
  %v1568 = vunpack.c.h.b16 %v264
  %v1569 = vunpack.c.l.b16 %v265
  %v1570 = vunpack.c.h.b16 %v265
  %v1571 = vunpack.c.l.b16 %v266
  %v1572 = vunpack.c.h.b16 %v266
  %v1573 = vunpack.c.l.b16 %v267
  %v1574 = vunpack.c.h.b16 %v267
  %v1575 = vunpack.c.l.b16 %v268
  %v1576 = vunpack.c.h.b16 %v268
  %v1577 = vunpack.c.l.b16 %v269
  %v1578 = vunpack.c.h.b16 %v269
  %v1579 = vunpack.c.l.b16 %v270
  %v1580 = vunpack.c.h.b16 %v270
  %v1581 = vunpack.c.l.b16 %v271
  %v1582 = vunpack.c.h.b16 %v271
  %v1583 = vunpack.c.l.b16 %v272
  %v1584 = vunpack.c.h.b16 %v272
  %v1585 = vunpack.c.l.b16 %v273
  %v1586 = vunpack.c.h.b16 %v273
  %v1587 = vunpack.c.l.b16 %v274
  %v1588 = vunpack.c.h.b16 %v274
  %v1589 = vunpack.c.l.b16 %v275
  %v1590 = vunpack.c.h.b16 %v275
  %v1591 = vunpack.c.l.b16 %v276
  %v1592 = vunpack.c.h.b16 %v276
  %v1593 = vunpack.c.l.b16 %v277
  %v1594 = vunpack.c.h.b16 %v277
  %v1595 = vunpack.c.l.b16 %v278
  %v1596 = vunpack.c.h.b16 %v278
  %v1597 = vunpack.c.l.b16 %v279
  %v1598 = vunpack.c.h.b16 %v279
  %v1599 = vunpack.c.l.b16 %v280
  %v1600 = vunpack.c.h.b16 %v280
  %v1601 = vunpack.c.l.b16 %v281
  %v1602 = vunpack.c.h.b16 %v281
  %v1603 = vunpack.c.l.b16 %v282
  %v1604 = vunpack.c.h.b16 %v282
  %v1605 = vunpack.c.l.b16 %v283
  %v1606 = vunpack.c.h.b16 %v283
  %v1607 = vunpack.c.l.b16 %v284
  %v1608 = vunpack.c.h.b16 %v284
  %v1609 = vunpack.c.l.b16 %v285
  %v1610 = vunpack.c.h.b16 %v285
  %v1611 = vunpack.c.l.b16 %v286
  %v1612 = vunpack.c.h.b16 %v286
  %v1613 = vunpack.c.l.b16 %v287
  %v1614 = vunpack.c.h.b16 %v287
  %v1615 = vunpack.c.l.b16 %v288
  %v1616 = vunpack.c.h.b16 %v288
  %v1617 = vunpack.c.l.b16 %v289
  %v1618 = vunpack.c.h.b16 %v289
  %v1619 = vunpack.c.l.b16 %v290
  %v1620 = vunpack.c.h.b16 %v290
  %v1621 = vunpack.c.l.b16 %v291
  %v1622 = vunpack.c.h.b16 %v291
  %v1623 = vunpack.c.l.b16 %v292
  %v1624 = vunpack.c.h.b16 %v292
  %v1625 = vunpack.c.l.b16 %v293
  %v1626 = vunpack.c.h.b16 %v293
  %v1627 = vunpack.c.l.b16 %v294
  %v1628 = vunpack.c.h.b16 %v294
  %v1629 = vunpack.c.l.b16 %v295
  %v1630 = vunpack.c.h.b16 %v295
  %v1631 = vunpack.c.l.b16 %v296
  %v1632 = vunpack.c.h.b16 %v296
  %v1633 = vunpack.c.l.b16 %v297
  %v1634 = vunpack.c.h.b16 %v297
  %v1635 = vunpack.c.l.b16 %v298
  %v1636 = vunpack.c.h.b16 %v298
  %v1637 = vunpack.c.l.b16 %v299
  %v1638 = vunpack.c.h.b16 %v299
  %v1639 = vunpack.c.l.b16 %v300
  %v1640 = vunpack.c.h.b16 %v300
  %v1641 = vunpack.c.l.b16 %v301
  %v1642 = vunpack.c.h.b16 %v301
  %v1643 = vunpack.c.l.b16 %v302
  %v1644 = vunpack.c.h.b16 %v302
  %v1645 = vunpack.c.l.b16 %v303
  %v1646 = vunpack.c.h.b16 %v303
  %v1647 = vunpack.c.l.b16 %v304
  %v1648 = vunpack.c.h.b16 %v304
  %v1649 = vunpack.c.l.b16 %v305
  %v1650 = vunpack.c.h.b16 %v305
  %v1651 = vunpack.c.l.b16 %v306
  %v1652 = vunpack.c.h.b16 %v306
  %v1653 = vunpack.c.l.b16 %v307
  %v1654 = vunpack.c.h.b16 %v307
  %v1655 = vunpack.c.l.b16 %v308
  %v1656 = vunpack.c.h.b16 %v308
  %v1657 = vunpack.c.l.b16 %v309
  %v1658 = vunpack.c.h.b16 %v309
  %v1659 = vunpack.c.l.b16 %v310
  %v1660 = vunpack.c.h.b16 %v310
  %v1661 = vunpack.c.l.b16 %v311
  %v1662 = vunpack.c.h.b16 %v311
  %v1663 = vunpack.c.l.b16 %v312
  %v1664 = vunpack.c.h.b16 %v312
  %v1665 = vunpack.c.l.b16 %v313
  %v1666 = vunpack.c.h.b16 %v313
  %v1667 = vunpack.c.l.b16 %v314
  %v1668 = vunpack.c.h.b16 %v314
  %v1669 = vunpack.c.l.b16 %v315
  %v1670 = vunpack.c.h.b16 %v315
  %v1671 = vunpack.c.l.b16 %v316
  %v1672 = vunpack.c.h.b16 %v316
  %v1673 = vunpack.c.l.b16 %v317
  %v1674 = vunpack.c.h.b16 %v317
  %v1675 = vunpack.c.l.b16 %v318
  %v1676 = vunpack.c.h.b16 %v318
  %v1677 = vunpack.c.l.b16 %v319
  %v1678 = vunpack.c.h.b16 %v319
  %v1679 = vunpack.c.l.b16 %v320
  %v1680 = vunpack.c.h.b16 %v320
  %v1681 = vunpack.c.l.b16 %v321
  %v1682 = vunpack.c.h.b16 %v321
  %v1683 = vunpack.c.l.b16 %v322
  %v1684 = vunpack.c.h.b16 %v322
  %v1685 = vunpack.c.l.b16 %v323
  %v1686 = vunpack.c.h.b16 %v323
  %v1687 = vunpack.c.l.b16 %v324
  %v1688 = vunpack.c.h.b16 %v324
  %v1689 = vunpack.c.l.b16 %v325
  %v1690 = vunpack.c.h.b16 %v325
  %v1691 = vunpack.c.l.b16 %v326
  %v1692 = vunpack.c.h.b16 %v326
  %v1693 = vunpack.c.l.b16 %v327
  %v1694 = vunpack.c.h.b16 %v327
  %v1695 = vunpack.c.l.b16 %v328
  %v1696 = vunpack.c.h.b16 %v328
  %v1697 = vunpack.c.l.b16 %v329
  %v1698 = vunpack.c.h.b16 %v329
  %v1699 = vunpack.c.l.b16 %v330
  %v1700 = vunpack.c.h.b16 %v330
  %v1701 = vunpack.c.l.b16 %v331
  %v1702 = vunpack.c.h.b16 %v331
  %v1703 = vunpack.c.l.b16 %v332
  %v1704 = vunpack.c.h.b16 %v332
  %v1705 = vunpack.c.l.b16 %v333
  %v1706 = vunpack.c.h.b16 %v333
  %v1707 = vunpack.c.l.b16 %v334
  %v1708 = vunpack.c.h.b16 %v334
  %v1709 = vunpack.c.l.b16 %v335
  %v1710 = vunpack.c.h.b16 %v335
  %v1711 = vunpack.c.l.b16 %v336
  %v1712 = vunpack.c.h.b16 %v336
  %v1713 = vunpack.c.l.b16 %v337
  %v1714 = vunpack.c.h.b16 %v337
  %v1715 = vunpack.c.l.b16 %v338
  %v1716 = vunpack.c.h.b16 %v338
  %v1717 = vunpack.c.l.b16 %v339
  %v1718 = vunpack.c.h.b16 %v339
  %v1719 = vunpack.c.l.b16 %v340
  %v1720 = vunpack.c.h.b16 %v340
  %v1721 = vunpack.c.l.b16 %v341
  %v1722 = vunpack.c.h.b16 %v341
  %v1723 = vunpack.c.l.b16 %v342
  %v1724 = vunpack.c.h.b16 %v342
  %v1725 = vunpack.c.l.b16 %v343
  %v1726 = vunpack.c.h.b16 %v343
  %v1727 = vunpack.c.l.b16 %v344
  %v1728 = vunpack.c.h.b16 %v344
  %v1729 = vunpack.c.l.b16 %v345
  %v1730 = vunpack.c.h.b16 %v345
  %v1731 = vunpack.c.l.b16 %v346
  %v1732 = vunpack.c.h.b16 %v346
  %v1733 = vunpack.c.l.b16 %v347
  %v1734 = vunpack.c.h.b16 %v347
  %v1735 = vunpack.c.l.b16 %v348
  %v1736 = vunpack.c.h.b16 %v348
  %v1737 = vunpack.c.l.b16 %v349
  %v1738 = vunpack.c.h.b16 %v349
  %v1739 = vunpack.c.l.b16 %v350
  %v1740 = vunpack.c.h.b16 %v350
  %v1741 = vunpack.c.l.b16 %v351
  %v1742 = vunpack.c.h.b16 %v351
  %v1743 = vunpack.c.l.b16 %v352
  %v1744 = vunpack.c.h.b16 %v352
  %v1745 = vunpack.c.l.b16 %v353
  %v1746 = vunpack.c.h.b16 %v353
  %v1747 = vunpack.c.l.b16 %v354
  %v1748 = vunpack.c.h.b16 %v354
  %v1749 = vunpack.c.l.b16 %v355
  %v1750 = vunpack.c.h.b16 %v355
  %v1751 = vunpack.c.l.b16 %v356
  %v1752 = vunpack.c.h.b16 %v356
  %v1753 = vunpack.c.l.b16 %v357
  %v1754 = vunpack.c.h.b16 %v357
  %v1755 = vunpack.c.l.b16 %v358
  %v1756 = vunpack.c.h.b16 %v358
  %v1757 = vunpack.c.l.b16 %v359
  %v1758 = vunpack.c.h.b16 %v359
  %v1759 = vunpack.c.l.b16 %v360
  %v1760 = vunpack.c.h.b16 %v360
  %v1761 = vunpack.c.l.b16 %v361
  %v1762 = vunpack.c.h.b16 %v361
  %v1763 = vunpack.c.l.b16 %v362
  %v1764 = vunpack.c.h.b16 %v362
  %v1765 = vunpack.c.l.b16 %v363
  %v1766 = vunpack.c.h.b16 %v363
  %v1767 = vunpack.c.l.b16 %v364
  %v1768 = vunpack.c.h.b16 %v364
  %v1769 = vunpack.c.l.b16 %v365
  %v1770 = vunpack.c.h.b16 %v365
  %v1771 = vunpack.c.l.b16 %v366
  %v1772 = vunpack.c.h.b16 %v366
  %v1773 = vunpack.c.l.b16 %v367
  %v1774 = vunpack.c.h.b16 %v367
  %v1775 = vunpack.c.l.b16 %v368
  %v1776 = vunpack.c.h.b16 %v368
  %v1777 = vunpack.c.l.b16 %v369
  %v1778 = vunpack.c.h.b16 %v369
  %v1779 = vunpack.c.l.b16 %v370
  %v1780 = vunpack.c.h.b16 %v370
  %v1781 = vunpack.c.l.b16 %v371
  %v1782 = vunpack.c.h.b16 %v371
  %v1783 = vunpack.c.l.b16 %v372
  %v1784 = vunpack.c.h.b16 %v372
  %v1785 = vunpack.c.l.b16 %v373
  %v1786 = vunpack.c.h.b16 %v373
  %v1787 = vunpack.c.l.b16 %v374
  %v1788 = vunpack.c.h.b16 %v374
  %v1789 = vunpack.c.l.b16 %v375
  %v1790 = vunpack.c.h.b16 %v375
  %v1791 = vunpack.c.l.b16 %v376
  %v1792 = vunpack.c.h.b16 %v376
  %v1793 = vunpack.c.l.b16 %v377
  %v1794 = vunpack.c.h.b16 %v377
  %v1795 = vunpack.c.l.b16 %v378
  %v1796 = vunpack.c.h.b16 %v378
  %v1797 = vunpack.c.l.b16 %v379
  %v1798 = vunpack.c.h.b16 %v379
  %v1799 = vunpack.c.l.b16 %v380
  %v1800 = vunpack.c.h.b16 %v380
  %v1801 = vunpack.c.l.b16 %v381
  %v1802 = vunpack.c.h.b16 %v381
  %v1803 = vunpack.c.l.b16 %v382
  %v1804 = vunpack.c.h.b16 %v382
  %v1805 = vunpack.c.l.b16 %v383
  %v1806 = vunpack.c.h.b16 %v383
  %v1807 = vunpack.c.l.b16 %v384
  %v1808 = vunpack.c.h.b16 %v384
  %v1809 = vunpack.c.l.b16 %v385
  %v1810 = vunpack.c.h.b16 %v385
  %v1811 = vunpack.c.l.b16 %v386
  %v1812 = vunpack.c.h.b16 %v386
  %v1813 = vunpack.c.l.b16 %v387
  %v1814 = vunpack.c.h.b16 %v387
  %v1815 = vunpack.c.l.b16 %v388
  %v1816 = vunpack.c.h.b16 %v388
  %v1817 = vunpack.c.l.b16 %v389
  %v1818 = vunpack.c.h.b16 %v389
  %v1819 = vunpack.c.l.b16 %v390
  %v1820 = vunpack.c.h.b16 %v390
  %v1821 = vunpack.c.l.b16 %v391
  %v1822 = vunpack.c.h.b16 %v391
  %v1823 = vunpack.c.l.b16 %v392
  %v1824 = vunpack.c.h.b16 %v392
  %v1825 = vunpack.c.l.b16 %v393
  %v1826 = vunpack.c.h.b16 %v393
  %v1827 = vunpack.c.l.b16 %v394
  %v1828 = vunpack.c.h.b16 %v394
  %v1829 = vunpack.c.l.b16 %v395
  %v1830 = vunpack.c.h.b16 %v395
  %v1831 = vunpack.c.l.b16 %v396
  %v1832 = vunpack.c.h.b16 %v396
  %v1833 = vunpack.c.l.b16 %v397
  %v1834 = vunpack.c.h.b16 %v397
  %v1835 = vunpack.c.l.b16 %v398
  %v1836 = vunpack.c.h.b16 %v398
  %v1837 = vunpack.c.l.b16 %v399
  %v1838 = vunpack.c.h.b16 %v399
  %v1839 = vunpack.c.l.b16 %v400
  %v1840 = vunpack.c.h.b16 %v400
  %v1841 = vunpack.c.l.b16 %v401
  %v1842 = vunpack.c.h.b16 %v401
  %v1843 = vunpack.c.l.b16 %v402
  %v1844 = vunpack.c.h.b16 %v402
  %v1845 = vunpack.c.l.b16 %v403
  %v1846 = vunpack.c.h.b16 %v403
  %v1847 = vunpack.c.l.b16 %v404
  %v1848 = vunpack.c.h.b16 %v404
  %v1849 = vunpack.c.l.b16 %v405
  %v1850 = vunpack.c.h.b16 %v405
  %v1851 = vunpack.c.l.b16 %v406
  %v1852 = vunpack.c.h.b16 %v406
  %v1853 = vunpack.c.l.b16 %v407
  %v1854 = vunpack.c.h.b16 %v407
  %v1855 = vunpack.c.l.b16 %v408
  %v1856 = vunpack.c.h.b16 %v408
  %v1857 = vunpack.c.l.b16 %v409
  %v1858 = vunpack.c.h.b16 %v409
  %v1859 = vunpack.c.l.b16 %v410
  %v1860 = vunpack.c.h.b16 %v410
  %v1861 = vunpack.c.l.b16 %v411
  %v1862 = vunpack.c.h.b16 %v411
  %v1863 = vunpack.c.l.b16 %v412
  %v1864 = vunpack.c.h.b16 %v412
  %v1865 = vunpack.c.l.b16 %v413
  %v1866 = vunpack.c.h.b16 %v413
  %v1867 = vunpack.c.l.b16 %v414
  %v1868 = vunpack.c.h.b16 %v414
  %v1869 = vunpack.c.l.b16 %v415
  %v1870 = vunpack.c.h.b16 %v415
  %v1871 = vunpack.c.l.b16 %v416
  %v1872 = vunpack.c.h.b16 %v416
  %v1873 = vunpack.c.l.b16 %v417
  %v1874 = vunpack.c.h.b16 %v417
  %v1875 = vunpack.c.l.b16 %v418
  %v1876 = vunpack.c.h.b16 %v418
  %v1877 = vunpack.c.l.b16 %v419
  %v1878 = vunpack.c.h.b16 %v419
  %v1879 = vunpack.c.l.b16 %v420
  %v1880 = vunpack.c.h.b16 %v420
  %v1881 = vunpack.c.l.b16 %v421
  %v1882 = vunpack.c.h.b16 %v421
  %v1883 = vunpack.c.l.b16 %v422
  %v1884 = vunpack.c.h.b16 %v422
  %v1885 = vunpack.c.l.b16 %v423
  %v1886 = vunpack.c.h.b16 %v423
  %v1887 = vunpack.c.l.b16 %v424
  %v1888 = vunpack.c.h.b16 %v424
  %v1889 = vunpack.c.l.b16 %v425
  %v1890 = vunpack.c.h.b16 %v425
  %v1891 = vunpack.c.l.b16 %v426
  %v1892 = vunpack.c.h.b16 %v426
  %v1893 = vunpack.c.l.b16 %v427
  %v1894 = vunpack.c.h.b16 %v427
  %v1895 = vunpack.c.l.b16 %v428
  %v1896 = vunpack.c.h.b16 %v428
  %v1897 = vunpack.c.l.b16 %v429
  %v1898 = vunpack.c.h.b16 %v429
  %v1899 = vunpack.c.l.b16 %v430
  %v1900 = vunpack.c.h.b16 %v430
  %v1901 = vunpack.c.l.b16 %v431
  %v1902 = vunpack.c.h.b16 %v431
  %v1903 = vunpack.c.l.b16 %v432
  %v1904 = vunpack.c.h.b16 %v432
  %v1905 = vunpack.c.l.b16 %v433
  %v1906 = vunpack.c.h.b16 %v433
  %v1907 = vunpack.c.l.b16 %v434
  %v1908 = vunpack.c.h.b16 %v434
  %v1909 = vunpack.c.l.b16 %v435
  %v1910 = vunpack.c.h.b16 %v435
  %v1911 = vunpack.c.l.b16 %v436
  %v1912 = vunpack.c.h.b16 %v436
  %v1913 = vunpack.c.l.b16 %v437
  %v1914 = vunpack.c.h.b16 %v437
  %v1915 = vunpack.c.l.b16 %v438
  %v1916 = vunpack.c.h.b16 %v438
  %v1917 = vunpack.c.l.b16 %v439
  %v1918 = vunpack.c.h.b16 %v439
  %v1919 = vunpack.c.l.b16 %v440
  %v1920 = vunpack.c.h.b16 %v440
  %v1921 = vunpack.c.l.b16 %v441
  %v1922 = vunpack.c.h.b16 %v441
  %v1923 = vunpack.c.l.b16 %v442
  %v1924 = vunpack.c.h.b16 %v442
  %v1925 = vunpack.c.l.b16 %v443
  %v1926 = vunpack.c.h.b16 %v443
  %v1927 = vunpack.c.l.b16 %v444
  %v1928 = vunpack.c.h.b16 %v444
  %v1929 = vunpack.c.l.b16 %v445
  %v1930 = vunpack.c.h.b16 %v445
  %v1931 = vunpack.c.l.b16 %v446
  %v1932 = vunpack.c.h.b16 %v446
  %v1933 = vunpack.c.l.b16 %v447
  %v1934 = vunpack.c.h.b16 %v447
  %v1935 = vunpack.c.l.b16 %v448
  %v1936 = vunpack.c.h.b16 %v448
  %v1937 = vunpack.c.l.b16 %v449
  %v1938 = vunpack.c.h.b16 %v449
  %v1939 = vunpack.c.l.b16 %v450
  %v1940 = vunpack.c.h.b16 %v450
  %v1941 = vunpack.c.l.b16 %v451
  %v1942 = vunpack.c.h.b16 %v451
  %v1943 = vunpack.c.l.b16 %v452
  %v1944 = vunpack.c.h.b16 %v452
  %v1945 = vunpack.c.l.b16 %v453
  %v1946 = vunpack.c.h.b16 %v453
  %v1947 = vunpack.c.l.b16 %v454
  %v1948 = vunpack.c.h.b16 %v454
  %v1949 = vunpack.c.l.b16 %v455
  %v1950 = vunpack.c.h.b16 %v455
  %v1951 = vunpack.c.l.b16 %v456
  %v1952 = vunpack.c.h.b16 %v456
  %v1953 = vunpack.c.l.b16 %v457
  %v1954 = vunpack.c.h.b16 %v457
  %v1955 = vunpack.c.l.b16 %v458
  %v1956 = vunpack.c.h.b16 %v458
  %v1957 = vunpack.c.l.b16 %v459
  %v1958 = vunpack.c.h.b16 %v459
  %v1959 = vunpack.c.l.b16 %v460
  %v1960 = vunpack.c.h.b16 %v460
  %v1961 = vunpack.c.l.b16 %v461
  %v1962 = vunpack.c.h.b16 %v461
  %v1963 = vunpack.c.l.b16 %v462
  %v1964 = vunpack.c.h.b16 %v462
  %v1965 = vunpack.c.l.b16 %v463
  %v1966 = vunpack.c.h.b16 %v463
  %v1967 = vunpack.c.l.b16 %v464
  %v1968 = vunpack.c.h.b16 %v464
  %v1969 = vunpack.c.l.b16 %v465
  %v1970 = vunpack.c.h.b16 %v465
  %v1971 = vunpack.c.l.b16 %v466
  %v1972 = vunpack.c.h.b16 %v466
  %v1973 = vunpack.c.l.b16 %v467
  %v1974 = vunpack.c.h.b16 %v467
  %v1975 = vunpack.c.l.b16 %v468
  %v1976 = vunpack.c.h.b16 %v468
  %v1977 = vunpack.c.l.b16 %v469
  %v1978 = vunpack.c.h.b16 %v469
  %v1979 = vunpack.c.l.b16 %v470
  %v1980 = vunpack.c.h.b16 %v470
  %v1981 = vunpack.c.l.b16 %v471
  %v1982 = vunpack.c.h.b16 %v471
  %v1983 = vunpack.c.l.b16 %v472
  %v1984 = vunpack.c.h.b16 %v472
  %v1985 = vunpack.c.l.b16 %v473
  %v1986 = vunpack.c.h.b16 %v473
  %v1987 = vunpack.c.l.b16 %v474
  %v1988 = vunpack.c.h.b16 %v474
  %v1989 = vunpack.c.l.b16 %v475
  %v1990 = vunpack.c.h.b16 %v475
  %v1991 = vunpack.c.l.b16 %v476
  %v1992 = vunpack.c.h.b16 %v476
  %v1993 = vunpack.c.l.b16 %v477
  %v1994 = vunpack.c.h.b16 %v477
  %v1995 = vunpack.c.l.b16 %v478
  %v1996 = vunpack.c.h.b16 %v478
  %v1997 = vunpack.c.l.b16 %v479
  %v1998 = vunpack.c.h.b16 %v479
  %v1999 = vunpack.c.l.b16 %v480
  %v2000 = vunpack.c.h.b16 %v480
  %v2001 = vunpack.c.l.b16 %v481
  %v2002 = vunpack.c.h.b16 %v481
  %v2003 = vunpack.c.l.b16 %v482
  %v2004 = vunpack.c.h.b16 %v482
  %v2005 = vunpack.c.l.b16 %v483
  %v2006 = vunpack.c.h.b16 %v483
  %v2007 = vunpack.c.l.b16 %v484
  %v2008 = vunpack.c.h.b16 %v484
  %v2009 = vunpack.c.l.b16 %v485
  %v2010 = vunpack.c.h.b16 %v485
  %v2011 = vunpack.c.l.b16 %v486
  %v2012 = vunpack.c.h.b16 %v486
  %v2013 = vunpack.c.l.b16 %v487
  %v2014 = vunpack.c.h.b16 %v487
  %v2015 = vunpack.c.l.b16 %v488
  %v2016 = vunpack.c.h.b16 %v488
  %v2017 = vunpack.c.l.b16 %v489
  %v2018 = vunpack.c.h.b16 %v489
  %v2019 = vunpack.c.l.b16 %v490
  %v2020 = vunpack.c.h.b16 %v490
  %v2021 = vunpack.c.l.b16 %v491
  %v2022 = vunpack.c.h.b16 %v491
  %v2023 = vunpack.c.l.b16 %v492
  %v2024 = vunpack.c.h.b16 %v492
  %v2025 = vunpack.c.l.b16 %v493
  %v2026 = vunpack.c.h.b16 %v493
  %v2027 = vunpack.c.l.b16 %v494
  %v2028 = vunpack.c.h.b16 %v494
  %v2029 = vunpack.c.l.b16 %v495
  %v2030 = vunpack.c.h.b16 %v495
  %v2031 = vunpack.c.l.b16 %v496
  %v2032 = vunpack.c.h.b16 %v496
  %v2033 = vunpack.c.l.b16 %v497
  %v2034 = vunpack.c.h.b16 %v497
  %v2035 = vunpack.c.l.b16 %v498
  %v2036 = vunpack.c.h.b16 %v498
  %v2037 = vunpack.c.l.b16 %v499
  %v2038 = vunpack.c.h.b16 %v499
  %v2039 = vunpack.c.l.b16 %v500
  %v2040 = vunpack.c.h.b16 %v500
  %v2041 = vunpack.c.l.b16 %v501
  %v2042 = vunpack.c.h.b16 %v501
  %v2043 = vunpack.c.l.b16 %v502
  %v2044 = vunpack.c.h.b16 %v502
  %v2045 = vunpack.c.l.b16 %v503
  %v2046 = vunpack.c.h.b16 %v503
  %v2047 = vunpack.c.l.b16 %v504
  %v2048 = vunpack.c.h.b16 %v504
  %v2049 = vunpack.c.l.b16 %v505
  %v2050 = vunpack.c.h.b16 %v505
  %v2051 = vunpack.c.l.b16 %v506
  %v2052 = vunpack.c.h.b16 %v506
  %v2053 = vunpack.c.l.b16 %v507
  %v2054 = vunpack.c.h.b16 %v507
  %v2055 = vunpack.c.l.b16 %v508
  %v2056 = vunpack.c.h.b16 %v508
  %v2057 = vunpack.c.l.b16 %v509
  %v2058 = vunpack.c.h.b16 %v509
  %v2059 = vunpack.c.l.b16 %v510
  %v2060 = vunpack.c.h.b16 %v510
  %v2061 = vunpack.c.l.b16 %v511
  %v2062 = vunpack.c.h.b16 %v511
  %v2063 = vunpack.c.l.b16 %v512
  %v2064 = vunpack.c.h.b16 %v512
  %v2065 = vunpack.c.l.b16 %v513
  %v2066 = vunpack.c.h.b16 %v513
  %v2067 = vunpack.c.l.b16 %v514
  %v2068 = vunpack.c.h.b16 %v514
  %v2069 = vunpack.c.l.b16 %v515
  %v2070 = vunpack.c.h.b16 %v515
  %v2071 = vunpack.c.l.b16 %v516
  %v2072 = vunpack.c.h.b16 %v516
  %v2073 = vunpack.c.l.b16 %v517
  %v2074 = vunpack.c.h.b16 %v517
  %v2075 = vunpack.c.l.b16 %v518
  %v2076 = vunpack.c.h.b16 %v518
  %v2077 = vunpack.c.l.b16 %v519
  %v2078 = vunpack.c.h.b16 %v519
  %v2079 = vunpack.c.l.b16 %v520
  %v2080 = vunpack.c.h.b16 %v520
  %v2081 = vunpack.c.l.b16 %v521
  %v2082 = vunpack.c.h.b16 %v521
  %v2083 = vunpack.c.l.b16 %v522
  %v2084 = vunpack.c.h.b16 %v522
  %v2085 = vunpack.c.l.b16 %v523
  %v2086 = vunpack.c.h.b16 %v523
  %v2087 = vunpack.c.l.b16 %v524
  %v2088 = vunpack.c.h.b16 %v524
  %v2089 = vunpack.c.l.b16 %v525
  %v2090 = vunpack.c.h.b16 %v525
  %v2091 = vunpack.c.l.b16 %v526
  %v2092 = vunpack.c.h.b16 %v526
  %v2093 = vunpack.c.l.b16 %v527
  %v2094 = vunpack.c.h.b16 %v527
  %v2095 = vunpack.c.l.b16 %v528
  %v2096 = vunpack.c.h.b16 %v528
  %v2097 = vunpack.c.l.b16 %v529
  %v2098 = vunpack.c.h.b16 %v529
  %v2099 = vunpack.c.l.b16 %v530
  %v2100 = vunpack.c.h.b16 %v530
  %v2101 = vunpack.c.l.b16 %v531
  %v2102 = vunpack.c.h.b16 %v531
  %v2103 = vunpack.c.l.b16 %v532
  %v2104 = vunpack.c.h.b16 %v532
  %v2105 = vunpack.c.l.b16 %v533
  %v2106 = vunpack.c.h.b16 %v533
  %v2107 = vunpack.c.l.b16 %v534
  %v2108 = vunpack.c.h.b16 %v534
  %v2109 = vunpack.c.l.b16 %v535
  %v2110 = vunpack.c.h.b16 %v535
  %v2111 = vunpack.c.l.b16 %v536
  %v2112 = vunpack.c.h.b16 %v536
  %v2113 = vunpack.c.l.b16 %v537
  %v2114 = vunpack.c.h.b16 %v537
  %v2115 = vunpack.c.l.b16 %v538
  %v2116 = vunpack.c.h.b16 %v538
  %v2117 = vunpack.c.l.b16 %v539
  %v2118 = vunpack.c.h.b16 %v539
  %v2119 = vunpack.c.l.b16 %v540
  %v2120 = vunpack.c.h.b16 %v540
  %v2121 = vunpack.c.l.b16 %v541
  %v2122 = vunpack.c.h.b16 %v541
  %v2123 = vunpack.c.l.b16 %v542
  %v2124 = vunpack.c.h.b16 %v542
  %v2125 = vunpack.c.l.b16 %v543
  %v2126 = vunpack.c.h.b16 %v543
  %v2127 = vunpack.c.l.b16 %v544
  %v2128 = vunpack.c.h.b16 %v544
  %v2129 = vunpack.c.l.b16 %v545
  %v2130 = vunpack.c.h.b16 %v545
  %v2131 = vunpack.c.l.b16 %v546
  %v2132 = vunpack.c.h.b16 %v546
  %v2133 = vunpack.c.l.b16 %v547
  %v2134 = vunpack.c.h.b16 %v547
  %v2135 = vunpack.c.l.b16 %v548
  %v2136 = vunpack.c.h.b16 %v548
  %v2137 = vunpack.c.l.b16 %v549
  %v2138 = vunpack.c.h.b16 %v549
  %v2139 = vunpack.c.l.b16 %v550
  %v2140 = vunpack.c.h.b16 %v550
  %v2141 = vunpack.c.l.b16 %v551
  %v2142 = vunpack.c.h.b16 %v551
  %v2143 = vunpack.c.l.b16 %v552
  %v2144 = vunpack.c.h.b16 %v552
  %v2145 = vpack.c.b16 %v1125, %v1121
  %v2146 = vpack.c.b16 %v1126, %v1122
  %v2147 = vpack.c.b16 %v1127, %v1123
  %v2148 = vpack.c.b16 %v1128, %v1124
  %v2149 = vpack.c.b16 %v1133, %v1129
  %v2150 = vpack.c.b16 %v1134, %v1130
  %v2151 = vpack.c.b16 %v1135, %v1131
  %v2152 = vpack.c.b16 %v1136, %v1132
  %v2153 = vpack.c.b16 %v1141, %v1137
  %v2154 = vpack.c.b16 %v1142, %v1138
  %v2155 = vpack.c.b16 %v1143, %v1139
  %v2156 = vpack.c.b16 %v1144, %v1140
  %v2157 = vpack.c.b16 %v1149, %v1145
  %v2158 = vpack.c.b16 %v1150, %v1146
  %v2159 = vpack.c.b16 %v1151, %v1147
  %v2160 = vpack.c.b16 %v1152, %v1148
  %v2161 = vpack.c.b16 %v1157, %v1153
  %v2162 = vpack.c.b16 %v1158, %v1154
  %v2163 = vpack.c.b16 %v1159, %v1155
  %v2164 = vpack.c.b16 %v1160, %v1156
  %v2165 = vpack.c.b16 %v1165, %v1161
  %v2166 = vpack.c.b16 %v1166, %v1162
  %v2167 = vpack.c.b16 %v1167, %v1163
  %v2168 = vpack.c.b16 %v1168, %v1164
  %v2169 = vpack.c.b16 %v1173, %v1169
  %v2170 = vpack.c.b16 %v1174, %v1170
  %v2171 = vpack.c.b16 %v1175, %v1171
  %v2172 = vpack.c.b16 %v1176, %v1172
  %v2173 = vpack.c.b16 %v1181, %v1177
  %v2174 = vpack.c.b16 %v1182, %v1178
  %v2175 = vpack.c.b16 %v1183, %v1179
  %v2176 = vpack.c.b16 %v1184, %v1180
  %v2177 = vpack.c.b16 %v1189, %v1185
  %v2178 = vpack.c.b16 %v1190, %v1186
  %v2179 = vpack.c.b16 %v1191, %v1187
  %v2180 = vpack.c.b16 %v1192, %v1188
  %v2181 = vpack.c.b16 %v1197, %v1193
  %v2182 = vpack.c.b16 %v1198, %v1194
  %v2183 = vpack.c.b16 %v1199, %v1195
  %v2184 = vpack.c.b16 %v1200, %v1196
  %v2185 = vpack.c.b16 %v1205, %v1201
  %v2186 = vpack.c.b16 %v1206, %v1202
  %v2187 = vpack.c.b16 %v1207, %v1203
  %v2188 = vpack.c.b16 %v1208, %v1204
  %v2189 = vpack.c.b16 %v1213, %v1209
  %v2190 = vpack.c.b16 %v1214, %v1210
  %v2191 = vpack.c.b16 %v1215, %v1211
  %v2192 = vpack.c.b16 %v1216, %v1212
  %v2193 = vpack.c.b16 %v1221, %v1217
  %v2194 = vpack.c.b16 %v1222, %v1218
  %v2195 = vpack.c.b16 %v1223, %v1219
  %v2196 = vpack.c.b16 %v1224, %v1220
  %v2197 = vpack.c.b16 %v1229, %v1225
  %v2198 = vpack.c.b16 %v1230, %v1226
  %v2199 = vpack.c.b16 %v1231, %v1227
  %v2200 = vpack.c.b16 %v1232, %v1228
  %v2201 = vpack.c.b16 %v1237, %v1233
  %v2202 = vpack.c.b16 %v1238, %v1234
  %v2203 = vpack.c.b16 %v1239, %v1235
  %v2204 = vpack.c.b16 %v1240, %v1236
  %v2205 = vpack.c.b16 %v1245, %v1241
  %v2206 = vpack.c.b16 %v1246, %v1242
  %v2207 = vpack.c.b16 %v1247, %v1243
  %v2208 = vpack.c.b16 %v1248, %v1244
  %v2209 = vpack.c.b16 %v1253, %v1249
  %v2210 = vpack.c.b16 %v1254, %v1250
  %v2211 = vpack.c.b16 %v1255, %v1251
  %v2212 = vpack.c.b16 %v1256, %v1252
  %v2213 = vpack.c.b16 %v1261, %v1257
  %v2214 = vpack.c.b16 %v1262, %v1258
  %v2215 = vpack.c.b16 %v1263, %v1259
  %v2216 = vpack.c.b16 %v1264, %v1260
  %v2217 = vpack.c.b16 %v1269, %v1265
  %v2218 = vpack.c.b16 %v1270, %v1266
  %v2219 = vpack.c.b16 %v1271, %v1267
  %v2220 = vpack.c.b16 %v1272, %v1268
  %v2221 = vpack.c.b16 %v1277, %v1273
  %v2222 = vpack.c.b16 %v1278, %v1274
  %v2223 = vpack.c.b16 %v1279, %v1275
  %v2224 = vpack.c.b16 %v1280, %v1276
  %v2225 = vpack.c.b16 %v1285, %v1281
  %v2226 = vpack.c.b16 %v1286, %v1282
  %v2227 = vpack.c.b16 %v1287, %v1283
  %v2228 = vpack.c.b16 %v1288, %v1284
  %v2229 = vpack.c.b16 %v1293, %v1289
  %v2230 = vpack.c.b16 %v1294, %v1290
  %v2231 = vpack.c.b16 %v1295, %v1291
  %v2232 = vpack.c.b16 %v1296, %v1292
  %v2233 = vpack.c.b16 %v1301, %v1297
  %v2234 = vpack.c.b16 %v1302, %v1298
  %v2235 = vpack.c.b16 %v1303, %v1299
  %v2236 = vpack.c.b16 %v1304, %v1300
  %v2237 = vpack.c.b16 %v1309, %v1305
  %v2238 = vpack.c.b16 %v1310, %v1306
  %v2239 = vpack.c.b16 %v1311, %v1307
  %v2240 = vpack.c.b16 %v1312, %v1308
  %v2241 = vpack.c.b16 %v1317, %v1313
  %v2242 = vpack.c.b16 %v1318, %v1314
  %v2243 = vpack.c.b16 %v1319, %v1315
  %v2244 = vpack.c.b16 %v1320, %v1316
  %v2245 = vpack.c.b16 %v1325, %v1321
  %v2246 = vpack.c.b16 %v1326, %v1322
  %v2247 = vpack.c.b16 %v1327, %v1323
  %v2248 = vpack.c.b16 %v1328, %v1324
  %v2249 = vpack.c.b16 %v1333, %v1329
  %v2250 = vpack.c.b16 %v1334, %v1330
  %v2251 = vpack.c.b16 %v1335, %v1331
  %v2252 = vpack.c.b16 %v1336, %v1332
  %v2253 = vpack.c.b16 %v1341, %v1337
  %v2254 = vpack.c.b16 %v1342, %v1338
  %v2255 = vpack.c.b16 %v1343, %v1339
  %v2256 = vpack.c.b16 %v1344, %v1340
  %v2257 = vpack.c.b16 %v1349, %v1345
  %v2258 = vpack.c.b16 %v1350, %v1346
  %v2259 = vpack.c.b16 %v1351, %v1347
  %v2260 = vpack.c.b16 %v1352, %v1348
  %v2261 = vpack.c.b16 %v1357, %v1353
  %v2262 = vpack.c.b16 %v1358, %v1354
  %v2263 = vpack.c.b16 %v1359, %v1355
  %v2264 = vpack.c.b16 %v1360, %v1356
  %v2265 = vpack.c.b16 %v1365, %v1361
  %v2266 = vpack.c.b16 %v1366, %v1362
  %v2267 = vpack.c.b16 %v1367, %v1363
  %v2268 = vpack.c.b16 %v1368, %v1364
  %v2269 = vpack.c.b16 %v1373, %v1369
  %v2270 = vpack.c.b16 %v1374, %v1370
  %v2271 = vpack.c.b16 %v1375, %v1371
  %v2272 = vpack.c.b16 %v1376, %v1372
  %v2273 = vpack.c.b16 %v1381, %v1377
  %v2274 = vpack.c.b16 %v1382, %v1378
  %v2275 = vpack.c.b16 %v1383, %v1379
  %v2276 = vpack.c.b16 %v1384, %v1380
  %v2277 = vpack.c.b16 %v1389, %v1385
  %v2278 = vpack.c.b16 %v1390, %v1386
  %v2279 = vpack.c.b16 %v1391, %v1387
  %v2280 = vpack.c.b16 %v1392, %v1388
  %v2281 = vpack.c.b16 %v1397, %v1393
  %v2282 = vpack.c.b16 %v1398, %v1394
  %v2283 = vpack.c.b16 %v1399, %v1395
  %v2284 = vpack.c.b16 %v1400, %v1396
  %v2285 = vpack.c.b16 %v1405, %v1401
  %v2286 = vpack.c.b16 %v1406, %v1402
  %v2287 = vpack.c.b16 %v1407, %v1403
  %v2288 = vpack.c.b16 %v1408, %v1404
  %v2289 = vpack.c.b16 %v1413, %v1409
  %v2290 = vpack.c.b16 %v1414, %v1410
  %v2291 = vpack.c.b16 %v1415, %v1411
  %v2292 = vpack.c.b16 %v1416, %v1412
  %v2293 = vpack.c.b16 %v1421, %v1417
  %v2294 = vpack.c.b16 %v1422, %v1418
  %v2295 = vpack.c.b16 %v1423, %v1419
  %v2296 = vpack.c.b16 %v1424, %v1420
  %v2297 = vpack.c.b16 %v1429, %v1425
  %v2298 = vpack.c.b16 %v1430, %v1426
  %v2299 = vpack.c.b16 %v1431, %v1427
  %v2300 = vpack.c.b16 %v1432, %v1428
  %v2301 = vpack.c.b16 %v1437, %v1433
  %v2302 = vpack.c.b16 %v1438, %v1434
  %v2303 = vpack.c.b16 %v1439, %v1435
  %v2304 = vpack.c.b16 %v1440, %v1436
  %v2305 = vpack.c.b16 %v1445, %v1441
  %v2306 = vpack.c.b16 %v1446, %v1442
  %v2307 = vpack.c.b16 %v1447, %v1443
  %v2308 = vpack.c.b16 %v1448, %v1444
  %v2309 = vpack.c.b16 %v1453, %v1449
  %v2310 = vpack.c.b16 %v1454, %v1450
  %v2311 = vpack.c.b16 %v1455, %v1451
  %v2312 = vpack.c.b16 %v1456, %v1452
  %v2313 = vpack.c.b16 %v1461, %v1457
  %v2314 = vpack.c.b16 %v1462, %v1458
  %v2315 = vpack.c.b16 %v1463, %v1459
  %v2316 = vpack.c.b16 %v1464, %v1460
  %v2317 = vpack.c.b16 %v1469, %v1465
  %v2318 = vpack.c.b16 %v1470, %v1466
  %v2319 = vpack.c.b16 %v1471, %v1467
  %v2320 = vpack.c.b16 %v1472, %v1468
  %v2321 = vpack.c.b16 %v1477, %v1473
  %v2322 = vpack.c.b16 %v1478, %v1474
  %v2323 = vpack.c.b16 %v1479, %v1475
  %v2324 = vpack.c.b16 %v1480, %v1476
  %v2325 = vpack.c.b16 %v1485, %v1481
  %v2326 = vpack.c.b16 %v1486, %v1482
  %v2327 = vpack.c.b16 %v1487, %v1483
  %v2328 = vpack.c.b16 %v1488, %v1484
  %v2329 = vpack.c.b16 %v1493, %v1489
  %v2330 = vpack.c.b16 %v1494, %v1490
  %v2331 = vpack.c.b16 %v1495, %v1491
  %v2332 = vpack.c.b16 %v1496, %v1492
  %v2333 = vpack.c.b16 %v1501, %v1497
  %v2334 = vpack.c.b16 %v1502, %v1498
  %v2335 = vpack.c.b16 %v1503, %v1499
  %v2336 = vpack.c.b16 %v1504, %v1500
  %v2337 = vpack.c.b16 %v1509, %v1505
  %v2338 = vpack.c.b16 %v1510, %v1506
  %v2339 = vpack.c.b16 %v1511, %v1507
  %v2340 = vpack.c.b16 %v1512, %v1508
  %v2341 = vpack.c.b16 %v1517, %v1513
  %v2342 = vpack.c.b16 %v1518, %v1514
  %v2343 = vpack.c.b16 %v1519, %v1515
  %v2344 = vpack.c.b16 %v1520, %v1516
  %v2345 = vpack.c.b16 %v1525, %v1521
  %v2346 = vpack.c.b16 %v1526, %v1522
  %v2347 = vpack.c.b16 %v1527, %v1523
  %v2348 = vpack.c.b16 %v1528, %v1524
  %v2349 = vpack.c.b16 %v1533, %v1529
  %v2350 = vpack.c.b16 %v1534, %v1530
  %v2351 = vpack.c.b16 %v1535, %v1531
  %v2352 = vpack.c.b16 %v1536, %v1532
  %v2353 = vpack.c.b16 %v1541, %v1537
  %v2354 = vpack.c.b16 %v1542, %v1538
  %v2355 = vpack.c.b16 %v1543, %v1539
  %v2356 = vpack.c.b16 %v1544, %v1540
  %v2357 = vpack.c.b16 %v1549, %v1545
  %v2358 = vpack.c.b16 %v1550, %v1546
  %v2359 = vpack.c.b16 %v1551, %v1547
  %v2360 = vpack.c.b16 %v1552, %v1548
  %v2361 = vpack.c.b16 %v1557, %v1553
  %v2362 = vpack.c.b16 %v1558, %v1554
  %v2363 = vpack.c.b16 %v1559, %v1555
  %v2364 = vpack.c.b16 %v1560, %v1556
  %v2365 = vpack.c.b16 %v1565, %v1561
  %v2366 = vpack.c.b16 %v1566, %v1562
  %v2367 = vpack.c.b16 %v1567, %v1563
  %v2368 = vpack.c.b16 %v1568, %v1564
  %v2369 = vpack.c.b16 %v1573, %v1569
  %v2370 = vpack.c.b16 %v1574, %v1570
  %v2371 = vpack.c.b16 %v1575, %v1571
  %v2372 = vpack.c.b16 %v1576, %v1572
  %v2373 = vpack.c.b16 %v1581, %v1577
  %v2374 = vpack.c.b16 %v1582, %v1578
  %v2375 = vpack.c.b16 %v1583, %v1579
  %v2376 = vpack.c.b16 %v1584, %v1580
  %v2377 = vpack.c.b16 %v1589, %v1585
  %v2378 = vpack.c.b16 %v1590, %v1586
  %v2379 = vpack.c.b16 %v1591, %v1587
  %v2380 = vpack.c.b16 %v1592, %v1588
  %v2381 = vpack.c.b16 %v1597, %v1593
  %v2382 = vpack.c.b16 %v1598, %v1594
  %v2383 = vpack.c.b16 %v1599, %v1595
  %v2384 = vpack.c.b16 %v1600, %v1596
  %v2385 = vpack.c.b16 %v1605, %v1601
  %v2386 = vpack.c.b16 %v1606, %v1602
  %v2387 = vpack.c.b16 %v1607, %v1603
  %v2388 = vpack.c.b16 %v1608, %v1604
  %v2389 = vpack.c.b16 %v1613, %v1609
  %v2390 = vpack.c.b16 %v1614, %v1610
  %v2391 = vpack.c.b16 %v1615, %v1611
  %v2392 = vpack.c.b16 %v1616, %v1612
  %v2393 = vpack.c.b16 %v1621, %v1617
  %v2394 = vpack.c.b16 %v1622, %v1618
  %v2395 = vpack.c.b16 %v1623, %v1619
  %v2396 = vpack.c.b16 %v1624, %v1620
  %v2397 = vpack.c.b16 %v1629, %v1625
  %v2398 = vpack.c.b16 %v1630, %v1626
  %v2399 = vpack.c.b16 %v1631, %v1627
  %v2400 = vpack.c.b16 %v1632, %v1628
  %v2401 = vpack.c.b16 %v1637, %v1633
  %v2402 = vpack.c.b16 %v1638, %v1634
  %v2403 = vpack.c.b16 %v1639, %v1635
  %v2404 = vpack.c.b16 %v1640, %v1636
  %v2405 = vpack.c.b16 %v1645, %v1641
  %v2406 = vpack.c.b16 %v1646, %v1642
  %v2407 = vpack.c.b16 %v1647, %v1643
  %v2408 = vpack.c.b16 %v1648, %v1644
  %v2409 = vpack.c.b16 %v1653, %v1649
  %v2410 = vpack.c.b16 %v1654, %v1650
  %v2411 = vpack.c.b16 %v1655, %v1651
  %v2412 = vpack.c.b16 %v1656, %v1652
  %v2413 = vpack.c.b16 %v1661, %v1657
  %v2414 = vpack.c.b16 %v1662, %v1658
  %v2415 = vpack.c.b16 %v1663, %v1659
  %v2416 = vpack.c.b16 %v1664, %v1660
  %v2417 = vpack.c.b16 %v1669, %v1665
  %v2418 = vpack.c.b16 %v1670, %v1666
  %v2419 = vpack.c.b16 %v1671, %v1667
  %v2420 = vpack.c.b16 %v1672, %v1668
  %v2421 = vpack.c.b16 %v1677, %v1673
  %v2422 = vpack.c.b16 %v1678, %v1674
  %v2423 = vpack.c.b16 %v1679, %v1675
  %v2424 = vpack.c.b16 %v1680, %v1676
  %v2425 = vpack.c.b16 %v1685, %v1681
  %v2426 = vpack.c.b16 %v1686, %v1682
  %v2427 = vpack.c.b16 %v1687, %v1683
  %v2428 = vpack.c.b16 %v1688, %v1684
  %v2429 = vpack.c.b16 %v1693, %v1689
  %v2430 = vpack.c.b16 %v1694, %v1690
  %v2431 = vpack.c.b16 %v1695, %v1691
  %v2432 = vpack.c.b16 %v1696, %v1692
  %v2433 = vpack.c.b16 %v1701, %v1697
  %v2434 = vpack.c.b16 %v1702, %v1698
  %v2435 = vpack.c.b16 %v1703, %v1699
  %v2436 = vpack.c.b16 %v1704, %v1700
  %v2437 = vpack.c.b16 %v1709, %v1705
  %v2438 = vpack.c.b16 %v1710, %v1706
  %v2439 = vpack.c.b16 %v1711, %v1707
  %v2440 = vpack.c.b16 %v1712, %v1708
  %v2441 = vpack.c.b16 %v1717, %v1713
  %v2442 = vpack.c.b16 %v1718, %v1714
  %v2443 = vpack.c.b16 %v1719, %v1715
  %v2444 = vpack.c.b16 %v1720, %v1716
  %v2445 = vpack.c.b16 %v1725, %v1721
  %v2446 = vpack.c.b16 %v1726, %v1722
  %v2447 = vpack.c.b16 %v1727, %v1723
  %v2448 = vpack.c.b16 %v1728, %v1724
  %v2449 = vpack.c.b16 %v1733, %v1729
  %v2450 = vpack.c.b16 %v1734, %v1730
  %v2451 = vpack.c.b16 %v1735, %v1731
  %v2452 = vpack.c.b16 %v1736, %v1732
  %v2453 = vpack.c.b16 %v1741, %v1737
  %v2454 = vpack.c.b16 %v1742, %v1738
  %v2455 = vpack.c.b16 %v1743, %v1739
  %v2456 = vpack.c.b16 %v1744, %v1740
  %v2457 = vpack.c.b16 %v1749, %v1745
  %v2458 = vpack.c.b16 %v1750, %v1746
  %v2459 = vpack.c.b16 %v1751, %v1747
  %v2460 = vpack.c.b16 %v1752, %v1748
  %v2461 = vpack.c.b16 %v1757, %v1753
  %v2462 = vpack.c.b16 %v1758, %v1754
  %v2463 = vpack.c.b16 %v1759, %v1755
  %v2464 = vpack.c.b16 %v1760, %v1756
  %v2465 = vpack.c.b16 %v1765, %v1761
  %v2466 = vpack.c.b16 %v1766, %v1762
  %v2467 = vpack.c.b16 %v1767, %v1763
  %v2468 = vpack.c.b16 %v1768, %v1764
  %v2469 = vpack.c.b16 %v1773, %v1769
  %v2470 = vpack.c.b16 %v1774, %v1770
  %v2471 = vpack.c.b16 %v1775, %v1771
  %v2472 = vpack.c.b16 %v1776, %v1772
  %v2473 = vpack.c.b16 %v1781, %v1777
  %v2474 = vpack.c.b16 %v1782, %v1778
  %v2475 = vpack.c.b16 %v1783, %v1779
  %v2476 = vpack.c.b16 %v1784, %v1780
  %v2477 = vpack.c.b16 %v1789, %v1785
  %v2478 = vpack.c.b16 %v1790, %v1786
  %v2479 = vpack.c.b16 %v1791, %v1787
  %v2480 = vpack.c.b16 %v1792, %v1788
  %v2481 = vpack.c.b16 %v1797, %v1793
  %v2482 = vpack.c.b16 %v1798, %v1794
  %v2483 = vpack.c.b16 %v1799, %v1795
  %v2484 = vpack.c.b16 %v1800, %v1796
  %v2485 = vpack.c.b16 %v1805, %v1801
  %v2486 = vpack.c.b16 %v1806, %v1802
  %v2487 = vpack.c.b16 %v1807, %v1803
  %v2488 = vpack.c.b16 %v1808, %v1804
  %v2489 = vpack.c.b16 %v1813, %v1809
  %v2490 = vpack.c.b16 %v1814, %v1810
  %v2491 = vpack.c.b16 %v1815, %v1811
  %v2492 = vpack.c.b16 %v1816, %v1812
  %v2493 = vpack.c.b16 %v1821, %v1817
  %v2494 = vpack.c.b16 %v1822, %v1818
  %v2495 = vpack.c.b16 %v1823, %v1819
  %v2496 = vpack.c.b16 %v1824, %v1820
  %v2497 = vpack.c.b16 %v1829, %v1825
  %v2498 = vpack.c.b16 %v1830, %v1826
  %v2499 = vpack.c.b16 %v1831, %v1827
  %v2500 = vpack.c.b16 %v1832, %v1828
  %v2501 = vpack.c.b16 %v1837, %v1833
  %v2502 = vpack.c.b16 %v1838, %v1834
  %v2503 = vpack.c.b16 %v1839, %v1835
  %v2504 = vpack.c.b16 %v1840, %v1836
  %v2505 = vpack.c.b16 %v1845, %v1841
  %v2506 = vpack.c.b16 %v1846, %v1842
  %v2507 = vpack.c.b16 %v1847, %v1843
  %v2508 = vpack.c.b16 %v1848, %v1844
  %v2509 = vpack.c.b16 %v1853, %v1849
  %v2510 = vpack.c.b16 %v1854, %v1850
  %v2511 = vpack.c.b16 %v1855, %v1851
  %v2512 = vpack.c.b16 %v1856, %v1852
  %v2513 = vpack.c.b16 %v1861, %v1857
  %v2514 = vpack.c.b16 %v1862, %v1858
  %v2515 = vpack.c.b16 %v1863, %v1859
  %v2516 = vpack.c.b16 %v1864, %v1860
  %v2517 = vpack.c.b16 %v1869, %v1865
  %v2518 = vpack.c.b16 %v1870, %v1866
  %v2519 = vpack.c.b16 %v1871, %v1867
  %v2520 = vpack.c.b16 %v1872, %v1868
  %v2521 = vpack.c.b16 %v1877, %v1873
  %v2522 = vpack.c.b16 %v1878, %v1874
  %v2523 = vpack.c.b16 %v1879, %v1875
  %v2524 = vpack.c.b16 %v1880, %v1876
  %v2525 = vpack.c.b16 %v1885, %v1881
  %v2526 = vpack.c.b16 %v1886, %v1882
  %v2527 = vpack.c.b16 %v1887, %v1883
  %v2528 = vpack.c.b16 %v1888, %v1884
  %v2529 = vpack.c.b16 %v1893, %v1889
  %v2530 = vpack.c.b16 %v1894, %v1890
  %v2531 = vpack.c.b16 %v1895, %v1891
  %v2532 = vpack.c.b16 %v1896, %v1892
  %v2533 = vpack.c.b16 %v1901, %v1897
  %v2534 = vpack.c.b16 %v1902, %v1898
  %v2535 = vpack.c.b16 %v1903, %v1899
  %v2536 = vpack.c.b16 %v1904, %v1900
  %v2537 = vpack.c.b16 %v1909, %v1905
  %v2538 = vpack.c.b16 %v1910, %v1906
  %v2539 = vpack.c.b16 %v1911, %v1907
  %v2540 = vpack.c.b16 %v1912, %v1908
  %v2541 = vpack.c.b16 %v1917, %v1913
  %v2542 = vpack.c.b16 %v1918, %v1914
  %v2543 = vpack.c.b16 %v1919, %v1915
  %v2544 = vpack.c.b16 %v1920, %v1916
  %v2545 = vpack.c.b16 %v1925, %v1921
  %v2546 = vpack.c.b16 %v1926, %v1922
  %v2547 = vpack.c.b16 %v1927, %v1923
  %v2548 = vpack.c.b16 %v1928, %v1924
  %v2549 = vpack.c.b16 %v1933, %v1929
  %v2550 = vpack.c.b16 %v1934, %v1930
  %v2551 = vpack.c.b16 %v1935, %v1931
  %v2552 = vpack.c.b16 %v1936, %v1932
  %v2553 = vpack.c.b16 %v1941, %v1937
  %v2554 = vpack.c.b16 %v1942, %v1938
  %v2555 = vpack.c.b16 %v1943, %v1939
  %v2556 = vpack.c.b16 %v1944, %v1940
  %v2557 = vpack.c.b16 %v1949, %v1945
  %v2558 = vpack.c.b16 %v1950, %v1946
  %v2559 = vpack.c.b16 %v1951, %v1947
  %v2560 = vpack.c.b16 %v1952, %v1948
  %v2561 = vpack.c.b16 %v1957, %v1953
  %v2562 = vpack.c.b16 %v1958, %v1954
  %v2563 = vpack.c.b16 %v1959, %v1955
  %v2564 = vpack.c.b16 %v1960, %v1956
  %v2565 = vpack.c.b16 %v1965, %v1961
  %v2566 = vpack.c.b16 %v1966, %v1962
  %v2567 = vpack.c.b16 %v1967, %v1963
  %v2568 = vpack.c.b16 %v1968, %v1964
  %v2569 = vpack.c.b16 %v1973, %v1969
  %v2570 = vpack.c.b16 %v1974, %v1970
  %v2571 = vpack.c.b16 %v1975, %v1971
  %v2572 = vpack.c.b16 %v1976, %v1972
  %v2573 = vpack.c.b16 %v1981, %v1977
  %v2574 = vpack.c.b16 %v1982, %v1978
  %v2575 = vpack.c.b16 %v1983, %v1979
  %v2576 = vpack.c.b16 %v1984, %v1980
  %v2577 = vpack.c.b16 %v1989, %v1985
  %v2578 = vpack.c.b16 %v1990, %v1986
  %v2579 = vpack.c.b16 %v1991, %v1987
  %v2580 = vpack.c.b16 %v1992, %v1988
  %v2581 = vpack.c.b16 %v1997, %v1993
  %v2582 = vpack.c.b16 %v1998, %v1994
  %v2583 = vpack.c.b16 %v1999, %v1995
  %v2584 = vpack.c.b16 %v2000, %v1996
  %v2585 = vpack.c.b16 %v2005, %v2001
  %v2586 = vpack.c.b16 %v2006, %v2002
  %v2587 = vpack.c.b16 %v2007, %v2003
  %v2588 = vpack.c.b16 %v2008, %v2004
  %v2589 = vpack.c.b16 %v2013, %v2009
  %v2590 = vpack.c.b16 %v2014, %v2010
  %v2591 = vpack.c.b16 %v2015, %v2011
  %v2592 = vpack.c.b16 %v2016, %v2012
  %v2593 = vpack.c.b16 %v2021, %v2017
  %v2594 = vpack.c.b16 %v2022, %v2018
  %v2595 = vpack.c.b16 %v2023, %v2019
  %v2596 = vpack.c.b16 %v2024, %v2020
  %v2597 = vpack.c.b16 %v2029, %v2025
  %v2598 = vpack.c.b16 %v2030, %v2026
  %v2599 = vpack.c.b16 %v2031, %v2027
  %v2600 = vpack.c.b16 %v2032, %v2028
  %v2601 = vpack.c.b16 %v2037, %v2033
  %v2602 = vpack.c.b16 %v2038, %v2034
  %v2603 = vpack.c.b16 %v2039, %v2035
  %v2604 = vpack.c.b16 %v2040, %v2036
  %v2605 = vpack.c.b16 %v2045, %v2041
  %v2606 = vpack.c.b16 %v2046, %v2042
  %v2607 = vpack.c.b16 %v2047, %v2043
  %v2608 = vpack.c.b16 %v2048, %v2044
  %v2609 = vpack.c.b16 %v2053, %v2049
  %v2610 = vpack.c.b16 %v2054, %v2050
  %v2611 = vpack.c.b16 %v2055, %v2051
  %v2612 = vpack.c.b16 %v2056, %v2052
  %v2613 = vpack.c.b16 %v2061, %v2057
  %v2614 = vpack.c.b16 %v2062, %v2058
  %v2615 = vpack.c.b16 %v2063, %v2059
  %v2616 = vpack.c.b16 %v2064, %v2060
  %v2617 = vpack.c.b16 %v2069, %v2065
  %v2618 = vpack.c.b16 %v2070, %v2066
  %v2619 = vpack.c.b16 %v2071, %v2067
  %v2620 = vpack.c.b16 %v2072, %v2068
  %v2621 = vpack.c.b16 %v2077, %v2073
  %v2622 = vpack.c.b16 %v2078, %v2074
  %v2623 = vpack.c.b16 %v2079, %v2075
  %v2624 = vpack.c.b16 %v2080, %v2076
  %v2625 = vpack.c.b16 %v2085, %v2081
  %v2626 = vpack.c.b16 %v2086, %v2082
  %v2627 = vpack.c.b16 %v2087, %v2083
  %v2628 = vpack.c.b16 %v2088, %v2084
  %v2629 = vpack.c.b16 %v2093, %v2089
  %v2630 = vpack.c.b16 %v2094, %v2090
  %v2631 = vpack.c.b16 %v2095, %v2091
  %v2632 = vpack.c.b16 %v2096, %v2092
  %v2633 = vpack.c.b16 %v2101, %v2097
  %v2634 = vpack.c.b16 %v2102, %v2098
  %v2635 = vpack.c.b16 %v2103, %v2099
  %v2636 = vpack.c.b16 %v2104, %v2100
  %v2637 = vpack.c.b16 %v2109, %v2105
  %v2638 = vpack.c.b16 %v2110, %v2106
  %v2639 = vpack.c.b16 %v2111, %v2107
  %v2640 = vpack.c.b16 %v2112, %v2108
  %v2641 = vpack.c.b16 %v2117, %v2113
  %v2642 = vpack.c.b16 %v2118, %v2114
  %v2643 = vpack.c.b16 %v2119, %v2115
  %v2644 = vpack.c.b16 %v2120, %v2116
  %v2645 = vpack.c.b16 %v2125, %v2121
  %v2646 = vpack.c.b16 %v2126, %v2122
  %v2647 = vpack.c.b16 %v2127, %v2123
  %v2648 = vpack.c.b16 %v2128, %v2124
  %v2649 = vpack.c.b16 %v2133, %v2129
  %v2650 = vpack.c.b16 %v2134, %v2130
  %v2651 = vpack.c.b16 %v2135, %v2131
  %v2652 = vpack.c.b16 %v2136, %v2132
  %v2653 = vpack.c.b16 %v2141, %v2137
  %v2654 = vpack.c.b16 %v2142, %v2138
  %v2655 = vpack.c.b16 %v2143, %v2139
  %v2656 = vpack.c.b16 %v2144, %v2140
  %3169 = vmatprep.subr.bf16.mxu0 %v2174
  %3170 = vmatpush1.bf16.msra.mxu0 %v2173
  %3171 = vmatprep.subr.bf16.mxu0 %v2170
  %3172 = vmatpush1.bf16.msra.mxu0 %v2169
  %3173 = vmatprep.subr.bf16.mxu0 %v2166
  %3174 = vmatpush1.bf16.msra.mxu0 %v2165
  %3175 = vmatprep.subr.bf16.mxu0 %v2162
  %3176 = vmatpush1.bf16.msra.mxu0 %v2161
  %3177 = vmatprep.subr.bf16.mxu0 %v2158
  %3178 = vmatpush1.bf16.msra.mxu0 %v2157
  %3179 = vmatprep.subr.bf16.mxu0 %v2154
  %3180 = vmatpush1.bf16.msra.mxu0 %v2153
  %3181 = vmatprep.subr.bf16.mxu0 %v2150
  %3182 = vmatpush1.bf16.msra.mxu0 %v2149
  %3183 = vmatprep.subr.bf16.mxu0 %v2146
  %3184 = vmatpush1.bf16.msra.mxu0 %v2145
  %3185 = vmatprep.subr.bf16.mxu0 %v2206
  %3186 = vmatpush2.bf16.msra.mxu0 %v2205
  %3187 = vmatprep.subr.bf16.mxu0 %v2202
  %3188 = vmatpush2.bf16.msra.mxu0 %v2201
  %3189 = vmatprep.subr.bf16.mxu0 %v2198
  %3190 = vmatpush2.bf16.msra.mxu0 %v2197
  %3191 = vmatprep.subr.bf16.mxu0 %v2194
  %3192 = vmatpush2.bf16.msra.mxu0 %v2193
  %3193 = vmatprep.subr.bf16.mxu0 %v2190
  %3194 = vmatpush2.bf16.msra.mxu0 %v2189
  %3195 = vmatprep.subr.bf16.mxu0 %v2186
  %3196 = vmatpush2.bf16.msra.mxu0 %v2185
  %3197 = vmatprep.subr.bf16.mxu0 %v2182
  %3198 = vmatpush2.bf16.msra.mxu0 %v2181
  %3199 = vmatprep.subr.bf16.mxu0 %v2178
  %3200 = vmatpush2.bf16.msra.mxu0 %v2177
  %3201 = vmatprep.mubr.bf16.mxu0 %v578
  %3202 = vmatmul.mubr.bf16.gmra.mxu0 %v577
  %v3203 = vpop.f32.mrf.mxu0
  %v3204 = vadd.f32 0.0, %v3203
  %v3205 = vpop.f32.mrf.mxu0
  %v3206 = vadd.f32 0.0, %v3205
  %v3207 = vpop.f32.mrf.mxu0
  %v3208 = vpop.f32.mrf.mxu0
  %3209 = vdwg.mxu0
  %3210 = vmatprep.subr.bf16.mxu0 %v2238
  %3211 = vmatpush1.bf16.msra.mxu0 %v2237
  %3212 = vmatprep.subr.bf16.mxu0 %v2234
  %3213 = vmatpush1.bf16.msra.mxu0 %v2233
  %3214 = vmatprep.subr.bf16.mxu0 %v2230
  %3215 = vmatpush1.bf16.msra.mxu0 %v2229
  %3216 = vmatprep.subr.bf16.mxu0 %v2226
  %3217 = vmatpush1.bf16.msra.mxu0 %v2225
  %3218 = vmatprep.subr.bf16.mxu0 %v2222
  %3219 = vmatpush1.bf16.msra.mxu0 %v2221
  %3220 = vmatprep.subr.bf16.mxu0 %v2218
  %3221 = vmatpush1.bf16.msra.mxu0 %v2217
  %3222 = vmatprep.subr.bf16.mxu0 %v2214
  %3223 = vmatpush1.bf16.msra.mxu0 %v2213
  %3224 = vmatprep.subr.bf16.mxu0 %v2210
  %3225 = vmatpush1.bf16.msra.mxu0 %v2209
  %3226 = vmatprep.subr.bf16.mxu0 %v2270
  %3227 = vmatpush2.bf16.msra.mxu0 %v2269
  %3228 = vmatprep.subr.bf16.mxu0 %v2266
  %3229 = vmatpush2.bf16.msra.mxu0 %v2265
  %3230 = vmatprep.subr.bf16.mxu0 %v2262
  %3231 = vmatpush2.bf16.msra.mxu0 %v2261
  %3232 = vmatprep.subr.bf16.mxu0 %v2258
  %3233 = vmatpush2.bf16.msra.mxu0 %v2257
  %3234 = vmatprep.subr.bf16.mxu0 %v2254
  %3235 = vmatpush2.bf16.msra.mxu0 %v2253
  %3236 = vmatprep.subr.bf16.mxu0 %v2250
  %3237 = vmatpush2.bf16.msra.mxu0 %v2249
  %3238 = vmatprep.subr.bf16.mxu0 %v2246
  %3239 = vmatpush2.bf16.msra.mxu0 %v2245
  %3240 = vmatprep.subr.bf16.mxu0 %v2242
  %3241 = vmatpush2.bf16.msra.mxu0 %v2241
  %3242 = vmatprep.mubr.bf16.mxu0 %v580
  %3243 = vmatmul.mubr.bf16.gmra.mxu0 %v579
  %v3244 = vpop.f32.mrf.mxu0
  %v3245 = vadd.f32 %v3204, %v3244
  %v3246 = vpop.f32.mrf.mxu0
  %v3247 = vadd.f32 %v3206, %v3246
  %v3248 = vpop.f32.mrf.mxu0
  %v3249 = vpop.f32.mrf.mxu0
  %3250 = vdwg.mxu0
  %3251 = vmatprep.subr.bf16.mxu0 %v2302
  %3252 = vmatpush1.bf16.msra.mxu0 %v2301
  %3253 = vmatprep.subr.bf16.mxu0 %v2298
  %3254 = vmatpush1.bf16.msra.mxu0 %v2297
  %3255 = vmatprep.subr.bf16.mxu0 %v2294
  %3256 = vmatpush1.bf16.msra.mxu0 %v2293
  %3257 = vmatprep.subr.bf16.mxu0 %v2290
  %3258 = vmatpush1.bf16.msra.mxu0 %v2289
  %3259 = vmatprep.subr.bf16.mxu0 %v2286
  %3260 = vmatpush1.bf16.msra.mxu0 %v2285
  %3261 = vmatprep.subr.bf16.mxu0 %v2282
  %3262 = vmatpush1.bf16.msra.mxu0 %v2281
  %3263 = vmatprep.subr.bf16.mxu0 %v2278
  %3264 = vmatpush1.bf16.msra.mxu0 %v2277
  %3265 = vmatprep.subr.bf16.mxu0 %v2274
  %3266 = vmatpush1.bf16.msra.mxu0 %v2273
  %3267 = vmatprep.subr.bf16.mxu0 %v2334
  %3268 = vmatpush2.bf16.msra.mxu0 %v2333
  %3269 = vmatprep.subr.bf16.mxu0 %v2330
  %3270 = vmatpush2.bf16.msra.mxu0 %v2329
  %3271 = vmatprep.subr.bf16.mxu0 %v2326
  %3272 = vmatpush2.bf16.msra.mxu0 %v2325
  %3273 = vmatprep.subr.bf16.mxu0 %v2322
  %3274 = vmatpush2.bf16.msra.mxu0 %v2321
  %3275 = vmatprep.subr.bf16.mxu0 %v2318
  %3276 = vmatpush2.bf16.msra.mxu0 %v2317
  %3277 = vmatprep.subr.bf16.mxu0 %v2314
  %3278 = vmatpush2.bf16.msra.mxu0 %v2313
  %3279 = vmatprep.subr.bf16.mxu0 %v2310
  %3280 = vmatpush2.bf16.msra.mxu0 %v2309
  %3281 = vmatprep.subr.bf16.mxu0 %v2306
  %3282 = vmatpush2.bf16.msra.mxu0 %v2305
  %3283 = vmatprep.mubr.bf16.mxu0 %v582
  %3284 = vmatmul.mubr.bf16.gmra.mxu0 %v581
  %v3285 = vpop.f32.mrf.mxu0
  %v3286 = vadd.f32 %v3245, %v3285
  %v3287 = vpop.f32.mrf.mxu0
  %v3288 = vadd.f32 %v3247, %v3287
  %v3289 = vpop.f32.mrf.mxu0
  %v3290 = vpop.f32.mrf.mxu0
  %3291 = vdwg.mxu0
  %3292 = vmatprep.subr.bf16.mxu0 %v2366
  %3293 = vmatpush1.bf16.msra.mxu0 %v2365
  %3294 = vmatprep.subr.bf16.mxu0 %v2362
  %3295 = vmatpush1.bf16.msra.mxu0 %v2361
  %3296 = vmatprep.subr.bf16.mxu0 %v2358
  %3297 = vmatpush1.bf16.msra.mxu0 %v2357
  %3298 = vmatprep.subr.bf16.mxu0 %v2354
  %3299 = vmatpush1.bf16.msra.mxu0 %v2353
  %3300 = vmatprep.subr.bf16.mxu0 %v2350
  %3301 = vmatpush1.bf16.msra.mxu0 %v2349
  %3302 = vmatprep.subr.bf16.mxu0 %v2346
  %3303 = vmatpush1.bf16.msra.mxu0 %v2345
  %3304 = vmatprep.subr.bf16.mxu0 %v2342
  %3305 = vmatpush1.bf16.msra.mxu0 %v2341
  %3306 = vmatprep.subr.bf16.mxu0 %v2338
  %3307 = vmatpush1.bf16.msra.mxu0 %v2337
  %3308 = vmatprep.subr.bf16.mxu0 %v2398
  %3309 = vmatpush2.bf16.msra.mxu0 %v2397
  %3310 = vmatprep.subr.bf16.mxu0 %v2394
  %3311 = vmatpush2.bf16.msra.mxu0 %v2393
  %3312 = vmatprep.subr.bf16.mxu0 %v2390
  %3313 = vmatpush2.bf16.msra.mxu0 %v2389
  %3314 = vmatprep.subr.bf16.mxu0 %v2386
  %3315 = vmatpush2.bf16.msra.mxu0 %v2385
  %3316 = vmatprep.subr.bf16.mxu0 %v2382
  %3317 = vmatpush2.bf16.msra.mxu0 %v2381
  %3318 = vmatprep.subr.bf16.mxu0 %v2378
  %3319 = vmatpush2.bf16.msra.mxu0 %v2377
  %3320 = vmatprep.subr.bf16.mxu0 %v2374
  %3321 = vmatpush2.bf16.msra.mxu0 %v2373
  %3322 = vmatprep.subr.bf16.mxu0 %v2370
  %3323 = vmatpush2.bf16.msra.mxu0 %v2369
  %3324 = vmatprep.mubr.bf16.mxu0 %v584
  %3325 = vmatmul.mubr.bf16.gmra.mxu0 %v583
  %v3326 = vpop.f32.mrf.mxu0
  %v3327 = vadd.f32 %v3286, %v3326
  %v3328 = vpop.f32.mrf.mxu0
  %v3329 = vadd.f32 %v3288, %v3328
  %v3330 = vpop.f32.mrf.mxu0
  %v3331 = vpop.f32.mrf.mxu0
  %3332 = vdwg.mxu0
  %3333 = vmatprep.subr.bf16.mxu0 %v2430
  %3334 = vmatpush1.bf16.msra.mxu0 %v2429
  %3335 = vmatprep.subr.bf16.mxu0 %v2426
  %3336 = vmatpush1.bf16.msra.mxu0 %v2425
  %3337 = vmatprep.subr.bf16.mxu0 %v2422
  %3338 = vmatpush1.bf16.msra.mxu0 %v2421
  %3339 = vmatprep.subr.bf16.mxu0 %v2418
  %3340 = vmatpush1.bf16.msra.mxu0 %v2417
  %3341 = vmatprep.subr.bf16.mxu0 %v2414
  %3342 = vmatpush1.bf16.msra.mxu0 %v2413
  %3343 = vmatprep.subr.bf16.mxu0 %v2410
  %3344 = vmatpush1.bf16.msra.mxu0 %v2409
  %3345 = vmatprep.subr.bf16.mxu0 %v2406
  %3346 = vmatpush1.bf16.msra.mxu0 %v2405
  %3347 = vmatprep.subr.bf16.mxu0 %v2402
  %3348 = vmatpush1.bf16.msra.mxu0 %v2401
  %3349 = vmatprep.subr.bf16.mxu0 %v2462
  %3350 = vmatpush2.bf16.msra.mxu0 %v2461
  %3351 = vmatprep.subr.bf16.mxu0 %v2458
  %3352 = vmatpush2.bf16.msra.mxu0 %v2457
  %3353 = vmatprep.subr.bf16.mxu0 %v2454
  %3354 = vmatpush2.bf16.msra.mxu0 %v2453
  %3355 = vmatprep.subr.bf16.mxu0 %v2450
  %3356 = vmatpush2.bf16.msra.mxu0 %v2449
  %3357 = vmatprep.subr.bf16.mxu0 %v2446
  %3358 = vmatpush2.bf16.msra.mxu0 %v2445
  %3359 = vmatprep.subr.bf16.mxu0 %v2442
  %3360 = vmatpush2.bf16.msra.mxu0 %v2441
  %3361 = vmatprep.subr.bf16.mxu0 %v2438
  %3362 = vmatpush2.bf16.msra.mxu0 %v2437
  %3363 = vmatprep.subr.bf16.mxu0 %v2434
  %3364 = vmatpush2.bf16.msra.mxu0 %v2433
  %3365 = vmatprep.mubr.bf16.mxu0 %v586
  %3366 = vmatmul.mubr.bf16.gmra.mxu0 %v585
  %v3367 = vpop.f32.mrf.mxu0
  %v3368 = vadd.f32 %v3327, %v3367
  %v3369 = vpop.f32.mrf.mxu0
  %v3370 = vadd.f32 %v3329, %v3369
  %v3371 = vpop.f32.mrf.mxu0
  %v3372 = vpop.f32.mrf.mxu0
  %3373 = vdwg.mxu0
  %3374 = vmatprep.subr.bf16.mxu0 %v2494
  %3375 = vmatpush1.bf16.msra.mxu0 %v2493
  %3376 = vmatprep.subr.bf16.mxu0 %v2490
  %3377 = vmatpush1.bf16.msra.mxu0 %v2489
  %3378 = vmatprep.subr.bf16.mxu0 %v2486
  %3379 = vmatpush1.bf16.msra.mxu0 %v2485
  %3380 = vmatprep.subr.bf16.mxu0 %v2482
  %3381 = vmatpush1.bf16.msra.mxu0 %v2481
  %3382 = vmatprep.subr.bf16.mxu0 %v2478
  %3383 = vmatpush1.bf16.msra.mxu0 %v2477
  %3384 = vmatprep.subr.bf16.mxu0 %v2474
  %3385 = vmatpush1.bf16.msra.mxu0 %v2473
  %3386 = vmatprep.subr.bf16.mxu0 %v2470
  %3387 = vmatpush1.bf16.msra.mxu0 %v2469
  %3388 = vmatprep.subr.bf16.mxu0 %v2466
  %3389 = vmatpush1.bf16.msra.mxu0 %v2465
  %3390 = vmatprep.subr.bf16.mxu0 %v2526
  %3391 = vmatpush2.bf16.msra.mxu0 %v2525
  %3392 = vmatprep.subr.bf16.mxu0 %v2522
  %3393 = vmatpush2.bf16.msra.mxu0 %v2521
  %3394 = vmatprep.subr.bf16.mxu0 %v2518
  %3395 = vmatpush2.bf16.msra.mxu0 %v2517
  %3396 = vmatprep.subr.bf16.mxu0 %v2514
  %3397 = vmatpush2.bf16.msra.mxu0 %v2513
  %3398 = vmatprep.subr.bf16.mxu0 %v2510
  %3399 = vmatpush2.bf16.msra.mxu0 %v2509
  %3400 = vmatprep.subr.bf16.mxu0 %v2506
  %3401 = vmatpush2.bf16.msra.mxu0 %v2505
  %3402 = vmatprep.subr.bf16.mxu0 %v2502
  %3403 = vmatpush2.bf16.msra.mxu0 %v2501
  %3404 = vmatprep.subr.bf16.mxu0 %v2498
  %3405 = vmatpush2.bf16.msra.mxu0 %v2497
  %3406 = vmatprep.mubr.bf16.mxu0 %v588
  %3407 = vmatmul.mubr.bf16.gmra.mxu0 %v587
  %v3408 = vpop.f32.mrf.mxu0
  %v3409 = vadd.f32 %v3368, %v3408
  %v3410 = vpop.f32.mrf.mxu0
  %v3411 = vadd.f32 %v3370, %v3410
  %v3412 = vpop.f32.mrf.mxu0
  %v3413 = vpop.f32.mrf.mxu0
  %3414 = vdwg.mxu0
  %3415 = vmatprep.subr.bf16.mxu0 %v2558
  %3416 = vmatpush1.bf16.msra.mxu0 %v2557
  %3417 = vmatprep.subr.bf16.mxu0 %v2554
  %3418 = vmatpush1.bf16.msra.mxu0 %v2553
  %3419 = vmatprep.subr.bf16.mxu0 %v2550
  %3420 = vmatpush1.bf16.msra.mxu0 %v2549
  %3421 = vmatprep.subr.bf16.mxu0 %v2546
  %3422 = vmatpush1.bf16.msra.mxu0 %v2545
  %3423 = vmatprep.subr.bf16.mxu0 %v2542
  %3424 = vmatpush1.bf16.msra.mxu0 %v2541
  %3425 = vmatprep.subr.bf16.mxu0 %v2538
  %3426 = vmatpush1.bf16.msra.mxu0 %v2537
  %3427 = vmatprep.subr.bf16.mxu0 %v2534
  %3428 = vmatpush1.bf16.msra.mxu0 %v2533
  %3429 = vmatprep.subr.bf16.mxu0 %v2530
  %3430 = vmatpush1.bf16.msra.mxu0 %v2529
  %3431 = vmatprep.subr.bf16.mxu0 %v2590
  %3432 = vmatpush2.bf16.msra.mxu0 %v2589
  %3433 = vmatprep.subr.bf16.mxu0 %v2586
  %3434 = vmatpush2.bf16.msra.mxu0 %v2585
  %3435 = vmatprep.subr.bf16.mxu0 %v2582
  %3436 = vmatpush2.bf16.msra.mxu0 %v2581
  %3437 = vmatprep.subr.bf16.mxu0 %v2578
  %3438 = vmatpush2.bf16.msra.mxu0 %v2577
  %3439 = vmatprep.subr.bf16.mxu0 %v2574
  %3440 = vmatpush2.bf16.msra.mxu0 %v2573
  %3441 = vmatprep.subr.bf16.mxu0 %v2570
  %3442 = vmatpush2.bf16.msra.mxu0 %v2569
  %3443 = vmatprep.subr.bf16.mxu0 %v2566
  %3444 = vmatpush2.bf16.msra.mxu0 %v2565
  %3445 = vmatprep.subr.bf16.mxu0 %v2562
  %3446 = vmatpush2.bf16.msra.mxu0 %v2561
  %3447 = vmatprep.mubr.bf16.mxu0 %v590
  %3448 = vmatmul.mubr.bf16.gmra.mxu0 %v589
  %v3449 = vpop.f32.mrf.mxu0
  %v3450 = vadd.f32 %v3409, %v3449
  %v3451 = vpop.f32.mrf.mxu0
  %v3452 = vadd.f32 %v3411, %v3451
  %v3453 = vpop.f32.mrf.mxu0
  %v3454 = vpop.f32.mrf.mxu0
  %3455 = vdwg.mxu0
  %3456 = vmatprep.subr.bf16.mxu0 %v2622
  %3457 = vmatpush1.bf16.msra.mxu0 %v2621
  %3458 = vmatprep.subr.bf16.mxu0 %v2618
  %3459 = vmatpush1.bf16.msra.mxu0 %v2617
  %3460 = vmatprep.subr.bf16.mxu0 %v2614
  %3461 = vmatpush1.bf16.msra.mxu0 %v2613
  %3462 = vmatprep.subr.bf16.mxu0 %v2610
  %3463 = vmatpush1.bf16.msra.mxu0 %v2609
  %3464 = vmatprep.subr.bf16.mxu0 %v2606
  %3465 = vmatpush1.bf16.msra.mxu0 %v2605
  %3466 = vmatprep.subr.bf16.mxu0 %v2602
  %3467 = vmatpush1.bf16.msra.mxu0 %v2601
  %3468 = vmatprep.subr.bf16.mxu0 %v2598
  %3469 = vmatpush1.bf16.msra.mxu0 %v2597
  %3470 = vmatprep.subr.bf16.mxu0 %v2594
  %3471 = vmatpush1.bf16.msra.mxu0 %v2593
  %3472 = vmatprep.subr.bf16.mxu0 %v2654
  %3473 = vmatpush2.bf16.msra.mxu0 %v2653
  %3474 = vmatprep.subr.bf16.mxu0 %v2650
  %3475 = vmatpush2.bf16.msra.mxu0 %v2649
  %3476 = vmatprep.subr.bf16.mxu0 %v2646
  %3477 = vmatpush2.bf16.msra.mxu0 %v2645
  %3478 = vmatprep.subr.bf16.mxu0 %v2642
  %3479 = vmatpush2.bf16.msra.mxu0 %v2641
  %3480 = vmatprep.subr.bf16.mxu0 %v2638
  %3481 = vmatpush2.bf16.msra.mxu0 %v2637
  %3482 = vmatprep.subr.bf16.mxu0 %v2634
  %3483 = vmatpush2.bf16.msra.mxu0 %v2633
  %3484 = vmatprep.subr.bf16.mxu0 %v2630
  %3485 = vmatpush2.bf16.msra.mxu0 %v2629
  %3486 = vmatprep.subr.bf16.mxu0 %v2626
  %3487 = vmatpush2.bf16.msra.mxu0 %v2625
  %3488 = vmatprep.mubr.bf16.mxu0 %v592
  %3489 = vmatmul.mubr.bf16.gmra.mxu0 %v591
  %v3490 = vpop.f32.mrf.mxu0
  %v3491 = vadd.f32 %v3450, %v3490
  %v3492 = vpop.f32.mrf.mxu0
  %v3493 = vadd.f32 %v3452, %v3492
  %v3494 = vpop.f32.mrf.mxu0
  %v3495 = vpop.f32.mrf.mxu0
  %3496 = vdwg.mxu0
  %3497 = vmatprep.subr.bf16.mxu0 %v2176
  %3498 = vmatpush1.bf16.msra.mxu0 %v2175
  %3499 = vmatprep.subr.bf16.mxu0 %v2172
  %3500 = vmatpush1.bf16.msra.mxu0 %v2171
  %3501 = vmatprep.subr.bf16.mxu0 %v2168
  %3502 = vmatpush1.bf16.msra.mxu0 %v2167
  %3503 = vmatprep.subr.bf16.mxu0 %v2164
  %3504 = vmatpush1.bf16.msra.mxu0 %v2163
  %3505 = vmatprep.subr.bf16.mxu0 %v2160
  %3506 = vmatpush1.bf16.msra.mxu0 %v2159
  %3507 = vmatprep.subr.bf16.mxu0 %v2156
  %3508 = vmatpush1.bf16.msra.mxu0 %v2155
  %3509 = vmatprep.subr.bf16.mxu0 %v2152
  %3510 = vmatpush1.bf16.msra.mxu0 %v2151
  %3511 = vmatprep.subr.bf16.mxu0 %v2148
  %3512 = vmatpush1.bf16.msra.mxu0 %v2147
  %3513 = vmatprep.subr.bf16.mxu0 %v2208
  %3514 = vmatpush2.bf16.msra.mxu0 %v2207
  %3515 = vmatprep.subr.bf16.mxu0 %v2204
  %3516 = vmatpush2.bf16.msra.mxu0 %v2203
  %3517 = vmatprep.subr.bf16.mxu0 %v2200
  %3518 = vmatpush2.bf16.msra.mxu0 %v2199
  %3519 = vmatprep.subr.bf16.mxu0 %v2196
  %3520 = vmatpush2.bf16.msra.mxu0 %v2195
  %3521 = vmatprep.subr.bf16.mxu0 %v2192
  %3522 = vmatpush2.bf16.msra.mxu0 %v2191
  %3523 = vmatprep.subr.bf16.mxu0 %v2188
  %3524 = vmatpush2.bf16.msra.mxu0 %v2187
  %3525 = vmatprep.subr.bf16.mxu0 %v2184
  %3526 = vmatpush2.bf16.msra.mxu0 %v2183
  %3527 = vmatprep.subr.bf16.mxu0 %v2180
  %3528 = vmatpush2.bf16.msra.mxu0 %v2179
  %3529 = vmatprep.mubr.bf16.mxu0 %v578
  %3530 = vmatmul.mubr.bf16.gmra.mxu0 %v577
  %v3531 = vpop.f32.mrf.mxu0
  %v3532 = vadd.f32 0.0, %v3531
  %v3533 = vpop.f32.mrf.mxu0
  %v3534 = vadd.f32 0.0, %v3533
  %v3535 = vpop.f32.mrf.mxu0
  %v3536 = vpop.f32.mrf.mxu0
  %3537 = vdwg.mxu0
  %3538 = vmatprep.subr.bf16.mxu0 %v2240
  %3539 = vmatpush1.bf16.msra.mxu0 %v2239
  %3540 = vmatprep.subr.bf16.mxu0 %v2236
  %3541 = vmatpush1.bf16.msra.mxu0 %v2235
  %3542 = vmatprep.subr.bf16.mxu0 %v2232
  %3543 = vmatpush1.bf16.msra.mxu0 %v2231
  %3544 = vmatprep.subr.bf16.mxu0 %v2228
  %3545 = vmatpush1.bf16.msra.mxu0 %v2227
  %3546 = vmatprep.subr.bf16.mxu0 %v2224
  %3547 = vmatpush1.bf16.msra.mxu0 %v2223
  %3548 = vmatprep.subr.bf16.mxu0 %v2220
  %3549 = vmatpush1.bf16.msra.mxu0 %v2219
  %3550 = vmatprep.subr.bf16.mxu0 %v2216
  %3551 = vmatpush1.bf16.msra.mxu0 %v2215
  %3552 = vmatprep.subr.bf16.mxu0 %v2212
  %3553 = vmatpush1.bf16.msra.mxu0 %v2211
  %3554 = vmatprep.subr.bf16.mxu0 %v2272
  %3555 = vmatpush2.bf16.msra.mxu0 %v2271
  %3556 = vmatprep.subr.bf16.mxu0 %v2268
  %3557 = vmatpush2.bf16.msra.mxu0 %v2267
  %3558 = vmatprep.subr.bf16.mxu0 %v2264
  %3559 = vmatpush2.bf16.msra.mxu0 %v2263
  %3560 = vmatprep.subr.bf16.mxu0 %v2260
  %3561 = vmatpush2.bf16.msra.mxu0 %v2259
  %3562 = vmatprep.subr.bf16.mxu0 %v2256
  %3563 = vmatpush2.bf16.msra.mxu0 %v2255
  %3564 = vmatprep.subr.bf16.mxu0 %v2252
  %3565 = vmatpush2.bf16.msra.mxu0 %v2251
  %3566 = vmatprep.subr.bf16.mxu0 %v2248
  %3567 = vmatpush2.bf16.msra.mxu0 %v2247
  %3568 = vmatprep.subr.bf16.mxu0 %v2244
  %3569 = vmatpush2.bf16.msra.mxu0 %v2243
  %3570 = vmatprep.mubr.bf16.mxu0 %v580
  %3571 = vmatmul.mubr.bf16.gmra.mxu0 %v579
  %v3572 = vpop.f32.mrf.mxu0
  %v3573 = vadd.f32 %v3532, %v3572
  %v3574 = vpop.f32.mrf.mxu0
  %v3575 = vadd.f32 %v3534, %v3574
  %v3576 = vpop.f32.mrf.mxu0
  %v3577 = vpop.f32.mrf.mxu0
  %3578 = vdwg.mxu0
  %3579 = vmatprep.subr.bf16.mxu0 %v2304
  %3580 = vmatpush1.bf16.msra.mxu0 %v2303
  %3581 = vmatprep.subr.bf16.mxu0 %v2300
  %3582 = vmatpush1.bf16.msra.mxu0 %v2299
  %3583 = vmatprep.subr.bf16.mxu0 %v2296
  %3584 = vmatpush1.bf16.msra.mxu0 %v2295
  %3585 = vmatprep.subr.bf16.mxu0 %v2292
  %3586 = vmatpush1.bf16.msra.mxu0 %v2291
  %3587 = vmatprep.subr.bf16.mxu0 %v2288
  %3588 = vmatpush1.bf16.msra.mxu0 %v2287
  %3589 = vmatprep.subr.bf16.mxu0 %v2284
  %3590 = vmatpush1.bf16.msra.mxu0 %v2283
  %3591 = vmatprep.subr.bf16.mxu0 %v2280
  %3592 = vmatpush1.bf16.msra.mxu0 %v2279
  %3593 = vmatprep.subr.bf16.mxu0 %v2276
  %3594 = vmatpush1.bf16.msra.mxu0 %v2275
  %3595 = vmatprep.subr.bf16.mxu0 %v2336
  %3596 = vmatpush2.bf16.msra.mxu0 %v2335
  %3597 = vmatprep.subr.bf16.mxu0 %v2332
  %3598 = vmatpush2.bf16.msra.mxu0 %v2331
  %3599 = vmatprep.subr.bf16.mxu0 %v2328
  %3600 = vmatpush2.bf16.msra.mxu0 %v2327
  %3601 = vmatprep.subr.bf16.mxu0 %v2324
  %3602 = vmatpush2.bf16.msra.mxu0 %v2323
  %3603 = vmatprep.subr.bf16.mxu0 %v2320
  %3604 = vmatpush2.bf16.msra.mxu0 %v2319
  %3605 = vmatprep.subr.bf16.mxu0 %v2316
  %3606 = vmatpush2.bf16.msra.mxu0 %v2315
  %3607 = vmatprep.subr.bf16.mxu0 %v2312
  %3608 = vmatpush2.bf16.msra.mxu0 %v2311
  %3609 = vmatprep.subr.bf16.mxu0 %v2308
  %3610 = vmatpush2.bf16.msra.mxu0 %v2307
  %3611 = vmatprep.mubr.bf16.mxu0 %v582
  %3612 = vmatmul.mubr.bf16.gmra.mxu0 %v581
  %v3613 = vpop.f32.mrf.mxu0
  %v3614 = vadd.f32 %v3573, %v3613
  %v3615 = vpop.f32.mrf.mxu0
  %v3616 = vadd.f32 %v3575, %v3615
  %v3617 = vpop.f32.mrf.mxu0
  %v3618 = vpop.f32.mrf.mxu0
  %3619 = vdwg.mxu0
  %3620 = vmatprep.subr.bf16.mxu0 %v2368
  %3621 = vmatpush1.bf16.msra.mxu0 %v2367
  %3622 = vmatprep.subr.bf16.mxu0 %v2364
  %3623 = vmatpush1.bf16.msra.mxu0 %v2363
  %3624 = vmatprep.subr.bf16.mxu0 %v2360
  %3625 = vmatpush1.bf16.msra.mxu0 %v2359
  %3626 = vmatprep.subr.bf16.mxu0 %v2356
  %3627 = vmatpush1.bf16.msra.mxu0 %v2355
  %3628 = vmatprep.subr.bf16.mxu0 %v2352
  %3629 = vmatpush1.bf16.msra.mxu0 %v2351
  %3630 = vmatprep.subr.bf16.mxu0 %v2348
  %3631 = vmatpush1.bf16.msra.mxu0 %v2347
  %3632 = vmatprep.subr.bf16.mxu0 %v2344
  %3633 = vmatpush1.bf16.msra.mxu0 %v2343
  %3634 = vmatprep.subr.bf16.mxu0 %v2340
  %3635 = vmatpush1.bf16.msra.mxu0 %v2339
  %3636 = vmatprep.subr.bf16.mxu0 %v2400
  %3637 = vmatpush2.bf16.msra.mxu0 %v2399
  %3638 = vmatprep.subr.bf16.mxu0 %v2396
  %3639 = vmatpush2.bf16.msra.mxu0 %v2395
  %3640 = vmatprep.subr.bf16.mxu0 %v2392
  %3641 = vmatpush2.bf16.msra.mxu0 %v2391
  %3642 = vmatprep.subr.bf16.mxu0 %v2388
  %3643 = vmatpush2.bf16.msra.mxu0 %v2387
  %3644 = vmatprep.subr.bf16.mxu0 %v2384
  %3645 = vmatpush2.bf16.msra.mxu0 %v2383
  %3646 = vmatprep.subr.bf16.mxu0 %v2380
  %3647 = vmatpush2.bf16.msra.mxu0 %v2379
  %3648 = vmatprep.subr.bf16.mxu0 %v2376
  %3649 = vmatpush2.bf16.msra.mxu0 %v2375
  %3650 = vmatprep.subr.bf16.mxu0 %v2372
  %3651 = vmatpush2.bf16.msra.mxu0 %v2371
  %3652 = vmatprep.mubr.bf16.mxu0 %v584
  %3653 = vmatmul.mubr.bf16.gmra.mxu0 %v583
  %v3654 = vpop.f32.mrf.mxu0
  %v3655 = vadd.f32 %v3614, %v3654
  %v3656 = vpop.f32.mrf.mxu0
  %v3657 = vadd.f32 %v3616, %v3656
  %v3658 = vpop.f32.mrf.mxu0
  %v3659 = vpop.f32.mrf.mxu0
  %3660 = vdwg.mxu0
  %3661 = vmatprep.subr.bf16.mxu0 %v2432
  %3662 = vmatpush1.bf16.msra.mxu0 %v2431
  %3663 = vmatprep.subr.bf16.mxu0 %v2428
  %3664 = vmatpush1.bf16.msra.mxu0 %v2427
  %3665 = vmatprep.subr.bf16.mxu0 %v2424
  %3666 = vmatpush1.bf16.msra.mxu0 %v2423
  %3667 = vmatprep.subr.bf16.mxu0 %v2420
  %3668 = vmatpush1.bf16.msra.mxu0 %v2419
  %3669 = vmatprep.subr.bf16.mxu0 %v2416
  %3670 = vmatpush1.bf16.msra.mxu0 %v2415
  %3671 = vmatprep.subr.bf16.mxu0 %v2412
  %3672 = vmatpush1.bf16.msra.mxu0 %v2411
  %3673 = vmatprep.subr.bf16.mxu0 %v2408
  %3674 = vmatpush1.bf16.msra.mxu0 %v2407
  %3675 = vmatprep.subr.bf16.mxu0 %v2404
  %3676 = vmatpush1.bf16.msra.mxu0 %v2403
  %3677 = vmatprep.subr.bf16.mxu0 %v2464
  %3678 = vmatpush2.bf16.msra.mxu0 %v2463
  %3679 = vmatprep.subr.bf16.mxu0 %v2460
  %3680 = vmatpush2.bf16.msra.mxu0 %v2459
  %3681 = vmatprep.subr.bf16.mxu0 %v2456
  %3682 = vmatpush2.bf16.msra.mxu0 %v2455
  %3683 = vmatprep.subr.bf16.mxu0 %v2452
  %3684 = vmatpush2.bf16.msra.mxu0 %v2451
  %3685 = vmatprep.subr.bf16.mxu0 %v2448
  %3686 = vmatpush2.bf16.msra.mxu0 %v2447
  %3687 = vmatprep.subr.bf16.mxu0 %v2444
  %3688 = vmatpush2.bf16.msra.mxu0 %v2443
  %3689 = vmatprep.subr.bf16.mxu0 %v2440
  %3690 = vmatpush2.bf16.msra.mxu0 %v2439
  %3691 = vmatprep.subr.bf16.mxu0 %v2436
  %3692 = vmatpush2.bf16.msra.mxu0 %v2435
  %3693 = vmatprep.mubr.bf16.mxu0 %v586
  %3694 = vmatmul.mubr.bf16.gmra.mxu0 %v585
  %v3695 = vpop.f32.mrf.mxu0
  %v3696 = vadd.f32 %v3655, %v3695
  %v3697 = vpop.f32.mrf.mxu0
  %v3698 = vadd.f32 %v3657, %v3697
  %v3699 = vpop.f32.mrf.mxu0
  %v3700 = vpop.f32.mrf.mxu0
  %3701 = vdwg.mxu0
  %3702 = vmatprep.subr.bf16.mxu0 %v2496
  %3703 = vmatpush1.bf16.msra.mxu0 %v2495
  %3704 = vmatprep.subr.bf16.mxu0 %v2492
  %3705 = vmatpush1.bf16.msra.mxu0 %v2491
  %3706 = vmatprep.subr.bf16.mxu0 %v2488
  %3707 = vmatpush1.bf16.msra.mxu0 %v2487
  %3708 = vmatprep.subr.bf16.mxu0 %v2484
  %3709 = vmatpush1.bf16.msra.mxu0 %v2483
  %3710 = vmatprep.subr.bf16.mxu0 %v2480
  %3711 = vmatpush1.bf16.msra.mxu0 %v2479
  %3712 = vmatprep.subr.bf16.mxu0 %v2476
  %3713 = vmatpush1.bf16.msra.mxu0 %v2475
  %3714 = vmatprep.subr.bf16.mxu0 %v2472
  %3715 = vmatpush1.bf16.msra.mxu0 %v2471
  %3716 = vmatprep.subr.bf16.mxu0 %v2468
  %3717 = vmatpush1.bf16.msra.mxu0 %v2467
  %3718 = vmatprep.subr.bf16.mxu0 %v2528
  %3719 = vmatpush2.bf16.msra.mxu0 %v2527
  %3720 = vmatprep.subr.bf16.mxu0 %v2524
  %3721 = vmatpush2.bf16.msra.mxu0 %v2523
  %3722 = vmatprep.subr.bf16.mxu0 %v2520
  %3723 = vmatpush2.bf16.msra.mxu0 %v2519
  %3724 = vmatprep.subr.bf16.mxu0 %v2516
  %3725 = vmatpush2.bf16.msra.mxu0 %v2515
  %3726 = vmatprep.subr.bf16.mxu0 %v2512
  %3727 = vmatpush2.bf16.msra.mxu0 %v2511
  %3728 = vmatprep.subr.bf16.mxu0 %v2508
  %3729 = vmatpush2.bf16.msra.mxu0 %v2507
  %3730 = vmatprep.subr.bf16.mxu0 %v2504
  %3731 = vmatpush2.bf16.msra.mxu0 %v2503
  %3732 = vmatprep.subr.bf16.mxu0 %v2500
  %3733 = vmatpush2.bf16.msra.mxu0 %v2499
  %3734 = vmatprep.mubr.bf16.mxu0 %v588
  %3735 = vmatmul.mubr.bf16.gmra.mxu0 %v587
  %v3736 = vpop.f32.mrf.mxu0
  %v3737 = vadd.f32 %v3696, %v3736
  %v3738 = vpop.f32.mrf.mxu0
  %v3739 = vadd.f32 %v3698, %v3738
  %v3740 = vpop.f32.mrf.mxu0
  %v3741 = vpop.f32.mrf.mxu0
  %3742 = vdwg.mxu0
  %3743 = vmatprep.subr.bf16.mxu0 %v2560
  %3744 = vmatpush1.bf16.msra.mxu0 %v2559
  %3745 = vmatprep.subr.bf16.mxu0 %v2556
  %3746 = vmatpush1.bf16.msra.mxu0 %v2555
  %3747 = vmatprep.subr.bf16.mxu0 %v2552
  %3748 = vmatpush1.bf16.msra.mxu0 %v2551
  %3749 = vmatprep.subr.bf16.mxu0 %v2548
  %3750 = vmatpush1.bf16.msra.mxu0 %v2547
  %3751 = vmatprep.subr.bf16.mxu0 %v2544
  %3752 = vmatpush1.bf16.msra.mxu0 %v2543
  %3753 = vmatprep.subr.bf16.mxu0 %v2540
  %3754 = vmatpush1.bf16.msra.mxu0 %v2539
  %3755 = vmatprep.subr.bf16.mxu0 %v2536
  %3756 = vmatpush1.bf16.msra.mxu0 %v2535
  %3757 = vmatprep.subr.bf16.mxu0 %v2532
  %3758 = vmatpush1.bf16.msra.mxu0 %v2531
  %3759 = vmatprep.subr.bf16.mxu0 %v2592
  %3760 = vmatpush2.bf16.msra.mxu0 %v2591
  %3761 = vmatprep.subr.bf16.mxu0 %v2588
  %3762 = vmatpush2.bf16.msra.mxu0 %v2587
  %3763 = vmatprep.subr.bf16.mxu0 %v2584
  %3764 = vmatpush2.bf16.msra.mxu0 %v2583
  %3765 = vmatprep.subr.bf16.mxu0 %v2580
  %3766 = vmatpush2.bf16.msra.mxu0 %v2579
  %3767 = vmatprep.subr.bf16.mxu0 %v2576
  %3768 = vmatpush2.bf16.msra.mxu0 %v2575
  %3769 = vmatprep.subr.bf16.mxu0 %v2572
  %3770 = vmatpush2.bf16.msra.mxu0 %v2571
  %3771 = vmatprep.subr.bf16.mxu0 %v2568
  %3772 = vmatpush2.bf16.msra.mxu0 %v2567
  %3773 = vmatprep.subr.bf16.mxu0 %v2564
  %3774 = vmatpush2.bf16.msra.mxu0 %v2563
  %3775 = vmatprep.mubr.bf16.mxu0 %v590
  %3776 = vmatmul.mubr.bf16.gmra.mxu0 %v589
  %v3777 = vpop.f32.mrf.mxu0
  %v3778 = vadd.f32 %v3737, %v3777
  %v3779 = vpop.f32.mrf.mxu0
  %v3780 = vadd.f32 %v3739, %v3779
  %v3781 = vpop.f32.mrf.mxu0
  %v3782 = vpop.f32.mrf.mxu0
  %3783 = vdwg.mxu0
  %3784 = vmatprep.subr.bf16.mxu0 %v2624
  %3785 = vmatpush1.bf16.msra.mxu0 %v2623
  %3786 = vmatprep.subr.bf16.mxu0 %v2620
  %3787 = vmatpush1.bf16.msra.mxu0 %v2619
  %3788 = vmatprep.subr.bf16.mxu0 %v2616
  %3789 = vmatpush1.bf16.msra.mxu0 %v2615
  %3790 = vmatprep.subr.bf16.mxu0 %v2612
  %3791 = vmatpush1.bf16.msra.mxu0 %v2611
  %3792 = vmatprep.subr.bf16.mxu0 %v2608
  %3793 = vmatpush1.bf16.msra.mxu0 %v2607
  %3794 = vmatprep.subr.bf16.mxu0 %v2604
  %3795 = vmatpush1.bf16.msra.mxu0 %v2603
  %3796 = vmatprep.subr.bf16.mxu0 %v2600
  %3797 = vmatpush1.bf16.msra.mxu0 %v2599
  %3798 = vmatprep.subr.bf16.mxu0 %v2596
  %3799 = vmatpush1.bf16.msra.mxu0 %v2595
  %3800 = vmatprep.subr.bf16.mxu0 %v2656
  %3801 = vmatpush2.bf16.msra.mxu0 %v2655
  %3802 = vmatprep.subr.bf16.mxu0 %v2652
  %3803 = vmatpush2.bf16.msra.mxu0 %v2651
  %3804 = vmatprep.subr.bf16.mxu0 %v2648
  %3805 = vmatpush2.bf16.msra.mxu0 %v2647
  %3806 = vmatprep.subr.bf16.mxu0 %v2644
  %3807 = vmatpush2.bf16.msra.mxu0 %v2643
  %3808 = vmatprep.subr.bf16.mxu0 %v2640
  %3809 = vmatpush2.bf16.msra.mxu0 %v2639
  %3810 = vmatprep.subr.bf16.mxu0 %v2636
  %3811 = vmatpush2.bf16.msra.mxu0 %v2635
  %3812 = vmatprep.subr.bf16.mxu0 %v2632
  %3813 = vmatpush2.bf16.msra.mxu0 %v2631
  %3814 = vmatprep.subr.bf16.mxu0 %v2628
  %3815 = vmatpush2.bf16.msra.mxu0 %v2627
  %3816 = vmatprep.mubr.bf16.mxu0 %v592
  %3817 = vmatmul.mubr.bf16.gmra.mxu0 %v591
  %v3818 = vpop.f32.mrf.mxu0
  %v3819 = vadd.f32 %v3778, %v3818
  %v3820 = vpop.f32.mrf.mxu0
  %v3821 = vadd.f32 %v3780, %v3820
  %v3822 = vpop.f32.mrf.mxu0
  %v3823 = vpop.f32.mrf.mxu0
  %3824 = vdwg.mxu0
  %v3825 = vadd.f32 %v29, %v3491
  %v3826 = vadd.f32 %v30, %v3493
  %v3827 = vadd.f32 %v31, %v3819
  %v3828 = vadd.f32 %v32, %v3821
  %3829 = vst [vmem:[#allocation2] sm:$0xff] %v3825
  %3830 = vst [vmem:[#allocation2 + $0x8] sm:$0xff] %v3826
  %3831 = vst [vmem:[#allocation2 + $0x10] sm:$0xff] %v3827
  %3832 = vst [vmem:[#allocation2 + $0x18] sm:$0xff] %v3828
  // Predicated region
  $region26: #{plantnet_forward.5} parent=0 // pred_check
    %p3833 = pneg %p21
  $region27: #{plantnet_forward.5} parent=0 // pred_check_branch
    %3835 = sbr.rel (%p3833) target = $region29
  $region28: #{plantnet_forward.5} parent=0 // pred_region
    %v3836 = vld [vmem:[#allocation2] sm:$0xff]
    %v3837 = vld [vmem:[#allocation2 + $0x8] sm:$0xff]
    %v3838 = vld [vmem:[#allocation2 + $0x10] sm:$0xff]
    %v3839 = vld [vmem:[#allocation2 + $0x18] sm:$0xff]
    %v3840 = vld [vmem:[%s2] sm:$0xf]
    %v3842 = vlaneseq
    %v3843 = vshrl.u32 %v3842, 7
    %v3844 = vsub.s32 0, %v3843
    %v3845 = vrot.slane %v3840, %v3844
    %v3846 = vlaneseq
    %v3847 = vshrl.u32 %v3846, 7
    %v3848 = vsub.s32 1, %v3847
    %v3849 = vrot.slane %v3840, %v3848
    %v3850 = vlaneseq
    %v3851 = vshrl.u32 %v3850, 7
    %v3852 = vsub.s32 2, %v3851
    %v3853 = vrot.slane %v3840, %v3852
    %v3854 = vlaneseq
    %v3855 = vshrl.u32 %v3854, 7
    %v3856 = vsub.s32 3, %v3855
    %v3857 = vrot.slane %v3840, %v3856
    %v3862 = vadd.f32 %v3836, %v3845
    %v3863 = vadd.f32 %v3837, %v3849
    %v3864 = vadd.f32 %v3838, %v3853
    %v3865 = vadd.f32 %v3839, %v3857
    %v3866 = vmax.f32 %v3862, 0.0
    %v3867 = vmax.f32 %v3863, 0.0
    %v3868 = vmax.f32 %v3864, 0.0
    %v3869 = vmax.f32 %v3865, 0.0
    %v3870 = vpack.c.bf16 %v3866, %v3866
    %v3871 = vpack.c.bf16 %v3867, %v3867
    %v3872 = vpack.c.bf16 %v3868, %v3868
    %v3873 = vpack.c.bf16 %v3869, %v3869
    %v3874 = vld [vmem:[%s3] sm:$0xf]
    %v3875 = vld [vmem:[%s3 + $0x4] sm:$0xf]
    %v3876 = vld [vmem:[%s3 + $0x8] sm:$0xf]
    %v3877 = vld [vmem:[%s3 + $0xc] sm:$0xf]
    %v3878 = vld [vmem:[%s3 + $0x10] sm:$0xf]
    %v3879 = vld [vmem:[%s3 + $0x14] sm:$0xf]
    %v3880 = vld [vmem:[%s3 + $0x18] sm:$0xf]
    %v3881 = vld [vmem:[%s3 + $0x1c] sm:$0xf]
    %v3882 = vld [vmem:[%s3 + $0x20] sm:$0xf]
    %v3883 = vld [vmem:[%s3 + $0x24] sm:$0xf]
    %v3884 = vld [vmem:[%s3 + $0x28] sm:$0xf]
    %v3885 = vld [vmem:[%s3 + $0x2c] sm:$0xf]
    %v3886 = vld [vmem:[%s3 + $0x30] sm:$0xf]
    %v3887 = vld [vmem:[%s3 + $0x34] sm:$0xf]
    %v3888 = vld [vmem:[%s3 + $0x38] sm:$0xf]
    %v3889 = vld [vmem:[%s3 + $0x3c] sm:$0xf]
    %v3890 = vld [vmem:[%s3 + $0x40] sm:$0xf]
    %v3891 = vld [vmem:[%s3 + $0x44] sm:$0xf]
    %v3892 = vld [vmem:[%s3 + $0x48] sm:$0xf]
    %v3893 = vld [vmem:[%s3 + $0x4c] sm:$0xf]
    %v3894 = vld [vmem:[%s3 + $0x50] sm:$0xf]
    %v3895 = vld [vmem:[%s3 + $0x54] sm:$0xf]
    %v3896 = vld [vmem:[%s3 + $0x58] sm:$0xf]
    %v3897 = vld [vmem:[%s3 + $0x5c] sm:$0xf]
    %v3898 = vld [vmem:[%s3 + $0x60] sm:$0xf]
    %v3899 = vld [vmem:[%s3 + $0x64] sm:$0xf]
    %v3900 = vld [vmem:[%s3 + $0x68] sm:$0xf]
    %v3901 = vld [vmem:[%s3 + $0x6c] sm:$0xf]
    %v3902 = vld [vmem:[%s3 + $0x70] sm:$0xf]
    %v3903 = vld [vmem:[%s3 + $0x74] sm:$0xf]
    %v3904 = vld [vmem:[%s3 + $0x78] sm:$0xf]
    %v3905 = vld [vmem:[%s3 + $0x7c] sm:$0xf]
    %v3906 = vld [vmem:[%s3 + $0x80] sm:$0xf]
    %v3907 = vld [vmem:[%s3 + $0x84] sm:$0xf]
    %v3908 = vld [vmem:[%s3 + $0x88] sm:$0xf]
    %v3909 = vld [vmem:[%s3 + $0x8c] sm:$0xf]
    %v3910 = vld [vmem:[%s3 + $0x90] sm:$0xf]
    %v3911 = vld [vmem:[%s3 + $0x94] sm:$0xf]
    %v3912 = vld [vmem:[%s3 + $0x98] sm:$0xf]
    %v3913 = vld [vmem:[%s3 + $0x9c] sm:$0xf]
    %v3914 = vld [vmem:[%s3 + $0xa0] sm:$0xf]
    %v3915 = vld [vmem:[%s3 + $0xa4] sm:$0xf]
    %v3916 = vld [vmem:[%s3 + $0xa8] sm:$0xf]
    %v3917 = vld [vmem:[%s3 + $0xac] sm:$0xf]
    %v3918 = vld [vmem:[%s3 + $0xb0] sm:$0xf]
    %v3919 = vld [vmem:[%s3 + $0xb4] sm:$0xf]
    %v3920 = vld [vmem:[%s3 + $0xb8] sm:$0xf]
    %v3921 = vld [vmem:[%s3 + $0xbc] sm:$0xf]
    %v3922 = vld [vmem:[%s3 + $0xc0] sm:$0xf]
    %v3923 = vld [vmem:[%s3 + $0xc4] sm:$0xf]
    %v3924 = vld [vmem:[%s3 + $0xc8] sm:$0xf]
    %v3925 = vld [vmem:[%s3 + $0xcc] sm:$0xf]
    %v3926 = vld [vmem:[%s3 + $0xd0] sm:$0xf]
    %v3927 = vld [vmem:[%s3 + $0xd4] sm:$0xf]
    %v3928 = vld [vmem:[%s3 + $0xd8] sm:$0xf]
    %v3929 = vld [vmem:[%s3 + $0xdc] sm:$0xf]
    %v3930 = vld [vmem:[%s3 + $0xe0] sm:$0xf]
    %v3931 = vld [vmem:[%s3 + $0xe4] sm:$0xf]
    %v3932 = vld [vmem:[%s3 + $0xe8] sm:$0xf]
    %v3933 = vld [vmem:[%s3 + $0xec] sm:$0xf]
    %v3934 = vld [vmem:[%s3 + $0xf0] sm:$0xf]
    %v3935 = vld [vmem:[%s3 + $0xf4] sm:$0xf]
    %v3936 = vld [vmem:[%s3 + $0xf8] sm:$0xf]
    %v3937 = vld [vmem:[%s3 + $0xfc] sm:$0xf]
    %v3938 = vld [vmem:[%s4] sm:$0x1]
    %v3940 = vlaneseq
    %v3941 = vshrl.u32 %v3940, 7
    %v3942 = vsub.s32 0, %v3941
    %v3943 = vrot.slane %v3938, %v3942
    %v4009 = vunpack.c.l.b16 %v3874
    %v4010 = vunpack.c.l.b16 %v3875
    %v4011 = vunpack.c.l.b16 %v3876
    %v4012 = vunpack.c.l.b16 %v3877
    %v4013 = vunpack.c.l.b16 %v3878
    %v4014 = vunpack.c.l.b16 %v3879
    %v4015 = vunpack.c.l.b16 %v3880
    %v4016 = vunpack.c.l.b16 %v3881
    %v4017 = vunpack.c.l.b16 %v3882
    %v4018 = vunpack.c.l.b16 %v3883
    %v4019 = vunpack.c.l.b16 %v3884
    %v4020 = vunpack.c.l.b16 %v3885
    %v4021 = vunpack.c.l.b16 %v3886
    %v4022 = vunpack.c.l.b16 %v3887
    %v4023 = vunpack.c.l.b16 %v3888
    %v4024 = vunpack.c.l.b16 %v3889
    %v4025 = vunpack.c.l.b16 %v3890
    %v4026 = vunpack.c.l.b16 %v3891
    %v4027 = vunpack.c.l.b16 %v3892
    %v4028 = vunpack.c.l.b16 %v3893
    %v4029 = vunpack.c.l.b16 %v3894
    %v4030 = vunpack.c.l.b16 %v3895
    %v4031 = vunpack.c.l.b16 %v3896
    %v4032 = vunpack.c.l.b16 %v3897
    %v4033 = vunpack.c.l.b16 %v3898
    %v4034 = vunpack.c.l.b16 %v3899
    %v4035 = vunpack.c.l.b16 %v3900
    %v4036 = vunpack.c.l.b16 %v3901
    %v4037 = vunpack.c.l.b16 %v3902
    %v4038 = vunpack.c.l.b16 %v3903
    %v4039 = vunpack.c.l.b16 %v3904
    %v4040 = vunpack.c.l.b16 %v3905
    %v4041 = vunpack.c.l.b16 %v3906
    %v4042 = vunpack.c.l.b16 %v3907
    %v4043 = vunpack.c.l.b16 %v3908
    %v4044 = vunpack.c.l.b16 %v3909
    %v4045 = vunpack.c.l.b16 %v3910
    %v4046 = vunpack.c.l.b16 %v3911
    %v4047 = vunpack.c.l.b16 %v3912
    %v4048 = vunpack.c.l.b16 %v3913
    %v4049 = vunpack.c.l.b16 %v3914
    %v4050 = vunpack.c.l.b16 %v3915
    %v4051 = vunpack.c.l.b16 %v3916
    %v4052 = vunpack.c.l.b16 %v3917
    %v4053 = vunpack.c.l.b16 %v3918
    %v4054 = vunpack.c.l.b16 %v3919
    %v4055 = vunpack.c.l.b16 %v3920
    %v4056 = vunpack.c.l.b16 %v3921
    %v4057 = vunpack.c.l.b16 %v3922
    %v4058 = vunpack.c.l.b16 %v3923
    %v4059 = vunpack.c.l.b16 %v3924
    %v4060 = vunpack.c.l.b16 %v3925
    %v4061 = vunpack.c.l.b16 %v3926
    %v4062 = vunpack.c.l.b16 %v3927
    %v4063 = vunpack.c.l.b16 %v3928
    %v4064 = vunpack.c.l.b16 %v3929
    %v4065 = vunpack.c.l.b16 %v3930
    %v4066 = vunpack.c.l.b16 %v3931
    %v4067 = vunpack.c.l.b16 %v3932
    %v4068 = vunpack.c.l.b16 %v3933
    %v4069 = vunpack.c.l.b16 %v3934
    %v4070 = vunpack.c.l.b16 %v3935
    %v4071 = vunpack.c.l.b16 %v3936
    %v4072 = vunpack.c.l.b16 %v3937
    %v4073 = vpack.c.b16 %v4010, %v4009
    %v4074 = vpack.c.b16 %v4012, %v4011
    %v4075 = vpack.c.b16 %v4014, %v4013
    %v4076 = vpack.c.b16 %v4016, %v4015
    %v4077 = vpack.c.b16 %v4018, %v4017
    %v4078 = vpack.c.b16 %v4020, %v4019
    %v4079 = vpack.c.b16 %v4022, %v4021
    %v4080 = vpack.c.b16 %v4024, %v4023
    %v4081 = vpack.c.b16 %v4026, %v4025
    %v4082 = vpack.c.b16 %v4028, %v4027
    %v4083 = vpack.c.b16 %v4030, %v4029
    %v4084 = vpack.c.b16 %v4032, %v4031
    %v4085 = vpack.c.b16 %v4034, %v4033
    %v4086 = vpack.c.b16 %v4036, %v4035
    %v4087 = vpack.c.b16 %v4038, %v4037
    %v4088 = vpack.c.b16 %v4040, %v4039
    %v4089 = vpack.c.b16 %v4042, %v4041
    %v4090 = vpack.c.b16 %v4044, %v4043
    %v4091 = vpack.c.b16 %v4046, %v4045
    %v4092 = vpack.c.b16 %v4048, %v4047
    %v4093 = vpack.c.b16 %v4050, %v4049
    %v4094 = vpack.c.b16 %v4052, %v4051
    %v4095 = vpack.c.b16 %v4054, %v4053
    %v4096 = vpack.c.b16 %v4056, %v4055
    %v4097 = vpack.c.b16 %v4058, %v4057
    %v4098 = vpack.c.b16 %v4060, %v4059
    %v4099 = vpack.c.b16 %v4062, %v4061
    %v4100 = vpack.c.b16 %v4064, %v4063
    %v4101 = vpack.c.b16 %v4066, %v4065
    %v4102 = vpack.c.b16 %v4068, %v4067
    %v4103 = vpack.c.b16 %v4070, %v4069
    %v4104 = vpack.c.b16 %v4072, %v4071
    %4137 = vmatprep.subr.bf16.mxu0 0
    %4138 = vmatpush1.bf16.msra.mxu0 %v4080
    %4139 = vmatprep.subr.bf16.mxu0 0
    %4140 = vmatpush1.bf16.msra.mxu0 %v4079
    %4141 = vmatprep.subr.bf16.mxu0 0
    %4142 = vmatpush1.bf16.msra.mxu0 %v4078
    %4143 = vmatprep.subr.bf16.mxu0 0
    %4144 = vmatpush1.bf16.msra.mxu0 %v4077
    %4145 = vmatprep.subr.bf16.mxu0 0
    %4146 = vmatpush1.bf16.msra.mxu0 %v4076
    %4147 = vmatprep.subr.bf16.mxu0 0
    %4148 = vmatpush1.bf16.msra.mxu0 %v4075
    %4149 = vmatprep.subr.bf16.mxu0 0
    %4150 = vmatpush1.bf16.msra.mxu0 %v4074
    %4151 = vmatprep.subr.bf16.mxu0 0
    %4152 = vmatpush1.bf16.msra.mxu0 %v4073
    %4153 = vmatprep.subr.bf16.mxu0 0
    %4154 = vmatpush2.bf16.msra.mxu0 %v4088
    %4155 = vmatprep.subr.bf16.mxu0 0
    %4156 = vmatpush2.bf16.msra.mxu0 %v4087
    %4157 = vmatprep.subr.bf16.mxu0 0
    %4158 = vmatpush2.bf16.msra.mxu0 %v4086
    %4159 = vmatprep.subr.bf16.mxu0 0
    %4160 = vmatpush2.bf16.msra.mxu0 %v4085
    %4161 = vmatprep.subr.bf16.mxu0 0
    %4162 = vmatpush2.bf16.msra.mxu0 %v4084
    %4163 = vmatprep.subr.bf16.mxu0 0
    %4164 = vmatpush2.bf16.msra.mxu0 %v4083
    %4165 = vmatprep.subr.bf16.mxu0 0
    %4166 = vmatpush2.bf16.msra.mxu0 %v4082
    %4167 = vmatprep.subr.bf16.mxu0 0
    %4168 = vmatpush2.bf16.msra.mxu0 %v4081
    %4169 = vmatprep.mubr.bf16.mxu0 %v3871
    %4170 = vmatmul.mubr.bf16.gmra.mxu0 %v3870
    %v4171 = vpop.f32.mrf.mxu0
    %v4172 = vadd.f32 %v3943, %v4171
    %v4173 = vpop.f32.mrf.mxu0
    %v4174 = vpop.f32.mrf.mxu0
    %v4175 = vpop.f32.mrf.mxu0
    %4176 = vdwg.mxu0
    %4177 = vmatprep.subr.bf16.mxu0 0
    %4178 = vmatpush1.bf16.msra.mxu0 %v4096
    %4179 = vmatprep.subr.bf16.mxu0 0
    %4180 = vmatpush1.bf16.msra.mxu0 %v4095
    %4181 = vmatprep.subr.bf16.mxu0 0
    %4182 = vmatpush1.bf16.msra.mxu0 %v4094
    %4183 = vmatprep.subr.bf16.mxu0 0
    %4184 = vmatpush1.bf16.msra.mxu0 %v4093
    %4185 = vmatprep.subr.bf16.mxu0 0
    %4186 = vmatpush1.bf16.msra.mxu0 %v4092
    %4187 = vmatprep.subr.bf16.mxu0 0
    %4188 = vmatpush1.bf16.msra.mxu0 %v4091
    %4189 = vmatprep.subr.bf16.mxu0 0
    %4190 = vmatpush1.bf16.msra.mxu0 %v4090
    %4191 = vmatprep.subr.bf16.mxu0 0
    %4192 = vmatpush1.bf16.msra.mxu0 %v4089
    %4193 = vmatprep.subr.bf16.mxu0 0
    %4194 = vmatpush2.bf16.msra.mxu0 %v4104
    %4195 = vmatprep.subr.bf16.mxu0 0
    %4196 = vmatpush2.bf16.msra.mxu0 %v4103
    %4197 = vmatprep.subr.bf16.mxu0 0
    %4198 = vmatpush2.bf16.msra.mxu0 %v4102
    %4199 = vmatprep.subr.bf16.mxu0 0
    %4200 = vmatpush2.bf16.msra.mxu0 %v4101
    %4201 = vmatprep.subr.bf16.mxu0 0
    %4202 = vmatpush2.bf16.msra.mxu0 %v4100
    %4203 = vmatprep.subr.bf16.mxu0 0
    %4204 = vmatpush2.bf16.msra.mxu0 %v4099
    %4205 = vmatprep.subr.bf16.mxu0 0
    %4206 = vmatpush2.bf16.msra.mxu0 %v4098
    %4207 = vmatprep.subr.bf16.mxu0 0
    %4208 = vmatpush2.bf16.msra.mxu0 %v4097
    %4209 = vmatprep.mubr.bf16.mxu0 %v3873
    %4210 = vmatmul.mubr.bf16.gmra.mxu0 %v3872
    %v4211 = vpop.f32.mrf.mxu0
    %v4212 = vadd.f32 %v4172, %v4211
    %v4213 = vpop.f32.mrf.mxu0
    %v4214 = vpop.f32.mrf.mxu0
    %v4215 = vpop.f32.mrf.mxu0
    %4216 = vdwg.mxu0
    %4217 = vst [vmem:[%s5] sm:$0xff] %v4212
  $region29: #{plantnet_forward.5} parent=0 // pred_fallthru
    _
  // Predicated region
  $region30: #{plantnet_forward.5} parent=0 // pred_check
    _
  $region31: #{plantnet_forward.5} parent=0 // pred_check_branch
    %4219 = sbr.rel (0) target = $region33
  $region32: #{plantnet_forward.5} parent=0 // pred_region
    _
  $region33: #{plantnet_forward.5} parent=0 // pred_fallthru
    _
  // Predicated region
  $region34: #{plantnet_forward.5} parent=0 // pred_check
    _
  $region35: #{plantnet_forward.5} parent=0 // pred_check_branch
    %4221 = sbr.rel (0) target = $region37
  $region36: #{plantnet_forward.5} parent=0 // pred_region
    _
  $region37: #{plantnet_forward.5} parent=0 // pred_fallthru
    _

</llo_original>
